<compile_context>
chip_gen: v6e
topology: v6e:2x2x1
jax: 0.10.0
libtpu: 0.0.40
codegen_flags: <defaults>
</compile_context>

<pallas_src>
import math
import functools

import jax
import jax.numpy as jnp
from jax.experimental import pallas as pl
from jax.experimental.pallas import tpu as pltpu


# ----------------------------------------------------------------------------
# In-kernel building blocks (operate on VMEM-resident values)
# ----------------------------------------------------------------------------
def _layer_norm(y, g, b):
    # nn.LayerNorm: biased variance, eps = 1e-5, math in f32
    mu = jnp.mean(y, axis=-1, keepdims=True)
    var = jnp.mean(jnp.square(y - mu), axis=-1, keepdims=True)
    return (y - mu) * jax.lax.rsqrt(var + 1e-5) * g + b


def _mha_residual_ln(x, kv, refs, heads):
    """Multi-head attention (query=x, key=value=kv) + residual + LayerNorm.

    x  : (T, Dq)    f32   query / residual stream
    kv : (S, Dm_in) f32   memory
    refs: wq(bf16 Dq,Dm), bq(f32 1,Dm), wkv(bf16 Dm_in,2Dm), bkv(f32 1,2Dm),
          wo(bf16 Dm,Dq),  bo(f32 1,Dq), ln_g(f32 1,Dq),     ln_b(f32 1,Dq)
    """
    wq, bq, wkv, bkv, wo, bo, g, b = tuple(r[...] for r in refs)
    dm = wq.shape[1]                       # attention model dim of this block
    dh = dm // heads
    scale = 1.0 / math.sqrt(dh)

    # Full-width projections on the MXU (bf16 inputs, f32 accumulation).
    q = jnp.dot(x.astype(jnp.bfloat16), wq,
                preferred_element_type=jnp.float32) + bq           # (T, Dm)
    kvp = jnp.dot(kv.astype(jnp.bfloat16), wkv,
                  preferred_element_type=jnp.float32) + bkv        # (S, 2*Dm)

    qb = q.astype(jnp.bfloat16)
    kb = kvp[:, :dm].astype(jnp.bfloat16)
    vb = kvp[:, dm:].astype(jnp.bfloat16)

    # Per-head scaled dot-product attention; static lane slices, so only one
    # (T, S) score tile is live at a time.  Softmax math in f32.
    ctx_parts = []
    for h in range(heads):
        lo, hi = h * dh, (h + 1) * dh
        s = jnp.einsum('td,sd->ts', qb[:, lo:hi], kb[:, lo:hi],
                       preferred_element_type=jnp.float32) * scale  # (T, S)
        s = s - jnp.max(s, axis=-1, keepdims=True)
        e = jnp.exp(s)
        p = e / jnp.sum(e, axis=-1, keepdims=True)
        ctx_parts.append(jnp.dot(p.astype(jnp.bfloat16), vb[:, lo:hi],
                                 preferred_element_type=jnp.float32))
    ctx = jnp.concatenate(ctx_parts, axis=-1)                       # (T, Dm)

    # Single output projection against the original 2-D Wo.
    attn = jnp.dot(ctx.astype(jnp.bfloat16), wo,
                   preferred_element_type=jnp.float32) + bo         # (T, Dq)
    return _layer_norm(x + attn, g, b)


def _ffn_residual_ln(x, refs):
    w1, b1, w2, b2, g, b = tuple(r[...] for r in refs)
    h = jnp.maximum(jnp.dot(x.astype(jnp.bfloat16), w1,
                            preferred_element_type=jnp.float32) + b1, 0.0)
    y = jnp.dot(h.astype(jnp.bfloat16), w2,
                preferred_element_type=jnp.float32) + b2
    return _layer_norm(x + y, g, b)


# ----------------------------------------------------------------------------
# Fused decoder-layer kernel: one grid step == one batch element.
# x stays VMEM-resident for the whole layer (no HBM round-trips).
# ----------------------------------------------------------------------------
def _decoder_layer_kernel(*refs, heads, dual_enc):
    tgt_ref, sent_ref = refs[0], refs[1]
    idx = 2
    graph_ref = None
    if dual_enc:
        graph_ref = refs[2]
        idx = 3
    out_ref = refs[-1]
    w = refs[idx:-1]

    x = tgt_ref[0].astype(jnp.float32)                      # (T, d_model)

    i = 0
    # self-attn -> +residual -> norm1
    x = _mha_residual_ln(x, x, w[i:i + 8], heads); i += 8
    # graph cross-attn FIRST -> +residual -> norm_g
    if dual_enc:
        x = _mha_residual_ln(x, graph_ref[0].astype(jnp.float32),
                             w[i:i + 8], heads)
        i += 8
    # sentence cross-attn -> +residual -> norm2
    x = _mha_residual_ln(x, sent_ref[0].astype(jnp.float32), w[i:i + 8], heads)
    i += 8
    # FFN -> +residual -> norm3
    x = _ffn_residual_ln(x, w[i:i + 6])
    out_ref[0] = x.astype(out_ref.dtype)


# ----------------------------------------------------------------------------
# Wrapper
# ----------------------------------------------------------------------------
def _full_spec(a):
    nd = a.ndim
    return pl.BlockSpec(a.shape, lambda b, _nd=nd: (0,) * _nd)


def _nbytes(a):
    return int(a.size) * a.dtype.itemsize


def double_attn_decoder_layer_graph_first(tgt, sent_memory, graph_memory,
                                          kparams, heads, dual_enc=True):
    B, T, Dq = tgt.shape
    _, S, Dm = sent_memory.shape
    d_model = Dq

    blocks = ["self_attn"] + (["graph_attn"] if dual_enc else []) + ["sent_attn"]
    weights = []
    for name in blocks:
        p = kparams[name]
        weights += [p["wq"], p["bq"], p["wkv"], p["bkv"],
                    p["wo"], p["bo"], p["ln_g"], p["ln_b"]]
    f = kparams["ffn"]
    weights += [f["w1"], f["b1"], f["w2"], f["b2"], f["ln_g"], f["ln_b"]]
    d_ff = f["w1"].shape[1]

    # Only DMA graph_memory when it is actually used.
    tensors = [tgt, sent_memory] + ([graph_memory] if dual_enc else [])
    tensor_specs = [pl.BlockSpec((1,) + t.shape[1:], lambda b: (b, 0, 0))
                    for t in tensors]

    # --- advisory cost estimate -------------------------------------------
    def attn_cost(t_q, s_mem, d_mem_in, d_att):
        flops = (2 * t_q * d_model * d_att            # Q projection
                 + 2 * s_mem * d_mem_in * 2 * d_att   # fused K|V projection
                 + 4 * t_q * s_mem * d_att            # scores + context
                 + 2 * t_q * d_att * d_model)         # output projection
        trans = heads * t_q * s_mem                   # exp()
        return flops, trans

    flops, trans = attn_cost(T, T, d_model, d_model)                     # self
    if dual_enc:
        G, Dg = graph_memory.shape[1], graph_memory.shape[2]
        d_att_g = kparams["graph_attn"]["wq"].shape[1]
        fg, tg = attn_cost(T, G, Dg, d_att_g)
        flops += fg; trans += tg
    fs, ts = attn_cost(T, S, Dm, d_model)                                # sent
    flops += fs; trans += ts
    flops += 4 * T * d_model * d_ff                                      # FFN
    bytes_accessed = sum(_nbytes(a) for a in tensors + weights)
    bytes_accessed += int(B * T * d_model) * tgt.dtype.itemsize
    cost = pl.CostEstimate(flops=int(B * flops), transcendentals=int(B * trans),
                           bytes_accessed=int(bytes_accessed))

    # --- VMEM limit sized from actual residency ---------------------------
    weight_bytes = sum(_nbytes(a) for a in weights)
    block_bytes = sum(int(t.shape[1]) * int(t.shape[2]) * t.dtype.itemsize
                      for t in tensors)
    block_bytes += T * d_model * tgt.dtype.itemsize                # output block
    vmem_est = 2 * block_bytes + 2 * weight_bytes + (4 << 20)      # dbl-buffers + headroom
    vmem_limit = int(min(max(vmem_est, 16 << 20), 64 << 20))

    return pl.pallas_call(
        functools.partial(_decoder_layer_kernel, heads=heads, dual_enc=dual_enc),
        out_shape=jax.ShapeDtypeStruct((B, T, Dq), tgt.dtype),
        grid=(B,),
        in_specs=tensor_specs + [_full_spec(w) for w in weights],
        out_specs=pl.BlockSpec((1, T, Dq), lambda b: (b, 0, 0)),
        compiler_params=pltpu.CompilerParams(
            dimension_semantics=("parallel",),
            vmem_limit_bytes=vmem_limit),
        cost_estimate=cost,
    )(*tensors, *weights)


# ----------------------------------------------------------------------------
# Deterministic parameter construction (PyTorch-equivalent 2D layout)
# ----------------------------------------------------------------------------
def _make_linear(key, din, dout):
    kw, kb = jax.random.split(key)
    bound = 1.0 / math.sqrt(din)
    w = jax.random.uniform(kw, (din, dout), jnp.float32, -bound, bound)
    b = jax.random.uniform(kb, (1, dout), jnp.float32, -bound, bound)
    return w, b


def _make_mha_params(key, model_dim, query_dim):
    ks = jax.random.split(key, 4)
    wq, bq = _make_linear(ks[0], query_dim, model_dim)
    wk, bk = _make_linear(ks[1], model_dim, model_dim)
    wv, bv = _make_linear(ks[2], model_dim, model_dim)
    wo, bo = _make_linear(ks[3], model_dim, query_dim)
    return dict(wq=wq, bq=bq, wk=wk, bk=bk, wv=wv, bv=bv, wo=wo, bo=bo,
                ln_g=jnp.ones((1, query_dim), jnp.float32),
                ln_b=jnp.zeros((1, query_dim), jnp.float32))


def make_params(key, d_model, d_enc, d_ff):
    k1, k2, k3, k4, k5 = jax.random.split(key, 5)
    d_graph = d_enc - d_model
    w1, b1 = _make_linear(k4, d_model, d_ff)
    w2, b2 = _make_linear(k5, d_ff, d_model)
    return dict(
        self_attn=_make_mha_params(k1, d_model, d_model),
        graph_attn=_make_mha_params(k2, d_graph, d_model),
        sent_attn=_make_mha_params(k3, d_model, d_model),
        ffn=dict(w1=w1, b1=b1, w2=w2, b2=b2,
                 ln_g=jnp.ones((1, d_model), jnp.float32),
                 ln_b=jnp.zeros((1, d_model), jnp.float32)),
    )


def prepare_kernel_params(params, dual_enc=True):
    """Fuse K|V weights, cast matmul weights to bf16; keep biases/LN in f32."""
    def prep_mha(p):
        return dict(
            wq=p["wq"].astype(jnp.bfloat16), bq=p["bq"],
            wkv=jnp.concatenate([p["wk"], p["wv"]], axis=1).astype(jnp.bfloat16),
            bkv=jnp.concatenate([p["bk"], p["bv"]], axis=1),
            wo=p["wo"].astype(jnp.bfloat16), bo=p["bo"],
            ln_g=p["ln_g"], ln_b=p["ln_b"])

    f = params["ffn"]
    kp = dict(self_attn=prep_mha(params["self_attn"]),
              sent_attn=prep_mha(params["sent_attn"]),
              ffn=dict(w1=f["w1"].astype(jnp.bfloat16), b1=f["b1"],
                       w2=f["w2"].astype(jnp.bfloat16), b2=f["b2"],
                       ln_g=f["ln_g"], ln_b=f["ln_b"]))
    if dual_enc:
        kp["graph_attn"] = prep_mha(params["graph_attn"])
    return kp


# ----------------------------------------------------------------------------
# Pure-JAX reference (f32) for a correctness sanity check
# ----------------------------------------------------------------------------
def _mha_ref(x, kv, p, heads):
    q = x @ p["wq"] + p["bq"]
    k = kv @ p["wk"] + p["bk"]
    v = kv @ p["wv"] + p["bv"]
    dm = q.shape[-1]
    dh = dm // heads

    def split(t):
        return t.reshape(t.shape[0], t.shape[1], heads, dh).transpose(0, 2, 1, 3)

    qh, kh, vh = split(q), split(k), split(v)
    s = jnp.einsum('bhtd,bhsd->bhts', qh, kh) / math.sqrt(dh)
    a = jax.nn.softmax(s, axis=-1)
    ctx = jnp.einsum('bhts,bhsd->bhtd', a, vh)
    ctx = ctx.transpose(0, 2, 1, 3).reshape(x.shape[0], x.shape[1], dm)
    return ctx @ p["wo"] + p["bo"]


def _ln_ref(y, g, b):
    mu = y.mean(-1, keepdims=True)
    var = ((y - mu) ** 2).mean(-1, keepdims=True)
    return (y - mu) / jnp.sqrt(var + 1e-5) * g + b


def reference_forward(tgt, sent, graph, params, heads, dual_enc=True):
    p = params["self_attn"]
    x = _ln_ref(tgt + _mha_ref(tgt, tgt, p, heads), p["ln_g"], p["ln_b"])
    if dual_enc:
        p = params["graph_attn"]
        x = _ln_ref(x + _mha_ref(x, graph, p, heads), p["ln_g"], p["ln_b"])
    p = params["sent_attn"]
    x = _ln_ref(x + _mha_ref(x, sent, p, heads), p["ln_g"], p["ln_b"])
    f = params["ffn"]
    h = jnp.maximum(x @ f["w1"] + f["b1"], 0.0)
    return _ln_ref(x + h @ f["w2"] + f["b2"], f["ln_g"], f["ln_b"])


# ----------------------------------------------------------------------------
if __name__ == "__main__":
    d_model, d_enc, heads, d_ff = 32, 48, 4, 64   # d_enc - d_model = 16 -> dh_graph = 4
    B, T, S, G = 2, 8, 10, 5

    key = jax.random.PRNGKey(0)
    kp_, kt, ks, kg = jax.random.split(key, 4)

    params = make_params(kp_, d_model, d_enc, d_ff)
    tgt = jax.random.normal(kt, (B, T, d_model), jnp.float32)
    sent_memory = jax.random.normal(ks, (B, S, d_model), jnp.float32)
    graph_memory = jax.random.normal(kg, (B, G, d_enc - d_model), jnp.float32)

    for dual_enc in (True, False):
        kparams = prepare_kernel_params(params, dual_enc=dual_enc)
        out = double_attn_decoder_layer_graph_first(
            tgt, sent_memory, graph_memory, kparams, heads, dual_enc=dual_enc)
        out = jax.block_until_ready(out)

        assert out.shape == (B, T, d_model), out.shape
        assert bool(jnp.all(jnp.isfinite(out)))

        with jax.default_matmul_precision("float32"):
            ref = reference_forward(tgt, sent_memory, graph_memory, params,
                                    heads, dual_enc=dual_enc)
        max_err = float(jnp.max(jnp.abs(out - ref)))
        # Kernel matmuls use bf16 inputs (f32 accumulation) vs the f32
        # reference, so the tolerance is loose but still far below any
        # structural-bug error (which would be O(1)).
        assert max_err < 1.5e-1, (dual_enc, max_err)

    print("KERNEL_OK")
</pallas_src>

<mosaic_0001>
module attributes {stable_mosaic.version = 11 : i64} {
  func.func @_decoder_layer_kernel(%arg0: i32, %arg1: memref<1x8x32xf32, #tpu.memory_space<vmem>>, %arg2: memref<1x10x32xf32, #tpu.memory_space<vmem>>, %arg3: memref<1x5x16xf32, #tpu.memory_space<vmem>>, %arg4: memref<32x32xbf16, #tpu.memory_space<vmem>>, %arg5: memref<1x32xf32, #tpu.memory_space<vmem>>, %arg6: memref<32x64xbf16, #tpu.memory_space<vmem>>, %arg7: memref<1x64xf32, #tpu.memory_space<vmem>>, %arg8: memref<32x32xbf16, #tpu.memory_space<vmem>>, %arg9: memref<1x32xf32, #tpu.memory_space<vmem>>, %arg10: memref<1x32xf32, #tpu.memory_space<vmem>>, %arg11: memref<1x32xf32, #tpu.memory_space<vmem>>, %arg12: memref<32x16xbf16, #tpu.memory_space<vmem>>, %arg13: memref<1x16xf32, #tpu.memory_space<vmem>>, %arg14: memref<16x32xbf16, #tpu.memory_space<vmem>>, %arg15: memref<1x32xf32, #tpu.memory_space<vmem>>, %arg16: memref<16x32xbf16, #tpu.memory_space<vmem>>, %arg17: memref<1x32xf32, #tpu.memory_space<vmem>>, %arg18: memref<1x32xf32, #tpu.memory_space<vmem>>, %arg19: memref<1x32xf32, #tpu.memory_space<vmem>>, %arg20: memref<32x32xbf16, #tpu.memory_space<vmem>>, %arg21: memref<1x32xf32, #tpu.memory_space<vmem>>, %arg22: memref<32x64xbf16, #tpu.memory_space<vmem>>, %arg23: memref<1x64xf32, #tpu.memory_space<vmem>>, %arg24: memref<32x32xbf16, #tpu.memory_space<vmem>>, %arg25: memref<1x32xf32, #tpu.memory_space<vmem>>, %arg26: memref<1x32xf32, #tpu.memory_space<vmem>>, %arg27: memref<1x32xf32, #tpu.memory_space<vmem>>, %arg28: memref<32x64xbf16, #tpu.memory_space<vmem>>, %arg29: memref<1x64xf32, #tpu.memory_space<vmem>>, %arg30: memref<64x32xbf16, #tpu.memory_space<vmem>>, %arg31: memref<1x32xf32, #tpu.memory_space<vmem>>, %arg32: memref<1x32xf32, #tpu.memory_space<vmem>>, %arg33: memref<1x32xf32, #tpu.memory_space<vmem>>, %arg34: memref<1x8x32xf32, #tpu.memory_space<vmem>>) attributes {dimension_semantics = [#tpu.dimension_semantics<parallel>], iteration_bounds = array<i64: 2>, scalar_prefetch = 0 : i64, scratch_operands = 0 : i64, tpu.core_type = #tpu.core_type<tc>, window_params = [{transform_indices = @transform_0, window_bounds = array<i64: 1, 8, 32>}, {transform_indices = @transform_1, window_bounds = array<i64: 1, 10, 32>}, {transform_indices = @transform_2, window_bounds = array<i64: 1, 5, 16>}, {pipeline_mode = #tpu.pipeline_mode<synchronous>, transform_indices = @transform_3, window_bounds = array<i64: 32, 32>}, {pipeline_mode = #tpu.pipeline_mode<synchronous>, transform_indices = @transform_4, window_bounds = array<i64: 1, 32>}, {pipeline_mode = #tpu.pipeline_mode<synchronous>, transform_indices = @transform_5, window_bounds = array<i64: 32, 64>}, {pipeline_mode = #tpu.pipeline_mode<synchronous>, transform_indices = @transform_6, window_bounds = array<i64: 1, 64>}, {pipeline_mode = #tpu.pipeline_mode<synchronous>, transform_indices = @transform_7, window_bounds = array<i64: 32, 32>}, {pipeline_mode = #tpu.pipeline_mode<synchronous>, transform_indices = @transform_8, window_bounds = array<i64: 1, 32>}, {pipeline_mode = #tpu.pipeline_mode<synchronous>, transform_indices = @transform_9, window_bounds = array<i64: 1, 32>}, {pipeline_mode = #tpu.pipeline_mode<synchronous>, transform_indices = @transform_10, window_bounds = array<i64: 1, 32>}, {pipeline_mode = #tpu.pipeline_mode<synchronous>, transform_indices = @transform_11, window_bounds = array<i64: 32, 16>}, {pipeline_mode = #tpu.pipeline_mode<synchronous>, transform_indices = @transform_12, window_bounds = array<i64: 1, 16>}, {pipeline_mode = #tpu.pipeline_mode<synchronous>, transform_indices = @transform_13, window_bounds = array<i64: 16, 32>}, {pipeline_mode = #tpu.pipeline_mode<synchronous>, transform_indices = @transform_14, window_bounds = array<i64: 1, 32>}, {pipeline_mode = #tpu.pipeline_mode<synchronous>, transform_indices = @transform_15, window_bounds = array<i64: 16, 32>}, {pipeline_mode = #tpu.pipeline_mode<synchronous>, transform_indices = @transform_16, window_bounds = array<i64: 1, 32>}, {pipeline_mode = #tpu.pipeline_mode<synchronous>, transform_indices = @transform_17, window_bounds = array<i64: 1, 32>}, {pipeline_mode = #tpu.pipeline_mode<synchronous>, transform_indices = @transform_18, window_bounds = array<i64: 1, 32>}, {pipeline_mode = #tpu.pipeline_mode<synchronous>, transform_indices = @transform_19, window_bounds = array<i64: 32, 32>}, {pipeline_mode = #tpu.pipeline_mode<synchronous>, transform_indices = @transform_20, window_bounds = array<i64: 1, 32>}, {pipeline_mode = #tpu.pipeline_mode<synchronous>, transform_indices = @transform_21, window_bounds = array<i64: 32, 64>}, {pipeline_mode = #tpu.pipeline_mode<synchronous>, transform_indices = @transform_22, window_bounds = array<i64: 1, 64>}, {pipeline_mode = #tpu.pipeline_mode<synchronous>, transform_indices = @transform_23, window_bounds = array<i64: 32, 32>}, {pipeline_mode = #tpu.pipeline_mode<synchronous>, transform_indices = @transform_24, window_bounds = array<i64: 1, 32>}, {pipeline_mode = #tpu.pipeline_mode<synchronous>, transform_indices = @transform_25, window_bounds = array<i64: 1, 32>}, {pipeline_mode = #tpu.pipeline_mode<synchronous>, transform_indices = @transform_26, window_bounds = array<i64: 1, 32>}, {pipeline_mode = #tpu.pipeline_mode<synchronous>, transform_indices = @transform_27, window_bounds = array<i64: 32, 64>}, {pipeline_mode = #tpu.pipeline_mode<synchronous>, transform_indices = @transform_28, window_bounds = array<i64: 1, 64>}, {pipeline_mode = #tpu.pipeline_mode<synchronous>, transform_indices = @transform_29, window_bounds = array<i64: 64, 32>}, {pipeline_mode = #tpu.pipeline_mode<synchronous>, transform_indices = @transform_30, window_bounds = array<i64: 1, 32>}, {pipeline_mode = #tpu.pipeline_mode<synchronous>, transform_indices = @transform_31, window_bounds = array<i64: 1, 32>}, {pipeline_mode = #tpu.pipeline_mode<synchronous>, transform_indices = @transform_32, window_bounds = array<i64: 1, 32>}, {transform_indices = @transform_33, window_bounds = array<i64: 1, 8, 32>}]} {
    %c0 = arith.constant 0 : index
    %c0_0 = arith.constant 0 : index
    %c0_1 = arith.constant 0 : index
    %0 = vector.load %arg1[%c0, %c0_0, %c0_1] : memref<1x8x32xf32, #tpu.memory_space<vmem>>, vector<1x8x32xf32>
    %1 = vector.shape_cast %0 : vector<1x8x32xf32> to vector<8x32xf32>
    %c0_2 = arith.constant 0 : index
    %c0_3 = arith.constant 0 : index
    %2 = vector.load %arg4[%c0_2, %c0_3] : memref<32x32xbf16, #tpu.memory_space<vmem>>, vector<32x32xbf16>
    %c0_4 = arith.constant 0 : index
    %c0_5 = arith.constant 0 : index
    %3 = vector.load %arg5[%c0_4, %c0_5] : memref<1x32xf32, #tpu.memory_space<vmem>>, vector<1x32xf32>
    %c0_6 = arith.constant 0 : index
    %c0_7 = arith.constant 0 : index
    %4 = vector.load %arg6[%c0_6, %c0_7] : memref<32x64xbf16, #tpu.memory_space<vmem>>, vector<32x64xbf16>
    %c0_8 = arith.constant 0 : index
    %c0_9 = arith.constant 0 : index
    %5 = vector.load %arg7[%c0_8, %c0_9] : memref<1x64xf32, #tpu.memory_space<vmem>>, vector<1x64xf32>
    %c0_10 = arith.constant 0 : index
    %c0_11 = arith.constant 0 : index
    %6 = vector.load %arg8[%c0_10, %c0_11] : memref<32x32xbf16, #tpu.memory_space<vmem>>, vector<32x32xbf16>
    %c0_12 = arith.constant 0 : index
    %c0_13 = arith.constant 0 : index
    %7 = vector.load %arg9[%c0_12, %c0_13] : memref<1x32xf32, #tpu.memory_space<vmem>>, vector<1x32xf32>
    %c0_14 = arith.constant 0 : index
    %c0_15 = arith.constant 0 : index
    %8 = vector.load %arg10[%c0_14, %c0_15] : memref<1x32xf32, #tpu.memory_space<vmem>>, vector<1x32xf32>
    %c0_16 = arith.constant 0 : index
    %c0_17 = arith.constant 0 : index
    %9 = vector.load %arg11[%c0_16, %c0_17] : memref<1x32xf32, #tpu.memory_space<vmem>>, vector<1x32xf32>
    %10 = arith.truncf %1 : vector<8x32xf32> to vector<8x32xbf16>
    %cst = arith.constant dense<0.000000e+00> : vector<8x32xf32>
    %11 = tpu.matmul %10, %2, %cst {dimension_numbers = #tpu.dot_dimension_numbers<[1], [0], [0], [1], [0, 0, 1, 1], [], []>} : vector<8x32xbf16>, vector<32x32xbf16>, vector<8x32xf32> -> vector<8x32xf32>
    %12 = vector.broadcast %3 : vector<1x32xf32> to vector<8x32xf32>
    %13 = arith.addf %11, %12 : vector<8x32xf32>
    %14 = arith.truncf %1 : vector<8x32xf32> to vector<8x32xbf16>
    %cst_18 = arith.constant dense<0.000000e+00> : vector<8x64xf32>
    %15 = tpu.matmul %14, %4, %cst_18 {dimension_numbers = #tpu.dot_dimension_numbers<[1], [0], [0], [1], [0, 0, 1, 1], [], []>} : vector<8x32xbf16>, vector<32x64xbf16>, vector<8x64xf32> -> vector<8x64xf32>
    %16 = vector.broadcast %5 : vector<1x64xf32> to vector<8x64xf32>
    %17 = arith.addf %15, %16 : vector<8x64xf32>
    %18 = arith.truncf %13 : vector<8x32xf32> to vector<8x32xbf16>
    %19 = vector.extract_strided_slice %17 {offsets = [0, 0], sizes = [8, 32], strides = [1, 1]} : vector<8x64xf32> to vector<8x32xf32>
    %20 = arith.truncf %19 : vector<8x32xf32> to vector<8x32xbf16>
    %21 = vector.extract_strided_slice %17 {offsets = [0, 32], sizes = [8, 32], strides = [1, 1]} : vector<8x64xf32> to vector<8x32xf32>
    %22 = arith.truncf %21 : vector<8x32xf32> to vector<8x32xbf16>
    %23 = vector.extract_strided_slice %18 {offsets = [0, 0], sizes = [8, 8], strides = [1, 1]} : vector<8x32xbf16> to vector<8x8xbf16>
    %24 = vector.extract_strided_slice %20 {offsets = [0, 0], sizes = [8, 8], strides = [1, 1]} : vector<8x32xbf16> to vector<8x8xbf16>
    "tpu.trace_start"() <{level = 10 : i32, message = "td,sd->ts"}> : () -> ()
    %cst_19 = arith.constant dense<0.000000e+00> : vector<8x8xf32>
    %25 = tpu.matmul %23, %24, %cst_19 {dimension_numbers = #tpu.dot_dimension_numbers<[1], [1], [0], [0], [0, 0, 1, 0], [], []>} : vector<8x8xbf16>, vector<8x8xbf16>, vector<8x8xf32> -> vector<8x8xf32>
    "tpu.trace_stop"() : () -> ()
    %cst_20 = arith.constant 0.353553385 : f32
    %26 = vector.broadcast %cst_20 : f32 to vector<8x8xf32>
    %27 = arith.mulf %25, %26 : vector<8x8xf32>
    %cst_21 = arith.constant dense<0xFF800000> : vector<8xf32>
    %28 = vector.multi_reduction <maximumf>, %27, %cst_21 [1] : vector<8x8xf32> to vector<8xf32>
    %29 = vector.shape_cast %28 : vector<8xf32> to vector<8x1xf32>
    %30 = vector.broadcast %29 : vector<8x1xf32> to vector<8x8xf32>
    %31 = arith.subf %27, %30 : vector<8x8xf32>
    %32 = math.exp %31 : vector<8x8xf32>
    %cst_22 = arith.constant dense<0.000000e+00> : vector<8xf32>
    %33 = vector.multi_reduction <add>, %32, %cst_22 [1] : vector<8x8xf32> to vector<8xf32>
    %34 = vector.shape_cast %33 : vector<8xf32> to vector<8x1xf32>
    %35 = vector.broadcast %34 : vector<8x1xf32> to vector<8x8xf32>
    %36 = arith.divf %32, %35 : vector<8x8xf32>
    %37 = arith.truncf %36 : vector<8x8xf32> to vector<8x8xbf16>
    %38 = vector.extract_strided_slice %22 {offsets = [0, 0], sizes = [8, 8], strides = [1, 1]} : vector<8x32xbf16> to vector<8x8xbf16>
    %cst_23 = arith.constant dense<0.000000e+00> : vector<8x8xf32>
    %39 = tpu.matmul %37, %38, %cst_23 {dimension_numbers = #tpu.dot_dimension_numbers<[1], [0], [0], [1], [0, 0, 1, 1], [], []>} : vector<8x8xbf16>, vector<8x8xbf16>, vector<8x8xf32> -> vector<8x8xf32>
    %40 = vector.extract_strided_slice %18 {offsets = [0, 8], sizes = [8, 8], strides = [1, 1]} : vector<8x32xbf16> to vector<8x8xbf16>
    %41 = vector.extract_strided_slice %20 {offsets = [0, 8], sizes = [8, 8], strides = [1, 1]} : vector<8x32xbf16> to vector<8x8xbf16>
    "tpu.trace_start"() <{level = 10 : i32, message = "td,sd->ts"}> : () -> ()
    %cst_24 = arith.constant dense<0.000000e+00> : vector<8x8xf32>
    %42 = tpu.matmul %40, %41, %cst_24 {dimension_numbers = #tpu.dot_dimension_numbers<[1], [1], [0], [0], [0, 0, 1, 0], [], []>} : vector<8x8xbf16>, vector<8x8xbf16>, vector<8x8xf32> -> vector<8x8xf32>
    "tpu.trace_stop"() : () -> ()
    %cst_25 = arith.constant 0.353553385 : f32
    %43 = vector.broadcast %cst_25 : f32 to vector<8x8xf32>
    %44 = arith.mulf %42, %43 : vector<8x8xf32>
    %cst_26 = arith.constant dense<0xFF800000> : vector<8xf32>
    %45 = vector.multi_reduction <maximumf>, %44, %cst_26 [1] : vector<8x8xf32> to vector<8xf32>
    %46 = vector.shape_cast %45 : vector<8xf32> to vector<8x1xf32>
    %47 = vector.broadcast %46 : vector<8x1xf32> to vector<8x8xf32>
    %48 = arith.subf %44, %47 : vector<8x8xf32>
    %49 = math.exp %48 : vector<8x8xf32>
    %cst_27 = arith.constant dense<0.000000e+00> : vector<8xf32>
    %50 = vector.multi_reduction <add>, %49, %cst_27 [1] : vector<8x8xf32> to vector<8xf32>
    %51 = vector.shape_cast %50 : vector<8xf32> to vector<8x1xf32>
    %52 = vector.broadcast %51 : vector<8x1xf32> to vector<8x8xf32>
    %53 = arith.divf %49, %52 : vector<8x8xf32>
    %54 = arith.truncf %53 : vector<8x8xf32> to vector<8x8xbf16>
    %55 = vector.extract_strided_slice %22 {offsets = [0, 8], sizes = [8, 8], strides = [1, 1]} : vector<8x32xbf16> to vector<8x8xbf16>
    %cst_28 = arith.constant dense<0.000000e+00> : vector<8x8xf32>
    %56 = tpu.matmul %54, %55, %cst_28 {dimension_numbers = #tpu.dot_dimension_numbers<[1], [0], [0], [1], [0, 0, 1, 1], [], []>} : vector<8x8xbf16>, vector<8x8xbf16>, vector<8x8xf32> -> vector<8x8xf32>
    %57 = vector.extract_strided_slice %18 {offsets = [0, 16], sizes = [8, 8], strides = [1, 1]} : vector<8x32xbf16> to vector<8x8xbf16>
    %58 = vector.extract_strided_slice %20 {offsets = [0, 16], sizes = [8, 8], strides = [1, 1]} : vector<8x32xbf16> to vector<8x8xbf16>
    "tpu.trace_start"() <{level = 10 : i32, message = "td,sd->ts"}> : () -> ()
    %cst_29 = arith.constant dense<0.000000e+00> : vector<8x8xf32>
    %59 = tpu.matmul %57, %58, %cst_29 {dimension_numbers = #tpu.dot_dimension_numbers<[1], [1], [0], [0], [0, 0, 1, 0], [], []>} : vector<8x8xbf16>, vector<8x8xbf16>, vector<8x8xf32> -> vector<8x8xf32>
    "tpu.trace_stop"() : () -> ()
    %cst_30 = arith.constant 0.353553385 : f32
    %60 = vector.broadcast %cst_30 : f32 to vector<8x8xf32>
    %61 = arith.mulf %59, %60 : vector<8x8xf32>
    %cst_31 = arith.constant dense<0xFF800000> : vector<8xf32>
    %62 = vector.multi_reduction <maximumf>, %61, %cst_31 [1] : vector<8x8xf32> to vector<8xf32>
    %63 = vector.shape_cast %62 : vector<8xf32> to vector<8x1xf32>
    %64 = vector.broadcast %63 : vector<8x1xf32> to vector<8x8xf32>
    %65 = arith.subf %61, %64 : vector<8x8xf32>
    %66 = math.exp %65 : vector<8x8xf32>
    %cst_32 = arith.constant dense<0.000000e+00> : vector<8xf32>
    %67 = vector.multi_reduction <add>, %66, %cst_32 [1] : vector<8x8xf32> to vector<8xf32>
    %68 = vector.shape_cast %67 : vector<8xf32> to vector<8x1xf32>
    %69 = vector.broadcast %68 : vector<8x1xf32> to vector<8x8xf32>
    %70 = arith.divf %66, %69 : vector<8x8xf32>
    %71 = arith.truncf %70 : vector<8x8xf32> to vector<8x8xbf16>
    %72 = vector.extract_strided_slice %22 {offsets = [0, 16], sizes = [8, 8], strides = [1, 1]} : vector<8x32xbf16> to vector<8x8xbf16>
    %cst_33 = arith.constant dense<0.000000e+00> : vector<8x8xf32>
    %73 = tpu.matmul %71, %72, %cst_33 {dimension_numbers = #tpu.dot_dimension_numbers<[1], [0], [0], [1], [0, 0, 1, 1], [], []>} : vector<8x8xbf16>, vector<8x8xbf16>, vector<8x8xf32> -> vector<8x8xf32>
    %74 = vector.extract_strided_slice %18 {offsets = [0, 24], sizes = [8, 8], strides = [1, 1]} : vector<8x32xbf16> to vector<8x8xbf16>
    %75 = vector.extract_strided_slice %20 {offsets = [0, 24], sizes = [8, 8], strides = [1, 1]} : vector<8x32xbf16> to vector<8x8xbf16>
    "tpu.trace_start"() <{level = 10 : i32, message = "td,sd->ts"}> : () -> ()
    %cst_34 = arith.constant dense<0.000000e+00> : vector<8x8xf32>
    %76 = tpu.matmul %74, %75, %cst_34 {dimension_numbers = #tpu.dot_dimension_numbers<[1], [1], [0], [0], [0, 0, 1, 0], [], []>} : vector<8x8xbf16>, vector<8x8xbf16>, vector<8x8xf32> -> vector<8x8xf32>
    "tpu.trace_stop"() : () -> ()
    %cst_35 = arith.constant 0.353553385 : f32
    %77 = vector.broadcast %cst_35 : f32 to vector<8x8xf32>
    %78 = arith.mulf %76, %77 : vector<8x8xf32>
    %cst_36 = arith.constant dense<0xFF800000> : vector<8xf32>
    %79 = vector.multi_reduction <maximumf>, %78, %cst_36 [1] : vector<8x8xf32> to vector<8xf32>
    %80 = vector.shape_cast %79 : vector<8xf32> to vector<8x1xf32>
    %81 = vector.broadcast %80 : vector<8x1xf32> to vector<8x8xf32>
    %82 = arith.subf %78, %81 : vector<8x8xf32>
    %83 = math.exp %82 : vector<8x8xf32>
    %cst_37 = arith.constant dense<0.000000e+00> : vector<8xf32>
    %84 = vector.multi_reduction <add>, %83, %cst_37 [1] : vector<8x8xf32> to vector<8xf32>
    %85 = vector.shape_cast %84 : vector<8xf32> to vector<8x1xf32>
    %86 = vector.broadcast %85 : vector<8x1xf32> to vector<8x8xf32>
    %87 = arith.divf %83, %86 : vector<8x8xf32>
    %88 = arith.truncf %87 : vector<8x8xf32> to vector<8x8xbf16>
    %89 = vector.extract_strided_slice %22 {offsets = [0, 24], sizes = [8, 8], strides = [1, 1]} : vector<8x32xbf16> to vector<8x8xbf16>
    %cst_38 = arith.constant dense<0.000000e+00> : vector<8x8xf32>
    %90 = tpu.matmul %88, %89, %cst_38 {dimension_numbers = #tpu.dot_dimension_numbers<[1], [0], [0], [1], [0, 0, 1, 1], [], []>} : vector<8x8xbf16>, vector<8x8xbf16>, vector<8x8xf32> -> vector<8x8xf32>
    %91 = tpu.concatenate %39, %56, %73, %90 in 1 : vector<8x8xf32>, vector<8x8xf32>, vector<8x8xf32>, vector<8x8xf32> -> vector<8x32xf32>
    %92 = arith.truncf %91 : vector<8x32xf32> to vector<8x32xbf16>
    %cst_39 = arith.constant dense<0.000000e+00> : vector<8x32xf32>
    %93 = tpu.matmul %92, %6, %cst_39 {dimension_numbers = #tpu.dot_dimension_numbers<[1], [0], [0], [1], [0, 0, 1, 1], [], []>} : vector<8x32xbf16>, vector<32x32xbf16>, vector<8x32xf32> -> vector<8x32xf32>
    %94 = vector.broadcast %7 : vector<1x32xf32> to vector<8x32xf32>
    %95 = arith.addf %93, %94 : vector<8x32xf32>
    %96 = arith.addf %1, %95 : vector<8x32xf32>
    %cst_40 = arith.constant dense<0.000000e+00> : vector<8xf32>
    %97 = vector.multi_reduction <add>, %96, %cst_40 [1] : vector<8x32xf32> to vector<8xf32>
    %98 = vector.shape_cast %97 : vector<8xf32> to vector<8x1xf32>
    %cst_41 = arith.constant 3.200000e+01 : f32
    %99 = vector.broadcast %cst_41 : f32 to vector<8x1xf32>
    %100 = arith.divf %98, %99 : vector<8x1xf32>
    %101 = vector.broadcast %100 : vector<8x1xf32> to vector<8x32xf32>
    %102 = arith.subf %96, %101 : vector<8x32xf32>
    %103 = arith.mulf %102, %102 : vector<8x32xf32>
    %cst_42 = arith.constant dense<0.000000e+00> : vector<8xf32>
    %104 = vector.multi_reduction <add>, %103, %cst_42 [1] : vector<8x32xf32> to vector<8xf32>
    %105 = vector.shape_cast %104 : vector<8xf32> to vector<8x1xf32>
    %cst_43 = arith.constant 3.200000e+01 : f32
    %106 = vector.broadcast %cst_43 : f32 to vector<8x1xf32>
    %107 = arith.divf %105, %106 : vector<8x1xf32>
    %108 = vector.broadcast %100 : vector<8x1xf32> to vector<8x32xf32>
    %109 = arith.subf %96, %108 : vector<8x32xf32>
    %cst_44 = arith.constant 9.99999974E-6 : f32
    %110 = vector.broadcast %cst_44 : f32 to vector<8x1xf32>
    %111 = arith.addf %107, %110 : vector<8x1xf32>
    %112 = math.rsqrt %111 : vector<8x1xf32>
    %113 = vector.broadcast %112 : vector<8x1xf32> to vector<8x32xf32>
    %114 = arith.mulf %109, %113 : vector<8x32xf32>
    %115 = vector.broadcast %8 : vector<1x32xf32> to vector<8x32xf32>
    %116 = arith.mulf %114, %115 : vector<8x32xf32>
    %117 = vector.broadcast %9 : vector<1x32xf32> to vector<8x32xf32>
    %118 = arith.addf %116, %117 : vector<8x32xf32>
    %c0_45 = arith.constant 0 : index
    %c0_46 = arith.constant 0 : index
    %c0_47 = arith.constant 0 : index
    %119 = vector.load %arg3[%c0_45, %c0_46, %c0_47] : memref<1x5x16xf32, #tpu.memory_space<vmem>>, vector<1x5x16xf32>
    %120 = vector.shape_cast %119 : vector<1x5x16xf32> to vector<5x16xf32>
    %c0_48 = arith.constant 0 : index
    %c0_49 = arith.constant 0 : index
    %121 = vector.load %arg12[%c0_48, %c0_49] : memref<32x16xbf16, #tpu.memory_space<vmem>>, vector<32x16xbf16>
    %c0_50 = arith.constant 0 : index
    %c0_51 = arith.constant 0 : index
    %122 = vector.load %arg13[%c0_50, %c0_51] : memref<1x16xf32, #tpu.memory_space<vmem>>, vector<1x16xf32>
    %c0_52 = arith.constant 0 : index
    %c0_53 = arith.constant 0 : index
    %123 = vector.load %arg14[%c0_52, %c0_53] : memref<16x32xbf16, #tpu.memory_space<vmem>>, vector<16x32xbf16>
    %c0_54 = arith.constant 0 : index
    %c0_55 = arith.constant 0 : index
    %124 = vector.load %arg15[%c0_54, %c0_55] : memref<1x32xf32, #tpu.memory_space<vmem>>, vector<1x32xf32>
    %c0_56 = arith.constant 0 : index
    %c0_57 = arith.constant 0 : index
    %125 = vector.load %arg16[%c0_56, %c0_57] : memref<16x32xbf16, #tpu.memory_space<vmem>>, vector<16x32xbf16>
    %c0_58 = arith.constant 0 : index
    %c0_59 = arith.constant 0 : index
    %126 = vector.load %arg17[%c0_58, %c0_59] : memref<1x32xf32, #tpu.memory_space<vmem>>, vector<1x32xf32>
    %c0_60 = arith.constant 0 : index
    %c0_61 = arith.constant 0 : index
    %127 = vector.load %arg18[%c0_60, %c0_61] : memref<1x32xf32, #tpu.memory_space<vmem>>, vector<1x32xf32>
    %c0_62 = arith.constant 0 : index
    %c0_63 = arith.constant 0 : index
    %128 = vector.load %arg19[%c0_62, %c0_63] : memref<1x32xf32, #tpu.memory_space<vmem>>, vector<1x32xf32>
    %129 = arith.truncf %118 : vector<8x32xf32> to vector<8x32xbf16>
    %cst_64 = arith.constant dense<0.000000e+00> : vector<8x16xf32>
    %130 = tpu.matmul %129, %121, %cst_64 {dimension_numbers = #tpu.dot_dimension_numbers<[1], [0], [0], [1], [0, 0, 1, 1], [], []>} : vector<8x32xbf16>, vector<32x16xbf16>, vector<8x16xf32> -> vector<8x16xf32>
    %131 = vector.broadcast %122 : vector<1x16xf32> to vector<8x16xf32>
    %132 = arith.addf %130, %131 : vector<8x16xf32>
    %133 = arith.truncf %120 : vector<5x16xf32> to vector<5x16xbf16>
    %cst_65 = arith.constant dense<0.000000e+00> : vector<5x32xf32>
    %134 = tpu.matmul %133, %123, %cst_65 {dimension_numbers = #tpu.dot_dimension_numbers<[1], [0], [0], [1], [0, 0, 1, 1], [], []>} : vector<5x16xbf16>, vector<16x32xbf16>, vector<5x32xf32> -> vector<5x32xf32>
    %135 = vector.broadcast %124 : vector<1x32xf32> to vector<5x32xf32>
    %136 = arith.addf %134, %135 : vector<5x32xf32>
    %137 = arith.truncf %132 : vector<8x16xf32> to vector<8x16xbf16>
    %138 = vector.extract_strided_slice %136 {offsets = [0, 0], sizes = [5, 16], strides = [1, 1]} : vector<5x32xf32> to vector<5x16xf32>
    %139 = arith.truncf %138 : vector<5x16xf32> to vector<5x16xbf16>
    %140 = vector.extract_strided_slice %136 {offsets = [0, 16], sizes = [5, 16], strides = [1, 1]} : vector<5x32xf32> to vector<5x16xf32>
    %141 = arith.truncf %140 : vector<5x16xf32> to vector<5x16xbf16>
    %142 = vector.extract_strided_slice %137 {offsets = [0, 0], sizes = [8, 4], strides = [1, 1]} : vector<8x16xbf16> to vector<8x4xbf16>
    %143 = vector.extract_strided_slice %139 {offsets = [0, 0], sizes = [5, 4], strides = [1, 1]} : vector<5x16xbf16> to vector<5x4xbf16>
    "tpu.trace_start"() <{level = 10 : i32, message = "td,sd->ts"}> : () -> ()
    %cst_66 = arith.constant dense<0.000000e+00> : vector<8x5xf32>
    %144 = tpu.matmul %142, %143, %cst_66 {dimension_numbers = #tpu.dot_dimension_numbers<[1], [1], [0], [0], [0, 0, 1, 0], [], []>} : vector<8x4xbf16>, vector<5x4xbf16>, vector<8x5xf32> -> vector<8x5xf32>
    "tpu.trace_stop"() : () -> ()
    %cst_67 = arith.constant 5.000000e-01 : f32
    %145 = vector.broadcast %cst_67 : f32 to vector<8x5xf32>
    %146 = arith.mulf %144, %145 : vector<8x5xf32>
    %cst_68 = arith.constant dense<0xFF800000> : vector<8xf32>
    %147 = vector.multi_reduction <maximumf>, %146, %cst_68 [1] : vector<8x5xf32> to vector<8xf32>
    %148 = vector.shape_cast %147 : vector<8xf32> to vector<8x1xf32>
    %149 = vector.broadcast %148 : vector<8x1xf32> to vector<8x5xf32>
    %150 = arith.subf %146, %149 : vector<8x5xf32>
    %151 = math.exp %150 : vector<8x5xf32>
    %cst_69 = arith.constant dense<0.000000e+00> : vector<8xf32>
    %152 = vector.multi_reduction <add>, %151, %cst_69 [1] : vector<8x5xf32> to vector<8xf32>
    %153 = vector.shape_cast %152 : vector<8xf32> to vector<8x1xf32>
    %154 = vector.broadcast %153 : vector<8x1xf32> to vector<8x5xf32>
    %155 = arith.divf %151, %154 : vector<8x5xf32>
    %156 = arith.truncf %155 : vector<8x5xf32> to vector<8x5xbf16>
    %157 = vector.extract_strided_slice %141 {offsets = [0, 0], sizes = [5, 4], strides = [1, 1]} : vector<5x16xbf16> to vector<5x4xbf16>
    %cst_70 = arith.constant dense<0.000000e+00> : vector<8x4xf32>
    %158 = tpu.matmul %156, %157, %cst_70 {dimension_numbers = #tpu.dot_dimension_numbers<[1], [0], [0], [1], [0, 0, 1, 1], [], []>} : vector<8x5xbf16>, vector<5x4xbf16>, vector<8x4xf32> -> vector<8x4xf32>
    %159 = vector.extract_strided_slice %137 {offsets = [0, 4], sizes = [8, 4], strides = [1, 1]} : vector<8x16xbf16> to vector<8x4xbf16>
    %160 = vector.extract_strided_slice %139 {offsets = [0, 4], sizes = [5, 4], strides = [1, 1]} : vector<5x16xbf16> to vector<5x4xbf16>
    "tpu.trace_start"() <{level = 10 : i32, message = "td,sd->ts"}> : () -> ()
    %cst_71 = arith.constant dense<0.000000e+00> : vector<8x5xf32>
    %161 = tpu.matmul %159, %160, %cst_71 {dimension_numbers = #tpu.dot_dimension_numbers<[1], [1], [0], [0], [0, 0, 1, 0], [], []>} : vector<8x4xbf16>, vector<5x4xbf16>, vector<8x5xf32> -> vector<8x5xf32>
    "tpu.trace_stop"() : () -> ()
    %cst_72 = arith.constant 5.000000e-01 : f32
    %162 = vector.broadcast %cst_72 : f32 to vector<8x5xf32>
    %163 = arith.mulf %161, %162 : vector<8x5xf32>
    %cst_73 = arith.constant dense<0xFF800000> : vector<8xf32>
    %164 = vector.multi_reduction <maximumf>, %163, %cst_73 [1] : vector<8x5xf32> to vector<8xf32>
    %165 = vector.shape_cast %164 : vector<8xf32> to vector<8x1xf32>
    %166 = vector.broadcast %165 : vector<8x1xf32> to vector<8x5xf32>
    %167 = arith.subf %163, %166 : vector<8x5xf32>
    %168 = math.exp %167 : vector<8x5xf32>
    %cst_74 = arith.constant dense<0.000000e+00> : vector<8xf32>
    %169 = vector.multi_reduction <add>, %168, %cst_74 [1] : vector<8x5xf32> to vector<8xf32>
    %170 = vector.shape_cast %169 : vector<8xf32> to vector<8x1xf32>
    %171 = vector.broadcast %170 : vector<8x1xf32> to vector<8x5xf32>
    %172 = arith.divf %168, %171 : vector<8x5xf32>
    %173 = arith.truncf %172 : vector<8x5xf32> to vector<8x5xbf16>
    %174 = vector.extract_strided_slice %141 {offsets = [0, 4], sizes = [5, 4], strides = [1, 1]} : vector<5x16xbf16> to vector<5x4xbf16>
    %cst_75 = arith.constant dense<0.000000e+00> : vector<8x4xf32>
    %175 = tpu.matmul %173, %174, %cst_75 {dimension_numbers = #tpu.dot_dimension_numbers<[1], [0], [0], [1], [0, 0, 1, 1], [], []>} : vector<8x5xbf16>, vector<5x4xbf16>, vector<8x4xf32> -> vector<8x4xf32>
    %176 = vector.extract_strided_slice %137 {offsets = [0, 8], sizes = [8, 4], strides = [1, 1]} : vector<8x16xbf16> to vector<8x4xbf16>
    %177 = vector.extract_strided_slice %139 {offsets = [0, 8], sizes = [5, 4], strides = [1, 1]} : vector<5x16xbf16> to vector<5x4xbf16>
    "tpu.trace_start"() <{level = 10 : i32, message = "td,sd->ts"}> : () -> ()
    %cst_76 = arith.constant dense<0.000000e+00> : vector<8x5xf32>
    %178 = tpu.matmul %176, %177, %cst_76 {dimension_numbers = #tpu.dot_dimension_numbers<[1], [1], [0], [0], [0, 0, 1, 0], [], []>} : vector<8x4xbf16>, vector<5x4xbf16>, vector<8x5xf32> -> vector<8x5xf32>
    "tpu.trace_stop"() : () -> ()
    %cst_77 = arith.constant 5.000000e-01 : f32
    %179 = vector.broadcast %cst_77 : f32 to vector<8x5xf32>
    %180 = arith.mulf %178, %179 : vector<8x5xf32>
    %cst_78 = arith.constant dense<0xFF800000> : vector<8xf32>
    %181 = vector.multi_reduction <maximumf>, %180, %cst_78 [1] : vector<8x5xf32> to vector<8xf32>
    %182 = vector.shape_cast %181 : vector<8xf32> to vector<8x1xf32>
    %183 = vector.broadcast %182 : vector<8x1xf32> to vector<8x5xf32>
    %184 = arith.subf %180, %183 : vector<8x5xf32>
    %185 = math.exp %184 : vector<8x5xf32>
    %cst_79 = arith.constant dense<0.000000e+00> : vector<8xf32>
    %186 = vector.multi_reduction <add>, %185, %cst_79 [1] : vector<8x5xf32> to vector<8xf32>
    %187 = vector.shape_cast %186 : vector<8xf32> to vector<8x1xf32>
    %188 = vector.broadcast %187 : vector<8x1xf32> to vector<8x5xf32>
    %189 = arith.divf %185, %188 : vector<8x5xf32>
    %190 = arith.truncf %189 : vector<8x5xf32> to vector<8x5xbf16>
    %191 = vector.extract_strided_slice %141 {offsets = [0, 8], sizes = [5, 4], strides = [1, 1]} : vector<5x16xbf16> to vector<5x4xbf16>
    %cst_80 = arith.constant dense<0.000000e+00> : vector<8x4xf32>
    %192 = tpu.matmul %190, %191, %cst_80 {dimension_numbers = #tpu.dot_dimension_numbers<[1], [0], [0], [1], [0, 0, 1, 1], [], []>} : vector<8x5xbf16>, vector<5x4xbf16>, vector<8x4xf32> -> vector<8x4xf32>
    %193 = vector.extract_strided_slice %137 {offsets = [0, 12], sizes = [8, 4], strides = [1, 1]} : vector<8x16xbf16> to vector<8x4xbf16>
    %194 = vector.extract_strided_slice %139 {offsets = [0, 12], sizes = [5, 4], strides = [1, 1]} : vector<5x16xbf16> to vector<5x4xbf16>
    "tpu.trace_start"() <{level = 10 : i32, message = "td,sd->ts"}> : () -> ()
    %cst_81 = arith.constant dense<0.000000e+00> : vector<8x5xf32>
    %195 = tpu.matmul %193, %194, %cst_81 {dimension_numbers = #tpu.dot_dimension_numbers<[1], [1], [0], [0], [0, 0, 1, 0], [], []>} : vector<8x4xbf16>, vector<5x4xbf16>, vector<8x5xf32> -> vector<8x5xf32>
    "tpu.trace_stop"() : () -> ()
    %cst_82 = arith.constant 5.000000e-01 : f32
    %196 = vector.broadcast %cst_82 : f32 to vector<8x5xf32>
    %197 = arith.mulf %195, %196 : vector<8x5xf32>
    %cst_83 = arith.constant dense<0xFF800000> : vector<8xf32>
    %198 = vector.multi_reduction <maximumf>, %197, %cst_83 [1] : vector<8x5xf32> to vector<8xf32>
    %199 = vector.shape_cast %198 : vector<8xf32> to vector<8x1xf32>
    %200 = vector.broadcast %199 : vector<8x1xf32> to vector<8x5xf32>
    %201 = arith.subf %197, %200 : vector<8x5xf32>
    %202 = math.exp %201 : vector<8x5xf32>
    %cst_84 = arith.constant dense<0.000000e+00> : vector<8xf32>
    %203 = vector.multi_reduction <add>, %202, %cst_84 [1] : vector<8x5xf32> to vector<8xf32>
    %204 = vector.shape_cast %203 : vector<8xf32> to vector<8x1xf32>
    %205 = vector.broadcast %204 : vector<8x1xf32> to vector<8x5xf32>
    %206 = arith.divf %202, %205 : vector<8x5xf32>
    %207 = arith.truncf %206 : vector<8x5xf32> to vector<8x5xbf16>
    %208 = vector.extract_strided_slice %141 {offsets = [0, 12], sizes = [5, 4], strides = [1, 1]} : vector<5x16xbf16> to vector<5x4xbf16>
    %cst_85 = arith.constant dense<0.000000e+00> : vector<8x4xf32>
    %209 = tpu.matmul %207, %208, %cst_85 {dimension_numbers = #tpu.dot_dimension_numbers<[1], [0], [0], [1], [0, 0, 1, 1], [], []>} : vector<8x5xbf16>, vector<5x4xbf16>, vector<8x4xf32> -> vector<8x4xf32>
    %210 = tpu.concatenate %158, %175, %192, %209 in 1 : vector<8x4xf32>, vector<8x4xf32>, vector<8x4xf32>, vector<8x4xf32> -> vector<8x16xf32>
    %211 = arith.truncf %210 : vector<8x16xf32> to vector<8x16xbf16>
    %cst_86 = arith.constant dense<0.000000e+00> : vector<8x32xf32>
    %212 = tpu.matmul %211, %125, %cst_86 {dimension_numbers = #tpu.dot_dimension_numbers<[1], [0], [0], [1], [0, 0, 1, 1], [], []>} : vector<8x16xbf16>, vector<16x32xbf16>, vector<8x32xf32> -> vector<8x32xf32>
    %213 = vector.broadcast %126 : vector<1x32xf32> to vector<8x32xf32>
    %214 = arith.addf %212, %213 : vector<8x32xf32>
    %215 = arith.addf %118, %214 : vector<8x32xf32>
    %cst_87 = arith.constant dense<0.000000e+00> : vector<8xf32>
    %216 = vector.multi_reduction <add>, %215, %cst_87 [1] : vector<8x32xf32> to vector<8xf32>
    %217 = vector.shape_cast %216 : vector<8xf32> to vector<8x1xf32>
    %cst_88 = arith.constant 3.200000e+01 : f32
    %218 = vector.broadcast %cst_88 : f32 to vector<8x1xf32>
    %219 = arith.divf %217, %218 : vector<8x1xf32>
    %220 = vector.broadcast %219 : vector<8x1xf32> to vector<8x32xf32>
    %221 = arith.subf %215, %220 : vector<8x32xf32>
    %222 = arith.mulf %221, %221 : vector<8x32xf32>
    %cst_89 = arith.constant dense<0.000000e+00> : vector<8xf32>
    %223 = vector.multi_reduction <add>, %222, %cst_89 [1] : vector<8x32xf32> to vector<8xf32>
    %224 = vector.shape_cast %223 : vector<8xf32> to vector<8x1xf32>
    %cst_90 = arith.constant 3.200000e+01 : f32
    %225 = vector.broadcast %cst_90 : f32 to vector<8x1xf32>
    %226 = arith.divf %224, %225 : vector<8x1xf32>
    %227 = vector.broadcast %219 : vector<8x1xf32> to vector<8x32xf32>
    %228 = arith.subf %215, %227 : vector<8x32xf32>
    %cst_91 = arith.constant 9.99999974E-6 : f32
    %229 = vector.broadcast %cst_91 : f32 to vector<8x1xf32>
    %230 = arith.addf %226, %229 : vector<8x1xf32>
    %231 = math.rsqrt %230 : vector<8x1xf32>
    %232 = vector.broadcast %231 : vector<8x1xf32> to vector<8x32xf32>
    %233 = arith.mulf %228, %232 : vector<8x32xf32>
    %234 = vector.broadcast %127 : vector<1x32xf32> to vector<8x32xf32>
    %235 = arith.mulf %233, %234 : vector<8x32xf32>
    %236 = vector.broadcast %128 : vector<1x32xf32> to vector<8x32xf32>
    %237 = arith.addf %235, %236 : vector<8x32xf32>
    %c0_92 = arith.constant 0 : index
    %c0_93 = arith.constant 0 : index
    %c0_94 = arith.constant 0 : index
    %238 = vector.load %arg2[%c0_92, %c0_93, %c0_94] : memref<1x10x32xf32, #tpu.memory_space<vmem>>, vector<1x10x32xf32>
    %239 = vector.shape_cast %238 : vector<1x10x32xf32> to vector<10x32xf32>
    %c0_95 = arith.constant 0 : index
    %c0_96 = arith.constant 0 : index
    %240 = vector.load %arg20[%c0_95, %c0_96] : memref<32x32xbf16, #tpu.memory_space<vmem>>, vector<32x32xbf16>
    %c0_97 = arith.constant 0 : index
    %c0_98 = arith.constant 0 : index
    %241 = vector.load %arg21[%c0_97, %c0_98] : memref<1x32xf32, #tpu.memory_space<vmem>>, vector<1x32xf32>
    %c0_99 = arith.constant 0 : index
    %c0_100 = arith.constant 0 : index
    %242 = vector.load %arg22[%c0_99, %c0_100] : memref<32x64xbf16, #tpu.memory_space<vmem>>, vector<32x64xbf16>
    %c0_101 = arith.constant 0 : index
    %c0_102 = arith.constant 0 : index
    %243 = vector.load %arg23[%c0_101, %c0_102] : memref<1x64xf32, #tpu.memory_space<vmem>>, vector<1x64xf32>
    %c0_103 = arith.constant 0 : index
    %c0_104 = arith.constant 0 : index
    %244 = vector.load %arg24[%c0_103, %c0_104] : memref<32x32xbf16, #tpu.memory_space<vmem>>, vector<32x32xbf16>
    %c0_105 = arith.constant 0 : index
    %c0_106 = arith.constant 0 : index
    %245 = vector.load %arg25[%c0_105, %c0_106] : memref<1x32xf32, #tpu.memory_space<vmem>>, vector<1x32xf32>
    %c0_107 = arith.constant 0 : index
    %c0_108 = arith.constant 0 : index
    %246 = vector.load %arg26[%c0_107, %c0_108] : memref<1x32xf32, #tpu.memory_space<vmem>>, vector<1x32xf32>
    %c0_109 = arith.constant 0 : index
    %c0_110 = arith.constant 0 : index
    %247 = vector.load %arg27[%c0_109, %c0_110] : memref<1x32xf32, #tpu.memory_space<vmem>>, vector<1x32xf32>
    %248 = arith.truncf %237 : vector<8x32xf32> to vector<8x32xbf16>
    %cst_111 = arith.constant dense<0.000000e+00> : vector<8x32xf32>
    %249 = tpu.matmul %248, %240, %cst_111 {dimension_numbers = #tpu.dot_dimension_numbers<[1], [0], [0], [1], [0, 0, 1, 1], [], []>} : vector<8x32xbf16>, vector<32x32xbf16>, vector<8x32xf32> -> vector<8x32xf32>
    %250 = vector.broadcast %241 : vector<1x32xf32> to vector<8x32xf32>
    %251 = arith.addf %249, %250 : vector<8x32xf32>
    %252 = arith.truncf %239 : vector<10x32xf32> to vector<10x32xbf16>
    %cst_112 = arith.constant dense<0.000000e+00> : vector<10x64xf32>
    %253 = tpu.matmul %252, %242, %cst_112 {dimension_numbers = #tpu.dot_dimension_numbers<[1], [0], [0], [1], [0, 0, 1, 1], [], []>} : vector<10x32xbf16>, vector<32x64xbf16>, vector<10x64xf32> -> vector<10x64xf32>
    %254 = vector.broadcast %243 : vector<1x64xf32> to vector<10x64xf32>
    %255 = arith.addf %253, %254 : vector<10x64xf32>
    %256 = arith.truncf %251 : vector<8x32xf32> to vector<8x32xbf16>
    %257 = vector.extract_strided_slice %255 {offsets = [0, 0], sizes = [10, 32], strides = [1, 1]} : vector<10x64xf32> to vector<10x32xf32>
    %258 = arith.truncf %257 : vector<10x32xf32> to vector<10x32xbf16>
    %259 = vector.extract_strided_slice %255 {offsets = [0, 32], sizes = [10, 32], strides = [1, 1]} : vector<10x64xf32> to vector<10x32xf32>
    %260 = arith.truncf %259 : vector<10x32xf32> to vector<10x32xbf16>
    %261 = vector.extract_strided_slice %256 {offsets = [0, 0], sizes = [8, 8], strides = [1, 1]} : vector<8x32xbf16> to vector<8x8xbf16>
    %262 = vector.extract_strided_slice %258 {offsets = [0, 0], sizes = [10, 8], strides = [1, 1]} : vector<10x32xbf16> to vector<10x8xbf16>
    "tpu.trace_start"() <{level = 10 : i32, message = "td,sd->ts"}> : () -> ()
    %cst_113 = arith.constant dense<0.000000e+00> : vector<8x10xf32>
    %263 = tpu.matmul %261, %262, %cst_113 {dimension_numbers = #tpu.dot_dimension_numbers<[1], [1], [0], [0], [0, 0, 1, 0], [], []>} : vector<8x8xbf16>, vector<10x8xbf16>, vector<8x10xf32> -> vector<8x10xf32>
    "tpu.trace_stop"() : () -> ()
    %cst_114 = arith.constant 0.353553385 : f32
    %264 = vector.broadcast %cst_114 : f32 to vector<8x10xf32>
    %265 = arith.mulf %263, %264 : vector<8x10xf32>
    %cst_115 = arith.constant dense<0xFF800000> : vector<8xf32>
    %266 = vector.multi_reduction <maximumf>, %265, %cst_115 [1] : vector<8x10xf32> to vector<8xf32>
    %267 = vector.shape_cast %266 : vector<8xf32> to vector<8x1xf32>
    %268 = vector.broadcast %267 : vector<8x1xf32> to vector<8x10xf32>
    %269 = arith.subf %265, %268 : vector<8x10xf32>
    %270 = math.exp %269 : vector<8x10xf32>
    %cst_116 = arith.constant dense<0.000000e+00> : vector<8xf32>
    %271 = vector.multi_reduction <add>, %270, %cst_116 [1] : vector<8x10xf32> to vector<8xf32>
    %272 = vector.shape_cast %271 : vector<8xf32> to vector<8x1xf32>
    %273 = vector.broadcast %272 : vector<8x1xf32> to vector<8x10xf32>
    %274 = arith.divf %270, %273 : vector<8x10xf32>
    %275 = arith.truncf %274 : vector<8x10xf32> to vector<8x10xbf16>
    %276 = vector.extract_strided_slice %260 {offsets = [0, 0], sizes = [10, 8], strides = [1, 1]} : vector<10x32xbf16> to vector<10x8xbf16>
    %cst_117 = arith.constant dense<0.000000e+00> : vector<8x8xf32>
    %277 = tpu.matmul %275, %276, %cst_117 {dimension_numbers = #tpu.dot_dimension_numbers<[1], [0], [0], [1], [0, 0, 1, 1], [], []>} : vector<8x10xbf16>, vector<10x8xbf16>, vector<8x8xf32> -> vector<8x8xf32>
    %278 = vector.extract_strided_slice %256 {offsets = [0, 8], sizes = [8, 8], strides = [1, 1]} : vector<8x32xbf16> to vector<8x8xbf16>
    %279 = vector.extract_strided_slice %258 {offsets = [0, 8], sizes = [10, 8], strides = [1, 1]} : vector<10x32xbf16> to vector<10x8xbf16>
    "tpu.trace_start"() <{level = 10 : i32, message = "td,sd->ts"}> : () -> ()
    %cst_118 = arith.constant dense<0.000000e+00> : vector<8x10xf32>
    %280 = tpu.matmul %278, %279, %cst_118 {dimension_numbers = #tpu.dot_dimension_numbers<[1], [1], [0], [0], [0, 0, 1, 0], [], []>} : vector<8x8xbf16>, vector<10x8xbf16>, vector<8x10xf32> -> vector<8x10xf32>
    "tpu.trace_stop"() : () -> ()
    %cst_119 = arith.constant 0.353553385 : f32
    %281 = vector.broadcast %cst_119 : f32 to vector<8x10xf32>
    %282 = arith.mulf %280, %281 : vector<8x10xf32>
    %cst_120 = arith.constant dense<0xFF800000> : vector<8xf32>
    %283 = vector.multi_reduction <maximumf>, %282, %cst_120 [1] : vector<8x10xf32> to vector<8xf32>
    %284 = vector.shape_cast %283 : vector<8xf32> to vector<8x1xf32>
    %285 = vector.broadcast %284 : vector<8x1xf32> to vector<8x10xf32>
    %286 = arith.subf %282, %285 : vector<8x10xf32>
    %287 = math.exp %286 : vector<8x10xf32>
    %cst_121 = arith.constant dense<0.000000e+00> : vector<8xf32>
    %288 = vector.multi_reduction <add>, %287, %cst_121 [1] : vector<8x10xf32> to vector<8xf32>
    %289 = vector.shape_cast %288 : vector<8xf32> to vector<8x1xf32>
    %290 = vector.broadcast %289 : vector<8x1xf32> to vector<8x10xf32>
    %291 = arith.divf %287, %290 : vector<8x10xf32>
    %292 = arith.truncf %291 : vector<8x10xf32> to vector<8x10xbf16>
    %293 = vector.extract_strided_slice %260 {offsets = [0, 8], sizes = [10, 8], strides = [1, 1]} : vector<10x32xbf16> to vector<10x8xbf16>
    %cst_122 = arith.constant dense<0.000000e+00> : vector<8x8xf32>
    %294 = tpu.matmul %292, %293, %cst_122 {dimension_numbers = #tpu.dot_dimension_numbers<[1], [0], [0], [1], [0, 0, 1, 1], [], []>} : vector<8x10xbf16>, vector<10x8xbf16>, vector<8x8xf32> -> vector<8x8xf32>
    %295 = vector.extract_strided_slice %256 {offsets = [0, 16], sizes = [8, 8], strides = [1, 1]} : vector<8x32xbf16> to vector<8x8xbf16>
    %296 = vector.extract_strided_slice %258 {offsets = [0, 16], sizes = [10, 8], strides = [1, 1]} : vector<10x32xbf16> to vector<10x8xbf16>
    "tpu.trace_start"() <{level = 10 : i32, message = "td,sd->ts"}> : () -> ()
    %cst_123 = arith.constant dense<0.000000e+00> : vector<8x10xf32>
    %297 = tpu.matmul %295, %296, %cst_123 {dimension_numbers = #tpu.dot_dimension_numbers<[1], [1], [0], [0], [0, 0, 1, 0], [], []>} : vector<8x8xbf16>, vector<10x8xbf16>, vector<8x10xf32> -> vector<8x10xf32>
    "tpu.trace_stop"() : () -> ()
    %cst_124 = arith.constant 0.353553385 : f32
    %298 = vector.broadcast %cst_124 : f32 to vector<8x10xf32>
    %299 = arith.mulf %297, %298 : vector<8x10xf32>
    %cst_125 = arith.constant dense<0xFF800000> : vector<8xf32>
    %300 = vector.multi_reduction <maximumf>, %299, %cst_125 [1] : vector<8x10xf32> to vector<8xf32>
    %301 = vector.shape_cast %300 : vector<8xf32> to vector<8x1xf32>
    %302 = vector.broadcast %301 : vector<8x1xf32> to vector<8x10xf32>
    %303 = arith.subf %299, %302 : vector<8x10xf32>
    %304 = math.exp %303 : vector<8x10xf32>
    %cst_126 = arith.constant dense<0.000000e+00> : vector<8xf32>
    %305 = vector.multi_reduction <add>, %304, %cst_126 [1] : vector<8x10xf32> to vector<8xf32>
    %306 = vector.shape_cast %305 : vector<8xf32> to vector<8x1xf32>
    %307 = vector.broadcast %306 : vector<8x1xf32> to vector<8x10xf32>
    %308 = arith.divf %304, %307 : vector<8x10xf32>
    %309 = arith.truncf %308 : vector<8x10xf32> to vector<8x10xbf16>
    %310 = vector.extract_strided_slice %260 {offsets = [0, 16], sizes = [10, 8], strides = [1, 1]} : vector<10x32xbf16> to vector<10x8xbf16>
    %cst_127 = arith.constant dense<0.000000e+00> : vector<8x8xf32>
    %311 = tpu.matmul %309, %310, %cst_127 {dimension_numbers = #tpu.dot_dimension_numbers<[1], [0], [0], [1], [0, 0, 1, 1], [], []>} : vector<8x10xbf16>, vector<10x8xbf16>, vector<8x8xf32> -> vector<8x8xf32>
    %312 = vector.extract_strided_slice %256 {offsets = [0, 24], sizes = [8, 8], strides = [1, 1]} : vector<8x32xbf16> to vector<8x8xbf16>
    %313 = vector.extract_strided_slice %258 {offsets = [0, 24], sizes = [10, 8], strides = [1, 1]} : vector<10x32xbf16> to vector<10x8xbf16>
    "tpu.trace_start"() <{level = 10 : i32, message = "td,sd->ts"}> : () -> ()
    %cst_128 = arith.constant dense<0.000000e+00> : vector<8x10xf32>
    %314 = tpu.matmul %312, %313, %cst_128 {dimension_numbers = #tpu.dot_dimension_numbers<[1], [1], [0], [0], [0, 0, 1, 0], [], []>} : vector<8x8xbf16>, vector<10x8xbf16>, vector<8x10xf32> -> vector<8x10xf32>
    "tpu.trace_stop"() : () -> ()
    %cst_129 = arith.constant 0.353553385 : f32
    %315 = vector.broadcast %cst_129 : f32 to vector<8x10xf32>
    %316 = arith.mulf %314, %315 : vector<8x10xf32>
    %cst_130 = arith.constant dense<0xFF800000> : vector<8xf32>
    %317 = vector.multi_reduction <maximumf>, %316, %cst_130 [1] : vector<8x10xf32> to vector<8xf32>
    %318 = vector.shape_cast %317 : vector<8xf32> to vector<8x1xf32>
    %319 = vector.broadcast %318 : vector<8x1xf32> to vector<8x10xf32>
    %320 = arith.subf %316, %319 : vector<8x10xf32>
    %321 = math.exp %320 : vector<8x10xf32>
    %cst_131 = arith.constant dense<0.000000e+00> : vector<8xf32>
    %322 = vector.multi_reduction <add>, %321, %cst_131 [1] : vector<8x10xf32> to vector<8xf32>
    %323 = vector.shape_cast %322 : vector<8xf32> to vector<8x1xf32>
    %324 = vector.broadcast %323 : vector<8x1xf32> to vector<8x10xf32>
    %325 = arith.divf %321, %324 : vector<8x10xf32>
    %326 = arith.truncf %325 : vector<8x10xf32> to vector<8x10xbf16>
    %327 = vector.extract_strided_slice %260 {offsets = [0, 24], sizes = [10, 8], strides = [1, 1]} : vector<10x32xbf16> to vector<10x8xbf16>
    %cst_132 = arith.constant dense<0.000000e+00> : vector<8x8xf32>
    %328 = tpu.matmul %326, %327, %cst_132 {dimension_numbers = #tpu.dot_dimension_numbers<[1], [0], [0], [1], [0, 0, 1, 1], [], []>} : vector<8x10xbf16>, vector<10x8xbf16>, vector<8x8xf32> -> vector<8x8xf32>
    %329 = tpu.concatenate %277, %294, %311, %328 in 1 : vector<8x8xf32>, vector<8x8xf32>, vector<8x8xf32>, vector<8x8xf32> -> vector<8x32xf32>
    %330 = arith.truncf %329 : vector<8x32xf32> to vector<8x32xbf16>
    %cst_133 = arith.constant dense<0.000000e+00> : vector<8x32xf32>
    %331 = tpu.matmul %330, %244, %cst_133 {dimension_numbers = #tpu.dot_dimension_numbers<[1], [0], [0], [1], [0, 0, 1, 1], [], []>} : vector<8x32xbf16>, vector<32x32xbf16>, vector<8x32xf32> -> vector<8x32xf32>
    %332 = vector.broadcast %245 : vector<1x32xf32> to vector<8x32xf32>
    %333 = arith.addf %331, %332 : vector<8x32xf32>
    %334 = arith.addf %237, %333 : vector<8x32xf32>
    %cst_134 = arith.constant dense<0.000000e+00> : vector<8xf32>
    %335 = vector.multi_reduction <add>, %334, %cst_134 [1] : vector<8x32xf32> to vector<8xf32>
    %336 = vector.shape_cast %335 : vector<8xf32> to vector<8x1xf32>
    %cst_135 = arith.constant 3.200000e+01 : f32
    %337 = vector.broadcast %cst_135 : f32 to vector<8x1xf32>
    %338 = arith.divf %336, %337 : vector<8x1xf32>
    %339 = vector.broadcast %338 : vector<8x1xf32> to vector<8x32xf32>
    %340 = arith.subf %334, %339 : vector<8x32xf32>
    %341 = arith.mulf %340, %340 : vector<8x32xf32>
    %cst_136 = arith.constant dense<0.000000e+00> : vector<8xf32>
    %342 = vector.multi_reduction <add>, %341, %cst_136 [1] : vector<8x32xf32> to vector<8xf32>
    %343 = vector.shape_cast %342 : vector<8xf32> to vector<8x1xf32>
    %cst_137 = arith.constant 3.200000e+01 : f32
    %344 = vector.broadcast %cst_137 : f32 to vector<8x1xf32>
    %345 = arith.divf %343, %344 : vector<8x1xf32>
    %346 = vector.broadcast %338 : vector<8x1xf32> to vector<8x32xf32>
    %347 = arith.subf %334, %346 : vector<8x32xf32>
    %cst_138 = arith.constant 9.99999974E-6 : f32
    %348 = vector.broadcast %cst_138 : f32 to vector<8x1xf32>
    %349 = arith.addf %345, %348 : vector<8x1xf32>
    %350 = math.rsqrt %349 : vector<8x1xf32>
    %351 = vector.broadcast %350 : vector<8x1xf32> to vector<8x32xf32>
    %352 = arith.mulf %347, %351 : vector<8x32xf32>
    %353 = vector.broadcast %246 : vector<1x32xf32> to vector<8x32xf32>
    %354 = arith.mulf %352, %353 : vector<8x32xf32>
    %355 = vector.broadcast %247 : vector<1x32xf32> to vector<8x32xf32>
    %356 = arith.addf %354, %355 : vector<8x32xf32>
    %c0_139 = arith.constant 0 : index
    %c0_140 = arith.constant 0 : index
    %357 = vector.load %arg28[%c0_139, %c0_140] : memref<32x64xbf16, #tpu.memory_space<vmem>>, vector<32x64xbf16>
    %c0_141 = arith.constant 0 : index
    %c0_142 = arith.constant 0 : index
    %358 = vector.load %arg29[%c0_141, %c0_142] : memref<1x64xf32, #tpu.memory_space<vmem>>, vector<1x64xf32>
    %c0_143 = arith.constant 0 : index
    %c0_144 = arith.constant 0 : index
    %359 = vector.load %arg30[%c0_143, %c0_144] : memref<64x32xbf16, #tpu.memory_space<vmem>>, vector<64x32xbf16>
    %c0_145 = arith.constant 0 : index
    %c0_146 = arith.constant 0 : index
    %360 = vector.load %arg31[%c0_145, %c0_146] : memref<1x32xf32, #tpu.memory_space<vmem>>, vector<1x32xf32>
    %c0_147 = arith.constant 0 : index
    %c0_148 = arith.constant 0 : index
    %361 = vector.load %arg32[%c0_147, %c0_148] : memref<1x32xf32, #tpu.memory_space<vmem>>, vector<1x32xf32>
    %c0_149 = arith.constant 0 : index
    %c0_150 = arith.constant 0 : index
    %362 = vector.load %arg33[%c0_149, %c0_150] : memref<1x32xf32, #tpu.memory_space<vmem>>, vector<1x32xf32>
    %363 = arith.truncf %356 : vector<8x32xf32> to vector<8x32xbf16>
    %cst_151 = arith.constant dense<0.000000e+00> : vector<8x64xf32>
    %364 = tpu.matmul %363, %357, %cst_151 {dimension_numbers = #tpu.dot_dimension_numbers<[1], [0], [0], [1], [0, 0, 1, 1], [], []>} : vector<8x32xbf16>, vector<32x64xbf16>, vector<8x64xf32> -> vector<8x64xf32>
    %365 = vector.broadcast %358 : vector<1x64xf32> to vector<8x64xf32>
    %366 = arith.addf %364, %365 : vector<8x64xf32>
    %cst_152 = arith.constant 0.000000e+00 : f32
    %367 = vector.broadcast %cst_152 : f32 to vector<8x64xf32>
    %368 = arith.maximumf %366, %367 : vector<8x64xf32>
    %369 = arith.truncf %368 : vector<8x64xf32> to vector<8x64xbf16>
    %cst_153 = arith.constant dense<0.000000e+00> : vector<8x32xf32>
    %370 = tpu.matmul %369, %359, %cst_153 {dimension_numbers = #tpu.dot_dimension_numbers<[1], [0], [0], [1], [0, 0, 1, 1], [], []>} : vector<8x64xbf16>, vector<64x32xbf16>, vector<8x32xf32> -> vector<8x32xf32>
    %371 = vector.broadcast %360 : vector<1x32xf32> to vector<8x32xf32>
    %372 = arith.addf %370, %371 : vector<8x32xf32>
    %373 = arith.addf %356, %372 : vector<8x32xf32>
    %cst_154 = arith.constant dense<0.000000e+00> : vector<8xf32>
    %374 = vector.multi_reduction <add>, %373, %cst_154 [1] : vector<8x32xf32> to vector<8xf32>
    %375 = vector.shape_cast %374 : vector<8xf32> to vector<8x1xf32>
    %cst_155 = arith.constant 3.200000e+01 : f32
    %376 = vector.broadcast %cst_155 : f32 to vector<8x1xf32>
    %377 = arith.divf %375, %376 : vector<8x1xf32>
    %378 = vector.broadcast %377 : vector<8x1xf32> to vector<8x32xf32>
    %379 = arith.subf %373, %378 : vector<8x32xf32>
    %380 = arith.mulf %379, %379 : vector<8x32xf32>
    %cst_156 = arith.constant dense<0.000000e+00> : vector<8xf32>
    %381 = vector.multi_reduction <add>, %380, %cst_156 [1] : vector<8x32xf32> to vector<8xf32>
    %382 = vector.shape_cast %381 : vector<8xf32> to vector<8x1xf32>
    %cst_157 = arith.constant 3.200000e+01 : f32
    %383 = vector.broadcast %cst_157 : f32 to vector<8x1xf32>
    %384 = arith.divf %382, %383 : vector<8x1xf32>
    %385 = vector.broadcast %377 : vector<8x1xf32> to vector<8x32xf32>
    %386 = arith.subf %373, %385 : vector<8x32xf32>
    %cst_158 = arith.constant 9.99999974E-6 : f32
    %387 = vector.broadcast %cst_158 : f32 to vector<8x1xf32>
    %388 = arith.addf %384, %387 : vector<8x1xf32>
    %389 = math.rsqrt %388 : vector<8x1xf32>
    %390 = vector.broadcast %389 : vector<8x1xf32> to vector<8x32xf32>
    %391 = arith.mulf %386, %390 : vector<8x32xf32>
    %392 = vector.broadcast %361 : vector<1x32xf32> to vector<8x32xf32>
    %393 = arith.mulf %391, %392 : vector<8x32xf32>
    %394 = vector.broadcast %362 : vector<1x32xf32> to vector<8x32xf32>
    %395 = arith.addf %393, %394 : vector<8x32xf32>
    %c0_159 = arith.constant 0 : index
    %c0_160 = arith.constant 0 : index
    %c0_161 = arith.constant 0 : index
    %396 = vector.load %arg34[%c0_159, %c0_160, %c0_161] : memref<1x8x32xf32, #tpu.memory_space<vmem>>, vector<1x8x32xf32>
    %397 = vector.shape_cast %396 : vector<1x8x32xf32> to vector<8x32xf32>
    %398 = vector.shape_cast %395 : vector<8x32xf32> to vector<1x8x32xf32>
    tpu.vector_store %arg34[%c0_159, %c0_160, %c0_161], %398 {strides = array<i32>} : memref<1x8x32xf32, #tpu.memory_space<vmem>>, vector<1x8x32xf32>,
    return
  }
  func.func @transform_0(%arg0: i32) -> (i32, i32, i32) {
    %c0_i32 = arith.constant 0 : i32
    %c0_i32_0 = arith.constant 0 : i32
    %c0_i32_1 = arith.constant 0 : i32
    return %arg0, %c0_i32, %c0_i32_0 : i32, i32, i32
  }
  func.func @transform_1(%arg0: i32) -> (i32, i32, i32) {
    %c0_i32 = arith.constant 0 : i32
    %c0_i32_0 = arith.constant 0 : i32
    %c0_i32_1 = arith.constant 0 : i32
    return %arg0, %c0_i32, %c0_i32_0 : i32, i32, i32
  }
  func.func @transform_2(%arg0: i32) -> (i32, i32, i32) {
    %c0_i32 = arith.constant 0 : i32
    %c0_i32_0 = arith.constant 0 : i32
    %c0_i32_1 = arith.constant 0 : i32
    return %arg0, %c0_i32, %c0_i32_0 : i32, i32, i32
  }
  func.func @transform_3(%arg0: i32) -> (i32, i32) {
    %c0_i32 = arith.constant 0 : i32
    %c0_i32_0 = arith.constant 0 : i32
    %c0_i32_1 = arith.constant 0 : i32
    return %c0_i32, %c0_i32_0 : i32, i32
  }
  func.func @transform_4(%arg0: i32) -> (i32, i32) {
    %c0_i32 = arith.constant 0 : i32
    %c0_i32_0 = arith.constant 0 : i32
    %c0_i32_1 = arith.constant 0 : i32
    return %c0_i32, %c0_i32_0 : i32, i32
  }
  func.func @transform_5(%arg0: i32) -> (i32, i32) {
    %c0_i32 = arith.constant 0 : i32
    %c0_i32_0 = arith.constant 0 : i32
    %c0_i32_1 = arith.constant 0 : i32
    return %c0_i32, %c0_i32_0 : i32, i32
  }
  func.func @transform_6(%arg0: i32) -> (i32, i32) {
    %c0_i32 = arith.constant 0 : i32
    %c0_i32_0 = arith.constant 0 : i32
    %c0_i32_1 = arith.constant 0 : i32
    return %c0_i32, %c0_i32_0 : i32, i32
  }
  func.func @transform_7(%arg0: i32) -> (i32, i32) {
    %c0_i32 = arith.constant 0 : i32
    %c0_i32_0 = arith.constant 0 : i32
    %c0_i32_1 = arith.constant 0 : i32
    return %c0_i32, %c0_i32_0 : i32, i32
  }
  func.func @transform_8(%arg0: i32) -> (i32, i32) {
    %c0_i32 = arith.constant 0 : i32
    %c0_i32_0 = arith.constant 0 : i32
    %c0_i32_1 = arith.constant 0 : i32
    return %c0_i32, %c0_i32_0 : i32, i32
  }
  func.func @transform_9(%arg0: i32) -> (i32, i32) {
    %c0_i32 = arith.constant 0 : i32
    %c0_i32_0 = arith.constant 0 : i32
    %c0_i32_1 = arith.constant 0 : i32
    return %c0_i32, %c0_i32_0 : i32, i32
  }
  func.func @transform_10(%arg0: i32) -> (i32, i32) {
    %c0_i32 = arith.constant 0 : i32
    %c0_i32_0 = arith.constant 0 : i32
    %c0_i32_1 = arith.constant 0 : i32
    return %c0_i32, %c0_i32_0 : i32, i32
  }
  func.func @transform_11(%arg0: i32) -> (i32, i32) {
    %c0_i32 = arith.constant 0 : i32
    %c0_i32_0 = arith.constant 0 : i32
    %c0_i32_1 = arith.constant 0 : i32
    return %c0_i32, %c0_i32_0 : i32, i32
  }
  func.func @transform_12(%arg0: i32) -> (i32, i32) {
    %c0_i32 = arith.constant 0 : i32
    %c0_i32_0 = arith.constant 0 : i32
    %c0_i32_1 = arith.constant 0 : i32
    return %c0_i32, %c0_i32_0 : i32, i32
  }
  func.func @transform_13(%arg0: i32) -> (i32, i32) {
    %c0_i32 = arith.constant 0 : i32
    %c0_i32_0 = arith.constant 0 : i32
    %c0_i32_1 = arith.constant 0 : i32
    return %c0_i32, %c0_i32_0 : i32, i32
  }
  func.func @transform_14(%arg0: i32) -> (i32, i32) {
    %c0_i32 = arith.constant 0 : i32
    %c0_i32_0 = arith.constant 0 : i32
    %c0_i32_1 = arith.constant 0 : i32
    return %c0_i32, %c0_i32_0 : i32, i32
  }
  func.func @transform_15(%arg0: i32) -> (i32, i32) {
    %c0_i32 = arith.constant 0 : i32
    %c0_i32_0 = arith.constant 0 : i32
    %c0_i32_1 = arith.constant 0 : i32
    return %c0_i32, %c0_i32_0 : i32, i32
  }
  func.func @transform_16(%arg0: i32) -> (i32, i32) {
    %c0_i32 = arith.constant 0 : i32
    %c0_i32_0 = arith.constant 0 : i32
    %c0_i32_1 = arith.constant 0 : i32
    return %c0_i32, %c0_i32_0 : i32, i32
  }
  func.func @transform_17(%arg0: i32) -> (i32, i32) {
    %c0_i32 = arith.constant 0 : i32
    %c0_i32_0 = arith.constant 0 : i32
    %c0_i32_1 = arith.constant 0 : i32
    return %c0_i32, %c0_i32_0 : i32, i32
  }
  func.func @transform_18(%arg0: i32) -> (i32, i32) {
    %c0_i32 = arith.constant 0 : i32
    %c0_i32_0 = arith.constant 0 : i32
    %c0_i32_1 = arith.constant 0 : i32
    return %c0_i32, %c0_i32_0 : i32, i32
  }
  func.func @transform_19(%arg0: i32) -> (i32, i32) {
    %c0_i32 = arith.constant 0 : i32
    %c0_i32_0 = arith.constant 0 : i32
    %c0_i32_1 = arith.constant 0 : i32
    return %c0_i32, %c0_i32_0 : i32, i32
  }
  func.func @transform_20(%arg0: i32) -> (i32, i32) {
    %c0_i32 = arith.constant 0 : i32
    %c0_i32_0 = arith.constant 0 : i32
    %c0_i32_1 = arith.constant 0 : i32
    return %c0_i32, %c0_i32_0 : i32, i32
  }
  func.func @transform_21(%arg0: i32) -> (i32, i32) {
    %c0_i32 = arith.constant 0 : i32
    %c0_i32_0 = arith.constant 0 : i32
    %c0_i32_1 = arith.constant 0 : i32
    return %c0_i32, %c0_i32_0 : i32, i32
  }
  func.func @transform_22(%arg0: i32) -> (i32, i32) {
    %c0_i32 = arith.constant 0 : i32
    %c0_i32_0 = arith.constant 0 : i32
    %c0_i32_1 = arith.constant 0 : i32
    return %c0_i32, %c0_i32_0 : i32, i32
  }
  func.func @transform_23(%arg0: i32) -> (i32, i32) {
    %c0_i32 = arith.constant 0 : i32
    %c0_i32_0 = arith.constant 0 : i32
    %c0_i32_1 = arith.constant 0 : i32
    return %c0_i32, %c0_i32_0 : i32, i32
  }
  func.func @transform_24(%arg0: i32) -> (i32, i32) {
    %c0_i32 = arith.constant 0 : i32
    %c0_i32_0 = arith.constant 0 : i32
    %c0_i32_1 = arith.constant 0 : i32
    return %c0_i32, %c0_i32_0 : i32, i32
  }
  func.func @transform_25(%arg0: i32) -> (i32, i32) {
    %c0_i32 = arith.constant 0 : i32
    %c0_i32_0 = arith.constant 0 : i32
    %c0_i32_1 = arith.constant 0 : i32
    return %c0_i32, %c0_i32_0 : i32, i32
  }
  func.func @transform_26(%arg0: i32) -> (i32, i32) {
    %c0_i32 = arith.constant 0 : i32
    %c0_i32_0 = arith.constant 0 : i32
    %c0_i32_1 = arith.constant 0 : i32
    return %c0_i32, %c0_i32_0 : i32, i32
  }
  func.func @transform_27(%arg0: i32) -> (i32, i32) {
    %c0_i32 = arith.constant 0 : i32
    %c0_i32_0 = arith.constant 0 : i32
    %c0_i32_1 = arith.constant 0 : i32
    return %c0_i32, %c0_i32_0 : i32, i32
  }
  func.func @transform_28(%arg0: i32) -> (i32, i32) {
    %c0_i32 = arith.constant 0 : i32
    %c0_i32_0 = arith.constant 0 : i32
    %c0_i32_1 = arith.constant 0 : i32
    return %c0_i32, %c0_i32_0 : i32, i32
  }
  func.func @transform_29(%arg0: i32) -> (i32, i32) {
    %c0_i32 = arith.constant 0 : i32
    %c0_i32_0 = arith.constant 0 : i32
    %c0_i32_1 = arith.constant 0 : i32
    return %c0_i32, %c0_i32_0 : i32, i32
  }
  func.func @transform_30(%arg0: i32) -> (i32, i32) {
    %c0_i32 = arith.constant 0 : i32
    %c0_i32_0 = arith.constant 0 : i32
    %c0_i32_1 = arith.constant 0 : i32
    return %c0_i32, %c0_i32_0 : i32, i32
  }
  func.func @transform_31(%arg0: i32) -> (i32, i32) {
    %c0_i32 = arith.constant 0 : i32
    %c0_i32_0 = arith.constant 0 : i32
    %c0_i32_1 = arith.constant 0 : i32
    return %c0_i32, %c0_i32_0 : i32, i32
  }
  func.func @transform_32(%arg0: i32) -> (i32, i32) {
    %c0_i32 = arith.constant 0 : i32
    %c0_i32_0 = arith.constant 0 : i32
    %c0_i32_1 = arith.constant 0 : i32
    return %c0_i32, %c0_i32_0 : i32, i32
  }
  func.func @transform_33(%arg0: i32) -> (i32, i32, i32) {
    %c0_i32 = arith.constant 0 : i32
    %c0_i32_0 = arith.constant 0 : i32
    %c0_i32_1 = arith.constant 0 : i32
    return %arg0, %c0_i32, %c0_i32_0 : i32, i32, i32
  }
}

</mosaic_0001>

<llo_original>
// kernel: tpu_custom_call.1
$region0: #{tpu_custom_call.1}
  #allocation0 [shape = 'u32[]', space=smem, size = 0x4, offset = 0x4, fixed_abs, tag = 'smem constant byte address 0x4 - core index']
  #allocation1 [shape = 'u32[144,128]{1,0:T(1,128)}', space=vmem, size = 0x12000, scoped, tag = 'internal scratch']
  %s0 = inlined_call_operand.smem [shape: u32[34], index: -1, kind: input, shape index: {}]
  %s1 = sld [smem:[%s0]]
  %s2 = scalar_lea.smem %s0, 1
  %s3 = sld [smem:[%s2]]
  %s4 = scalar_lea.smem %s0, 2
  %s5 = sld [smem:[%s4]]
  %s6 = scalar_lea.smem %s0, 3
  %s7 = sld [smem:[%s6]]
  %s8 = scalar_lea.smem %s0, 4
  %s9 = sld [smem:[%s8]]
  %s10 = scalar_lea.smem %s0, 5
  %s11 = sld [smem:[%s10]]
  %s12 = scalar_lea.smem %s0, 6
  %s13 = sld [smem:[%s12]]
  %s14 = scalar_lea.smem %s0, 7
  %s15 = sld [smem:[%s14]]
  %s16 = scalar_lea.smem %s0, 8
  %s17 = sld [smem:[%s16]]
  %s18 = scalar_lea.smem %s0, 9
  %s19 = sld [smem:[%s18]]
  %s20 = scalar_lea.smem %s0, 10
  %s21 = sld [smem:[%s20]]
  %s22 = scalar_lea.smem %s0, 11
  %s23 = sld [smem:[%s22]]
  %s24 = scalar_lea.smem %s0, 12
  %s25 = sld [smem:[%s24]]
  %s26 = scalar_lea.smem %s0, 13
  %s27 = sld [smem:[%s26]]
  %s28 = scalar_lea.smem %s0, 14
  %s29 = sld [smem:[%s28]]
  %s30 = scalar_lea.smem %s0, 15
  %s31 = sld [smem:[%s30]]
  %s32 = scalar_lea.smem %s0, 16
  %s33 = sld [smem:[%s32]]
  %s34 = scalar_lea.smem %s0, 17
  %s35 = sld [smem:[%s34]]
  %s36 = scalar_lea.smem %s0, 18
  %s37 = sld [smem:[%s36]]
  %s38 = scalar_lea.smem %s0, 19
  %s39 = sld [smem:[%s38]]
  %s40 = scalar_lea.smem %s0, 20
  %s41 = sld [smem:[%s40]]
  %s42 = scalar_lea.smem %s0, 21
  %s43 = sld [smem:[%s42]]
  %s44 = scalar_lea.smem %s0, 22
  %s45 = sld [smem:[%s44]]
  %s46 = scalar_lea.smem %s0, 23
  %s47 = sld [smem:[%s46]]
  %s48 = scalar_lea.smem %s0, 24
  %s49 = sld [smem:[%s48]]
  %s50 = scalar_lea.smem %s0, 25
  %s51 = sld [smem:[%s50]]
  %s52 = scalar_lea.smem %s0, 26
  %s53 = sld [smem:[%s52]]
  %s54 = scalar_lea.smem %s0, 27
  %s55 = sld [smem:[%s54]]
  %s56 = scalar_lea.smem %s0, 28
  %s57 = sld [smem:[%s56]]
  %s58 = scalar_lea.smem %s0, 29
  %s59 = sld [smem:[%s58]]
  %s60 = scalar_lea.smem %s0, 30
  %s61 = sld [smem:[%s60]]
  %s62 = scalar_lea.smem %s0, 31
  %s63 = sld [smem:[%s62]]
  %s64 = scalar_lea.smem %s0, 32
  %s65 = sld [smem:[%s64]]
  %s66 = scalar_lea.smem %s0, 33
  %s67 = sld [smem:[%s66]]
  %s68 = sld [smem:[#allocation0]]
  $region189: #{tpu_custom_call.1} parent=0
    _
  %s70 = ssub.s32 1, %s68
  %s71 = scalar_select 0, %s70, %s68
  $region1: #{tpu_custom_call.1} parent=0
    #allocation2 [shape = 'u8[512]{0}', space=vmem, size = 0x400, scoped, tag = 'input window, operand 4, single buffered']
    #allocation3 [shape = 's32[2]{0}', space=sflag, size = 0x8, scoped, tag = 'scoped memory for tpu_custom_call.1']
    #allocation4 [shape = 's32[2]{0}', space=sflag, size = 0x8, scoped, tag = 'scoped memory for tpu_custom_call.1']
    #allocation5 [shape = 'u8[512]{0}', space=vmem, size = 0x400, scoped, tag = 'input window, operand 6, single buffered']
    #allocation6 [shape = 's32[1]{0}', space=sflag, size = 0x4, scoped, tag = 'scoped memory for tpu_custom_call.1']
    #allocation7 [shape = 'u8[512]{0}', space=vmem, size = 0x400, scoped, tag = 'input window, operand 8, single buffered']
    #allocation8 [shape = 'u8[512]{0}', space=vmem, size = 0x400, scoped, tag = 'input window, operand 10, single buffered']
    #allocation9 [shape = 's32[1]{0}', space=sflag, size = 0x4, scoped, tag = 'scoped memory for tpu_custom_call.1']
    #allocation10 [shape = 'u8[512]{0}', space=vmem, size = 0x400, scoped, tag = 'input window, operand 12, single buffered']
    #allocation11 [shape = 'u8[4096]{0}', space=vmem, size = 0x1000, scoped, tag = 'input window, operand 15, single buffered']
    #allocation12 [shape = 's32[1]{0}', space=sflag, size = 0x4, scoped, tag = 'scoped memory for tpu_custom_call.1']
    #allocation13 [shape = 'u8[8192]{0}', space=vmem, size = 0x2000, scoped, tag = 'output window, operand 0']
    %72 = vsyncpa [#allocation3], 0
    %73 = vsyncpa [#allocation6], 0
    %74 = vsyncpa [#allocation9], 0
    %75 = vsyncpa [#allocation12], 0
    %76 = vsyncpa [#allocation4], 0
    %s77 = scalar_lea.sflag [#allocation4], 1
    %78 = vsyncpa %s77, 0
    loop: start=0, step=1, limit=4
    $region2: #{tpu_custom_call.1} parent=1 // loop_pre_header
      _
    $region3: #{tpu_custom_call.1} parent=1 // loop_header
      %s80 = sphi 0, %s84
      %p81 = scmp.ge.s32.totalorder %s80, 4
      %s90 = sphi 0, %s92
      %s93 = sphi 0, %s90
      %s94 = sphi 0, %s93
      %s110 = sphi 0, %s94
      %s116 = sphi 0, %s118
      %s119 = sphi 0, %s116
      %s120 = sphi 0, %s119
      %s136 = sphi 0, %s120
      %s142 = sphi 0, %s144
      %s145 = sphi 0, %s142
      %s146 = sphi 0, %s145
      %s162 = sphi 0, %s146
      %s166 = sphi 0, %s166
      %s168 = sphi 0, %s166
      %s169 = sphi 0, %s168
      %s183 = sphi 0, %s169
      %s187 = sphi 0, %s187
      %s189 = sphi 0, %s187
      %s190 = sphi 0, %s189
      %s204 = sphi 0, %s190
      %s208 = sphi 0, %s208
      %s210 = sphi 0, %s208
      %s211 = sphi 0, %s210
      %s225 = sphi 0, %s211
      %s229 = sphi 0, %s229
      %s231 = sphi 0, %s229
      %s232 = sphi 0, %s231
      %s246 = sphi 0, %s232
      %s250 = sphi 0, %s250
      %s252 = sphi 0, %s250
      %s253 = sphi 0, %s252
      %s267 = sphi 0, %s253
      %s271 = sphi 0, %s271
      %s273 = sphi 0, %s271
      %s274 = sphi 0, %s273
      %s288 = sphi 0, %s274
      %s292 = sphi 0, %s292
      %s294 = sphi 0, %s292
      %s295 = sphi 0, %s294
      %s309 = sphi 0, %s295
      %s313 = sphi 0, %s313
      %s315 = sphi 0, %s313
      %s316 = sphi 0, %s315
      %s330 = sphi 0, %s316
      %s334 = sphi 0, %s334
      %s336 = sphi 0, %s334
      %s337 = sphi 0, %s336
      %s351 = sphi 0, %s337
      %s355 = sphi 0, %s355
      %s357 = sphi 0, %s355
      %s358 = sphi 0, %s357
      %s372 = sphi 0, %s358
      %s376 = sphi 0, %s376
      %s378 = sphi 0, %s376
      %s379 = sphi 0, %s378
      %s393 = sphi 0, %s379
      %s397 = sphi 0, %s397
      %s399 = sphi 0, %s397
      %s400 = sphi 0, %s399
      %s414 = sphi 0, %s400
      %s418 = sphi 0, %s418
      %s420 = sphi 0, %s418
      %s421 = sphi 0, %s420
      %s435 = sphi 0, %s421
      %s439 = sphi 0, %s439
      %s441 = sphi 0, %s439
      %s442 = sphi 0, %s441
      %s456 = sphi 0, %s442
      %s460 = sphi 0, %s460
      %s462 = sphi 0, %s460
      %s463 = sphi 0, %s462
      %s477 = sphi 0, %s463
      %s481 = sphi 0, %s481
      %s483 = sphi 0, %s481
      %s484 = sphi 0, %s483
      %s498 = sphi 0, %s484
      %s502 = sphi 0, %s502
      %s504 = sphi 0, %s502
      %s505 = sphi 0, %s504
      %s519 = sphi 0, %s505
      %s523 = sphi 0, %s523
      %s525 = sphi 0, %s523
      %s526 = sphi 0, %s525
      %s540 = sphi 0, %s526
      %s544 = sphi 0, %s544
      %s546 = sphi 0, %s544
      %s547 = sphi 0, %s546
      %s561 = sphi 0, %s547
      %s565 = sphi 0, %s565
      %s567 = sphi 0, %s565
      %s568 = sphi 0, %s567
      %s582 = sphi 0, %s568
      %s586 = sphi 0, %s586
      %s588 = sphi 0, %s586
      %s589 = sphi 0, %s588
      %s603 = sphi 0, %s589
      %s607 = sphi 0, %s607
      %s609 = sphi 0, %s607
      %s610 = sphi 0, %s609
      %s624 = sphi 0, %s610
      %s628 = sphi 0, %s628
      %s630 = sphi 0, %s628
      %s631 = sphi 0, %s630
      %s645 = sphi 0, %s631
      %s649 = sphi 0, %s649
      %s651 = sphi 0, %s649
      %s652 = sphi 0, %s651
      %s666 = sphi 0, %s652
      %s670 = sphi 0, %s670
      %s672 = sphi 0, %s670
      %s673 = sphi 0, %s672
      %s687 = sphi 0, %s673
      %s691 = sphi 0, %s691
      %s693 = sphi 0, %s691
      %s694 = sphi 0, %s693
      %s708 = sphi 0, %s694
      %s712 = sphi 0, %s712
      %s714 = sphi 0, %s712
      %s715 = sphi 0, %s714
      %s729 = sphi 0, %s715
      %s733 = sphi 0, %s733
      %s735 = sphi 0, %s733
      %s736 = sphi 0, %s735
      %s750 = sphi 0, %s736
      %s754 = sphi 0, %s754
      %s756 = sphi 0, %s754
      %s757 = sphi 0, %s756
      %s771 = sphi 0, %s757
      %s775 = sphi 0, %s775
      %s777 = sphi 0, %s775
      %s778 = sphi 0, %s777
      %s792 = sphi 0, %s778
      %s798 = sphi 0, %s800
      %s801 = sphi 0, %s798
      %s802 = sphi 0, %s801
      %s818 = sphi 0, %s802
    $region4: #{tpu_custom_call.1} parent=1 // loop_header_branch
      %83 = sbr.rel (%p81) target = $region8
    $region5: #{tpu_custom_call.1} parent=1 // loop_body
      %s85 = ssub.s32 %s80, 1
      %s86 = ssub.s32 %s80, 2
      %s87 = sadd.s32 %s80, 1
      %s88 = ssub.s32 %s80, %s87
      %p89 = scmp.eq.s32.totalorder %s88, 0
      %s91 = sadd.s32 %s90, 1
      %s92 = scalar_select %p89, %s90, %s91
      %p95 = pneg %p89
      %p96 = scmp.eq.s32.totalorder %s80, 1
      %p97 = por %p95, %p96
      %p98 = scmp.ne.s32.totalorder %s90, %s93
      %p99 = scmp.eq.s32.totalorder %s80, 0
      %p100 = por %p98, %p99
      %p101 = scmp.ne.s32.totalorder %s90, %s93
      %p102 = scmp.eq.s32.totalorder %s85, 1
      %p103 = por %p101, %p102
      %p104 = scmp.ne.s32.totalorder %s93, %s94
      %p105 = scmp.eq.s32.totalorder %s85, 0
      %p106 = por %p104, %p105
      %p107 = scmp.ne.s32.totalorder %s93, %s94
      %p108 = scmp.eq.s32.totalorder %s86, 1
      %p109 = por %p107, %p108
      %p111 = scmp.ne.s32.totalorder %s94, %s110
      %p112 = scmp.eq.s32.totalorder %s86, 0
      %p113 = por %p111, %p112
      %s114 = ssub.s32 %s80, %s87
      %p115 = scmp.eq.s32.totalorder %s114, 0
      %s117 = sadd.s32 %s116, 1
      %s118 = scalar_select %p115, %s116, %s117
      %p121 = pneg %p115
      %p122 = scmp.eq.s32.totalorder %s80, 1
      %p123 = por %p121, %p122
      %p124 = scmp.ne.s32.totalorder %s116, %s119
      %p125 = scmp.eq.s32.totalorder %s80, 0
      %p126 = por %p124, %p125
      %p127 = scmp.ne.s32.totalorder %s116, %s119
      %p128 = scmp.eq.s32.totalorder %s85, 1
      %p129 = por %p127, %p128
      %p130 = scmp.ne.s32.totalorder %s119, %s120
      %p131 = scmp.eq.s32.totalorder %s85, 0
      %p132 = por %p130, %p131
      %p133 = scmp.ne.s32.totalorder %s119, %s120
      %p134 = scmp.eq.s32.totalorder %s86, 1
      %p135 = por %p133, %p134
      %p137 = scmp.ne.s32.totalorder %s120, %s136
      %p138 = scmp.eq.s32.totalorder %s86, 0
      %p139 = por %p137, %p138
      %s140 = ssub.s32 %s80, %s87
      %p141 = scmp.eq.s32.totalorder %s140, 0
      %s143 = sadd.s32 %s142, 1
      %s144 = scalar_select %p141, %s142, %s143
      %p147 = pneg %p141
      %p148 = scmp.eq.s32.totalorder %s80, 1
      %p149 = por %p147, %p148
      %p150 = scmp.ne.s32.totalorder %s142, %s145
      %p151 = scmp.eq.s32.totalorder %s80, 0
      %p152 = por %p150, %p151
      %p153 = scmp.ne.s32.totalorder %s142, %s145
      %p154 = scmp.eq.s32.totalorder %s85, 1
      %p155 = por %p153, %p154
      %p156 = scmp.ne.s32.totalorder %s145, %s146
      %p157 = scmp.eq.s32.totalorder %s85, 0
      %p158 = por %p156, %p157
      %p159 = scmp.ne.s32.totalorder %s145, %s146
      %p160 = scmp.eq.s32.totalorder %s86, 1
      %p161 = por %p159, %p160
      %p163 = scmp.ne.s32.totalorder %s146, %s162
      %p164 = scmp.eq.s32.totalorder %s86, 0
      %p165 = por %p163, %p164
      %s167 = sadd.s32 %s166, 1
      %p170 = scmp.eq.s32.totalorder %s80, 1
      %p171 = scmp.ne.s32.totalorder %s166, %s168
      %p172 = scmp.eq.s32.totalorder %s80, 0
      %p173 = por %p171, %p172
      %p174 = scmp.ne.s32.totalorder %s166, %s168
      %p175 = scmp.eq.s32.totalorder %s85, 1
      %p176 = por %p174, %p175
      %p177 = scmp.ne.s32.totalorder %s168, %s169
      %p178 = scmp.eq.s32.totalorder %s85, 0
      %p179 = por %p177, %p178
      %p180 = scmp.ne.s32.totalorder %s168, %s169
      %p181 = scmp.eq.s32.totalorder %s86, 1
      %p182 = por %p180, %p181
      %p184 = scmp.ne.s32.totalorder %s169, %s183
      %p185 = scmp.eq.s32.totalorder %s86, 0
      %p186 = por %p184, %p185
      %s188 = sadd.s32 %s187, 1
      %p191 = scmp.eq.s32.totalorder %s80, 1
      %p192 = scmp.ne.s32.totalorder %s187, %s189
      %p193 = scmp.eq.s32.totalorder %s80, 0
      %p194 = por %p192, %p193
      %p195 = scmp.ne.s32.totalorder %s187, %s189
      %p196 = scmp.eq.s32.totalorder %s85, 1
      %p197 = por %p195, %p196
      %p198 = scmp.ne.s32.totalorder %s189, %s190
      %p199 = scmp.eq.s32.totalorder %s85, 0
      %p200 = por %p198, %p199
      %p201 = scmp.ne.s32.totalorder %s189, %s190
      %p202 = scmp.eq.s32.totalorder %s86, 1
      %p203 = por %p201, %p202
      %p205 = scmp.ne.s32.totalorder %s190, %s204
      %p206 = scmp.eq.s32.totalorder %s86, 0
      %p207 = por %p205, %p206
      %s209 = sadd.s32 %s208, 1
      %p212 = scmp.eq.s32.totalorder %s80, 1
      %p213 = scmp.ne.s32.totalorder %s208, %s210
      %p214 = scmp.eq.s32.totalorder %s80, 0
      %p215 = por %p213, %p214
      %p216 = scmp.ne.s32.totalorder %s208, %s210
      %p217 = scmp.eq.s32.totalorder %s85, 1
      %p218 = por %p216, %p217
      %p219 = scmp.ne.s32.totalorder %s210, %s211
      %p220 = scmp.eq.s32.totalorder %s85, 0
      %p221 = por %p219, %p220
      %p222 = scmp.ne.s32.totalorder %s210, %s211
      %p223 = scmp.eq.s32.totalorder %s86, 1
      %p224 = por %p222, %p223
      %p226 = scmp.ne.s32.totalorder %s211, %s225
      %p227 = scmp.eq.s32.totalorder %s86, 0
      %p228 = por %p226, %p227
      %s230 = sadd.s32 %s229, 1
      %p233 = scmp.eq.s32.totalorder %s80, 1
      %p234 = scmp.ne.s32.totalorder %s229, %s231
      %p235 = scmp.eq.s32.totalorder %s80, 0
      %p236 = por %p234, %p235
      %p237 = scmp.ne.s32.totalorder %s229, %s231
      %p238 = scmp.eq.s32.totalorder %s85, 1
      %p239 = por %p237, %p238
      %p240 = scmp.ne.s32.totalorder %s231, %s232
      %p241 = scmp.eq.s32.totalorder %s85, 0
      %p242 = por %p240, %p241
      %p243 = scmp.ne.s32.totalorder %s231, %s232
      %p244 = scmp.eq.s32.totalorder %s86, 1
      %p245 = por %p243, %p244
      %p247 = scmp.ne.s32.totalorder %s232, %s246
      %p248 = scmp.eq.s32.totalorder %s86, 0
      %p249 = por %p247, %p248
      %s251 = sadd.s32 %s250, 1
      %p254 = scmp.eq.s32.totalorder %s80, 1
      %p255 = scmp.ne.s32.totalorder %s250, %s252
      %p256 = scmp.eq.s32.totalorder %s80, 0
      %p257 = por %p255, %p256
      %p258 = scmp.ne.s32.totalorder %s250, %s252
      %p259 = scmp.eq.s32.totalorder %s85, 1
      %p260 = por %p258, %p259
      %p261 = scmp.ne.s32.totalorder %s252, %s253
      %p262 = scmp.eq.s32.totalorder %s85, 0
      %p263 = por %p261, %p262
      %p264 = scmp.ne.s32.totalorder %s252, %s253
      %p265 = scmp.eq.s32.totalorder %s86, 1
      %p266 = por %p264, %p265
      %p268 = scmp.ne.s32.totalorder %s253, %s267
      %p269 = scmp.eq.s32.totalorder %s86, 0
      %p270 = por %p268, %p269
      %s272 = sadd.s32 %s271, 1
      %p275 = scmp.eq.s32.totalorder %s80, 1
      %p276 = scmp.ne.s32.totalorder %s271, %s273
      %p277 = scmp.eq.s32.totalorder %s80, 0
      %p278 = por %p276, %p277
      %p279 = scmp.ne.s32.totalorder %s271, %s273
      %p280 = scmp.eq.s32.totalorder %s85, 1
      %p281 = por %p279, %p280
      %p282 = scmp.ne.s32.totalorder %s273, %s274
      %p283 = scmp.eq.s32.totalorder %s85, 0
      %p284 = por %p282, %p283
      %p285 = scmp.ne.s32.totalorder %s273, %s274
      %p286 = scmp.eq.s32.totalorder %s86, 1
      %p287 = por %p285, %p286
      %p289 = scmp.ne.s32.totalorder %s274, %s288
      %p290 = scmp.eq.s32.totalorder %s86, 0
      %p291 = por %p289, %p290
      %s293 = sadd.s32 %s292, 1
      %p296 = scmp.eq.s32.totalorder %s80, 1
      %p297 = scmp.ne.s32.totalorder %s292, %s294
      %p298 = scmp.eq.s32.totalorder %s80, 0
      %p299 = por %p297, %p298
      %p300 = scmp.ne.s32.totalorder %s292, %s294
      %p301 = scmp.eq.s32.totalorder %s85, 1
      %p302 = por %p300, %p301
      %p303 = scmp.ne.s32.totalorder %s294, %s295
      %p304 = scmp.eq.s32.totalorder %s85, 0
      %p305 = por %p303, %p304
      %p306 = scmp.ne.s32.totalorder %s294, %s295
      %p307 = scmp.eq.s32.totalorder %s86, 1
      %p308 = por %p306, %p307
      %p310 = scmp.ne.s32.totalorder %s295, %s309
      %p311 = scmp.eq.s32.totalorder %s86, 0
      %p312 = por %p310, %p311
      %s314 = sadd.s32 %s313, 1
      %p317 = scmp.eq.s32.totalorder %s80, 1
      %p318 = scmp.ne.s32.totalorder %s313, %s315
      %p319 = scmp.eq.s32.totalorder %s80, 0
      %p320 = por %p318, %p319
      %p321 = scmp.ne.s32.totalorder %s313, %s315
      %p322 = scmp.eq.s32.totalorder %s85, 1
      %p323 = por %p321, %p322
      %p324 = scmp.ne.s32.totalorder %s315, %s316
      %p325 = scmp.eq.s32.totalorder %s85, 0
      %p326 = por %p324, %p325
      %p327 = scmp.ne.s32.totalorder %s315, %s316
      %p328 = scmp.eq.s32.totalorder %s86, 1
      %p329 = por %p327, %p328
      %p331 = scmp.ne.s32.totalorder %s316, %s330
      %p332 = scmp.eq.s32.totalorder %s86, 0
      %p333 = por %p331, %p332
      %s335 = sadd.s32 %s334, 1
      %p338 = scmp.eq.s32.totalorder %s80, 1
      %p339 = scmp.ne.s32.totalorder %s334, %s336
      %p340 = scmp.eq.s32.totalorder %s80, 0
      %p341 = por %p339, %p340
      %p342 = scmp.ne.s32.totalorder %s334, %s336
      %p343 = scmp.eq.s32.totalorder %s85, 1
      %p344 = por %p342, %p343
      %p345 = scmp.ne.s32.totalorder %s336, %s337
      %p346 = scmp.eq.s32.totalorder %s85, 0
      %p347 = por %p345, %p346
      %p348 = scmp.ne.s32.totalorder %s336, %s337
      %p349 = scmp.eq.s32.totalorder %s86, 1
      %p350 = por %p348, %p349
      %p352 = scmp.ne.s32.totalorder %s337, %s351
      %p353 = scmp.eq.s32.totalorder %s86, 0
      %p354 = por %p352, %p353
      %s356 = sadd.s32 %s355, 1
      %p359 = scmp.eq.s32.totalorder %s80, 1
      %p360 = scmp.ne.s32.totalorder %s355, %s357
      %p361 = scmp.eq.s32.totalorder %s80, 0
      %p362 = por %p360, %p361
      %p363 = scmp.ne.s32.totalorder %s355, %s357
      %p364 = scmp.eq.s32.totalorder %s85, 1
      %p365 = por %p363, %p364
      %p366 = scmp.ne.s32.totalorder %s357, %s358
      %p367 = scmp.eq.s32.totalorder %s85, 0
      %p368 = por %p366, %p367
      %p369 = scmp.ne.s32.totalorder %s357, %s358
      %p370 = scmp.eq.s32.totalorder %s86, 1
      %p371 = por %p369, %p370
      %p373 = scmp.ne.s32.totalorder %s358, %s372
      %p374 = scmp.eq.s32.totalorder %s86, 0
      %p375 = por %p373, %p374
      %s377 = sadd.s32 %s376, 1
      %p380 = scmp.eq.s32.totalorder %s80, 1
      %p381 = scmp.ne.s32.totalorder %s376, %s378
      %p382 = scmp.eq.s32.totalorder %s80, 0
      %p383 = por %p381, %p382
      %p384 = scmp.ne.s32.totalorder %s376, %s378
      %p385 = scmp.eq.s32.totalorder %s85, 1
      %p386 = por %p384, %p385
      %p387 = scmp.ne.s32.totalorder %s378, %s379
      %p388 = scmp.eq.s32.totalorder %s85, 0
      %p389 = por %p387, %p388
      %p390 = scmp.ne.s32.totalorder %s378, %s379
      %p391 = scmp.eq.s32.totalorder %s86, 1
      %p392 = por %p390, %p391
      %p394 = scmp.ne.s32.totalorder %s379, %s393
      %p395 = scmp.eq.s32.totalorder %s86, 0
      %p396 = por %p394, %p395
      %s398 = sadd.s32 %s397, 1
      %p401 = scmp.eq.s32.totalorder %s80, 1
      %p402 = scmp.ne.s32.totalorder %s397, %s399
      %p403 = scmp.eq.s32.totalorder %s80, 0
      %p404 = por %p402, %p403
      %p405 = scmp.ne.s32.totalorder %s397, %s399
      %p406 = scmp.eq.s32.totalorder %s85, 1
      %p407 = por %p405, %p406
      %p408 = scmp.ne.s32.totalorder %s399, %s400
      %p409 = scmp.eq.s32.totalorder %s85, 0
      %p410 = por %p408, %p409
      %p411 = scmp.ne.s32.totalorder %s399, %s400
      %p412 = scmp.eq.s32.totalorder %s86, 1
      %p413 = por %p411, %p412
      %p415 = scmp.ne.s32.totalorder %s400, %s414
      %p416 = scmp.eq.s32.totalorder %s86, 0
      %p417 = por %p415, %p416
      %s419 = sadd.s32 %s418, 1
      %p422 = scmp.eq.s32.totalorder %s80, 1
      %p423 = scmp.ne.s32.totalorder %s418, %s420
      %p424 = scmp.eq.s32.totalorder %s80, 0
      %p425 = por %p423, %p424
      %p426 = scmp.ne.s32.totalorder %s418, %s420
      %p427 = scmp.eq.s32.totalorder %s85, 1
      %p428 = por %p426, %p427
      %p429 = scmp.ne.s32.totalorder %s420, %s421
      %p430 = scmp.eq.s32.totalorder %s85, 0
      %p431 = por %p429, %p430
      %p432 = scmp.ne.s32.totalorder %s420, %s421
      %p433 = scmp.eq.s32.totalorder %s86, 1
      %p434 = por %p432, %p433
      %p436 = scmp.ne.s32.totalorder %s421, %s435
      %p437 = scmp.eq.s32.totalorder %s86, 0
      %p438 = por %p436, %p437
      %s440 = sadd.s32 %s439, 1
      %p443 = scmp.eq.s32.totalorder %s80, 1
      %p444 = scmp.ne.s32.totalorder %s439, %s441
      %p445 = scmp.eq.s32.totalorder %s80, 0
      %p446 = por %p444, %p445
      %p447 = scmp.ne.s32.totalorder %s439, %s441
      %p448 = scmp.eq.s32.totalorder %s85, 1
      %p449 = por %p447, %p448
      %p450 = scmp.ne.s32.totalorder %s441, %s442
      %p451 = scmp.eq.s32.totalorder %s85, 0
      %p452 = por %p450, %p451
      %p453 = scmp.ne.s32.totalorder %s441, %s442
      %p454 = scmp.eq.s32.totalorder %s86, 1
      %p455 = por %p453, %p454
      %p457 = scmp.ne.s32.totalorder %s442, %s456
      %p458 = scmp.eq.s32.totalorder %s86, 0
      %p459 = por %p457, %p458
      %s461 = sadd.s32 %s460, 1
      %p464 = scmp.eq.s32.totalorder %s80, 1
      %p465 = scmp.ne.s32.totalorder %s460, %s462
      %p466 = scmp.eq.s32.totalorder %s80, 0
      %p467 = por %p465, %p466
      %p468 = scmp.ne.s32.totalorder %s460, %s462
      %p469 = scmp.eq.s32.totalorder %s85, 1
      %p470 = por %p468, %p469
      %p471 = scmp.ne.s32.totalorder %s462, %s463
      %p472 = scmp.eq.s32.totalorder %s85, 0
      %p473 = por %p471, %p472
      %p474 = scmp.ne.s32.totalorder %s462, %s463
      %p475 = scmp.eq.s32.totalorder %s86, 1
      %p476 = por %p474, %p475
      %p478 = scmp.ne.s32.totalorder %s463, %s477
      %p479 = scmp.eq.s32.totalorder %s86, 0
      %p480 = por %p478, %p479
      %s482 = sadd.s32 %s481, 1
      %p485 = scmp.eq.s32.totalorder %s80, 1
      %p486 = scmp.ne.s32.totalorder %s481, %s483
      %p487 = scmp.eq.s32.totalorder %s80, 0
      %p488 = por %p486, %p487
      %p489 = scmp.ne.s32.totalorder %s481, %s483
      %p490 = scmp.eq.s32.totalorder %s85, 1
      %p491 = por %p489, %p490
      %p492 = scmp.ne.s32.totalorder %s483, %s484
      %p493 = scmp.eq.s32.totalorder %s85, 0
      %p494 = por %p492, %p493
      %p495 = scmp.ne.s32.totalorder %s483, %s484
      %p496 = scmp.eq.s32.totalorder %s86, 1
      %p497 = por %p495, %p496
      %p499 = scmp.ne.s32.totalorder %s484, %s498
      %p500 = scmp.eq.s32.totalorder %s86, 0
      %p501 = por %p499, %p500
      %s503 = sadd.s32 %s502, 1
      %p506 = scmp.eq.s32.totalorder %s80, 1
      %p507 = scmp.ne.s32.totalorder %s502, %s504
      %p508 = scmp.eq.s32.totalorder %s80, 0
      %p509 = por %p507, %p508
      %p510 = scmp.ne.s32.totalorder %s502, %s504
      %p511 = scmp.eq.s32.totalorder %s85, 1
      %p512 = por %p510, %p511
      %p513 = scmp.ne.s32.totalorder %s504, %s505
      %p514 = scmp.eq.s32.totalorder %s85, 0
      %p515 = por %p513, %p514
      %p516 = scmp.ne.s32.totalorder %s504, %s505
      %p517 = scmp.eq.s32.totalorder %s86, 1
      %p518 = por %p516, %p517
      %p520 = scmp.ne.s32.totalorder %s505, %s519
      %p521 = scmp.eq.s32.totalorder %s86, 0
      %p522 = por %p520, %p521
      %s524 = sadd.s32 %s523, 1
      %p527 = scmp.eq.s32.totalorder %s80, 1
      %p528 = scmp.ne.s32.totalorder %s523, %s525
      %p529 = scmp.eq.s32.totalorder %s80, 0
      %p530 = por %p528, %p529
      %p531 = scmp.ne.s32.totalorder %s523, %s525
      %p532 = scmp.eq.s32.totalorder %s85, 1
      %p533 = por %p531, %p532
      %p534 = scmp.ne.s32.totalorder %s525, %s526
      %p535 = scmp.eq.s32.totalorder %s85, 0
      %p536 = por %p534, %p535
      %p537 = scmp.ne.s32.totalorder %s525, %s526
      %p538 = scmp.eq.s32.totalorder %s86, 1
      %p539 = por %p537, %p538
      %p541 = scmp.ne.s32.totalorder %s526, %s540
      %p542 = scmp.eq.s32.totalorder %s86, 0
      %p543 = por %p541, %p542
      %s545 = sadd.s32 %s544, 1
      %p548 = scmp.eq.s32.totalorder %s80, 1
      %p549 = scmp.ne.s32.totalorder %s544, %s546
      %p550 = scmp.eq.s32.totalorder %s80, 0
      %p551 = por %p549, %p550
      %p552 = scmp.ne.s32.totalorder %s544, %s546
      %p553 = scmp.eq.s32.totalorder %s85, 1
      %p554 = por %p552, %p553
      %p555 = scmp.ne.s32.totalorder %s546, %s547
      %p556 = scmp.eq.s32.totalorder %s85, 0
      %p557 = por %p555, %p556
      %p558 = scmp.ne.s32.totalorder %s546, %s547
      %p559 = scmp.eq.s32.totalorder %s86, 1
      %p560 = por %p558, %p559
      %p562 = scmp.ne.s32.totalorder %s547, %s561
      %p563 = scmp.eq.s32.totalorder %s86, 0
      %p564 = por %p562, %p563
      %s566 = sadd.s32 %s565, 1
      %p569 = scmp.eq.s32.totalorder %s80, 1
      %p570 = scmp.ne.s32.totalorder %s565, %s567
      %p571 = scmp.eq.s32.totalorder %s80, 0
      %p572 = por %p570, %p571
      %p573 = scmp.ne.s32.totalorder %s565, %s567
      %p574 = scmp.eq.s32.totalorder %s85, 1
      %p575 = por %p573, %p574
      %p576 = scmp.ne.s32.totalorder %s567, %s568
      %p577 = scmp.eq.s32.totalorder %s85, 0
      %p578 = por %p576, %p577
      %p579 = scmp.ne.s32.totalorder %s567, %s568
      %p580 = scmp.eq.s32.totalorder %s86, 1
      %p581 = por %p579, %p580
      %p583 = scmp.ne.s32.totalorder %s568, %s582
      %p584 = scmp.eq.s32.totalorder %s86, 0
      %p585 = por %p583, %p584
      %s587 = sadd.s32 %s586, 1
      %p590 = scmp.eq.s32.totalorder %s80, 1
      %p591 = scmp.ne.s32.totalorder %s586, %s588
      %p592 = scmp.eq.s32.totalorder %s80, 0
      %p593 = por %p591, %p592
      %p594 = scmp.ne.s32.totalorder %s586, %s588
      %p595 = scmp.eq.s32.totalorder %s85, 1
      %p596 = por %p594, %p595
      %p597 = scmp.ne.s32.totalorder %s588, %s589
      %p598 = scmp.eq.s32.totalorder %s85, 0
      %p599 = por %p597, %p598
      %p600 = scmp.ne.s32.totalorder %s588, %s589
      %p601 = scmp.eq.s32.totalorder %s86, 1
      %p602 = por %p600, %p601
      %p604 = scmp.ne.s32.totalorder %s589, %s603
      %p605 = scmp.eq.s32.totalorder %s86, 0
      %p606 = por %p604, %p605
      %s608 = sadd.s32 %s607, 1
      %p611 = scmp.eq.s32.totalorder %s80, 1
      %p612 = scmp.ne.s32.totalorder %s607, %s609
      %p613 = scmp.eq.s32.totalorder %s80, 0
      %p614 = por %p612, %p613
      %p615 = scmp.ne.s32.totalorder %s607, %s609
      %p616 = scmp.eq.s32.totalorder %s85, 1
      %p617 = por %p615, %p616
      %p618 = scmp.ne.s32.totalorder %s609, %s610
      %p619 = scmp.eq.s32.totalorder %s85, 0
      %p620 = por %p618, %p619
      %p621 = scmp.ne.s32.totalorder %s609, %s610
      %p622 = scmp.eq.s32.totalorder %s86, 1
      %p623 = por %p621, %p622
      %p625 = scmp.ne.s32.totalorder %s610, %s624
      %p626 = scmp.eq.s32.totalorder %s86, 0
      %p627 = por %p625, %p626
      %s629 = sadd.s32 %s628, 1
      %p632 = scmp.eq.s32.totalorder %s80, 1
      %p633 = scmp.ne.s32.totalorder %s628, %s630
      %p634 = scmp.eq.s32.totalorder %s80, 0
      %p635 = por %p633, %p634
      %p636 = scmp.ne.s32.totalorder %s628, %s630
      %p637 = scmp.eq.s32.totalorder %s85, 1
      %p638 = por %p636, %p637
      %p639 = scmp.ne.s32.totalorder %s630, %s631
      %p640 = scmp.eq.s32.totalorder %s85, 0
      %p641 = por %p639, %p640
      %p642 = scmp.ne.s32.totalorder %s630, %s631
      %p643 = scmp.eq.s32.totalorder %s86, 1
      %p644 = por %p642, %p643
      %p646 = scmp.ne.s32.totalorder %s631, %s645
      %p647 = scmp.eq.s32.totalorder %s86, 0
      %p648 = por %p646, %p647
      %s650 = sadd.s32 %s649, 1
      %p653 = scmp.eq.s32.totalorder %s80, 1
      %p654 = scmp.ne.s32.totalorder %s649, %s651
      %p655 = scmp.eq.s32.totalorder %s80, 0
      %p656 = por %p654, %p655
      %p657 = scmp.ne.s32.totalorder %s649, %s651
      %p658 = scmp.eq.s32.totalorder %s85, 1
      %p659 = por %p657, %p658
      %p660 = scmp.ne.s32.totalorder %s651, %s652
      %p661 = scmp.eq.s32.totalorder %s85, 0
      %p662 = por %p660, %p661
      %p663 = scmp.ne.s32.totalorder %s651, %s652
      %p664 = scmp.eq.s32.totalorder %s86, 1
      %p665 = por %p663, %p664
      %p667 = scmp.ne.s32.totalorder %s652, %s666
      %p668 = scmp.eq.s32.totalorder %s86, 0
      %p669 = por %p667, %p668
      %s671 = sadd.s32 %s670, 1
      %p674 = scmp.eq.s32.totalorder %s80, 1
      %p675 = scmp.ne.s32.totalorder %s670, %s672
      %p676 = scmp.eq.s32.totalorder %s80, 0
      %p677 = por %p675, %p676
      %p678 = scmp.ne.s32.totalorder %s670, %s672
      %p679 = scmp.eq.s32.totalorder %s85, 1
      %p680 = por %p678, %p679
      %p681 = scmp.ne.s32.totalorder %s672, %s673
      %p682 = scmp.eq.s32.totalorder %s85, 0
      %p683 = por %p681, %p682
      %p684 = scmp.ne.s32.totalorder %s672, %s673
      %p685 = scmp.eq.s32.totalorder %s86, 1
      %p686 = por %p684, %p685
      %p688 = scmp.ne.s32.totalorder %s673, %s687
      %p689 = scmp.eq.s32.totalorder %s86, 0
      %p690 = por %p688, %p689
      %s692 = sadd.s32 %s691, 1
      %p695 = scmp.eq.s32.totalorder %s80, 1
      %p696 = scmp.ne.s32.totalorder %s691, %s693
      %p697 = scmp.eq.s32.totalorder %s80, 0
      %p698 = por %p696, %p697
      %p699 = scmp.ne.s32.totalorder %s691, %s693
      %p700 = scmp.eq.s32.totalorder %s85, 1
      %p701 = por %p699, %p700
      %p702 = scmp.ne.s32.totalorder %s693, %s694
      %p703 = scmp.eq.s32.totalorder %s85, 0
      %p704 = por %p702, %p703
      %p705 = scmp.ne.s32.totalorder %s693, %s694
      %p706 = scmp.eq.s32.totalorder %s86, 1
      %p707 = por %p705, %p706
      %p709 = scmp.ne.s32.totalorder %s694, %s708
      %p710 = scmp.eq.s32.totalorder %s86, 0
      %p711 = por %p709, %p710
      %s713 = sadd.s32 %s712, 1
      %p716 = scmp.eq.s32.totalorder %s80, 1
      %p717 = scmp.ne.s32.totalorder %s712, %s714
      %p718 = scmp.eq.s32.totalorder %s80, 0
      %p719 = por %p717, %p718
      %p720 = scmp.ne.s32.totalorder %s712, %s714
      %p721 = scmp.eq.s32.totalorder %s85, 1
      %p722 = por %p720, %p721
      %p723 = scmp.ne.s32.totalorder %s714, %s715
      %p724 = scmp.eq.s32.totalorder %s85, 0
      %p725 = por %p723, %p724
      %p726 = scmp.ne.s32.totalorder %s714, %s715
      %p727 = scmp.eq.s32.totalorder %s86, 1
      %p728 = por %p726, %p727
      %p730 = scmp.ne.s32.totalorder %s715, %s729
      %p731 = scmp.eq.s32.totalorder %s86, 0
      %p732 = por %p730, %p731
      %s734 = sadd.s32 %s733, 1
      %p737 = scmp.eq.s32.totalorder %s80, 1
      %p738 = scmp.ne.s32.totalorder %s733, %s735
      %p739 = scmp.eq.s32.totalorder %s80, 0
      %p740 = por %p738, %p739
      %p741 = scmp.ne.s32.totalorder %s733, %s735
      %p742 = scmp.eq.s32.totalorder %s85, 1
      %p743 = por %p741, %p742
      %p744 = scmp.ne.s32.totalorder %s735, %s736
      %p745 = scmp.eq.s32.totalorder %s85, 0
      %p746 = por %p744, %p745
      %p747 = scmp.ne.s32.totalorder %s735, %s736
      %p748 = scmp.eq.s32.totalorder %s86, 1
      %p749 = por %p747, %p748
      %p751 = scmp.ne.s32.totalorder %s736, %s750
      %p752 = scmp.eq.s32.totalorder %s86, 0
      %p753 = por %p751, %p752
      %s755 = sadd.s32 %s754, 1
      %p758 = scmp.eq.s32.totalorder %s80, 1
      %p759 = scmp.ne.s32.totalorder %s754, %s756
      %p760 = scmp.eq.s32.totalorder %s80, 0
      %p761 = por %p759, %p760
      %p762 = scmp.ne.s32.totalorder %s754, %s756
      %p763 = scmp.eq.s32.totalorder %s85, 1
      %p764 = por %p762, %p763
      %p765 = scmp.ne.s32.totalorder %s756, %s757
      %p766 = scmp.eq.s32.totalorder %s85, 0
      %p767 = por %p765, %p766
      %p768 = scmp.ne.s32.totalorder %s756, %s757
      %p769 = scmp.eq.s32.totalorder %s86, 1
      %p770 = por %p768, %p769
      %p772 = scmp.ne.s32.totalorder %s757, %s771
      %p773 = scmp.eq.s32.totalorder %s86, 0
      %p774 = por %p772, %p773
      %s776 = sadd.s32 %s775, 1
      %p779 = scmp.eq.s32.totalorder %s80, 1
      %p780 = scmp.ne.s32.totalorder %s775, %s777
      %p781 = scmp.eq.s32.totalorder %s80, 0
      %p782 = por %p780, %p781
      %p783 = scmp.ne.s32.totalorder %s775, %s777
      %p784 = scmp.eq.s32.totalorder %s85, 1
      %p785 = por %p783, %p784
      %p786 = scmp.ne.s32.totalorder %s777, %s778
      %p787 = scmp.eq.s32.totalorder %s85, 0
      %p788 = por %p786, %p787
      %p789 = scmp.ne.s32.totalorder %s777, %s778
      %p790 = scmp.eq.s32.totalorder %s86, 1
      %p791 = por %p789, %p790
      %p793 = scmp.ne.s32.totalorder %s778, %s792
      %p794 = scmp.eq.s32.totalorder %s86, 0
      %p795 = por %p793, %p794
      %s796 = ssub.s32 %s80, %s87
      %p797 = scmp.eq.s32.totalorder %s796, 0
      %s799 = sadd.s32 %s798, 1
      %s800 = scalar_select %p797, %s798, %s799
      %p803 = pneg %p797
      %p804 = scmp.eq.s32.totalorder %s80, 1
      %p805 = por %p803, %p804
      %p806 = scmp.ne.s32.totalorder %s798, %s801
      %p807 = scmp.eq.s32.totalorder %s80, 0
      %p808 = por %p806, %p807
      %p809 = scmp.ne.s32.totalorder %s798, %s801
      %p810 = scmp.eq.s32.totalorder %s85, 1
      %p811 = por %p809, %p810
      %p812 = scmp.ne.s32.totalorder %s801, %s802
      %p813 = scmp.eq.s32.totalorder %s85, 0
      %p814 = por %p812, %p813
      %p815 = scmp.ne.s32.totalorder %s801, %s802
      %p816 = scmp.eq.s32.totalorder %s86, 1
      %p817 = por %p815, %p816
      %p819 = scmp.ne.s32.totalorder %s802, %s818
      %p820 = scmp.eq.s32.totalorder %s86, 0
      %p821 = por %p819, %p820
      %p822 = scmp.le.s32.totalorder 1, %s80
      %p823 = scmp.lt.s32.totalorder %s80, 3
      %p824 = pnand %p822, %p823
      %p825 = pneg %p824
      // Predicated region
      $region9: #{tpu_custom_call.1} parent=5 // pred_check
        _
      $region10: #{tpu_custom_call.1} parent=5 // pred_check_branch
        %827 = sbr.rel (%p824) target = $region12
      $region11: #{tpu_custom_call.1} parent=5 // pred_region
        %s828 = ssub.s32 %s80, 1
        // Predicated region
        $region13: #{tpu_custom_call.1} parent=11 // pred_check
          %p829 = pneg %p179
        $region14: #{tpu_custom_call.1} parent=11 // pred_check_branch
          %831 = sbr.rel (%p829) target = $region16
        $region15: #{tpu_custom_call.1} parent=11 // pred_region
          _
        $region16: #{tpu_custom_call.1} parent=11 // pred_fallthru
          _
        // Predicated region
        $region17: #{tpu_custom_call.1} parent=11 // pred_check
          %p832 = pneg %p200
        $region18: #{tpu_custom_call.1} parent=11 // pred_check_branch
          %834 = sbr.rel (%p832) target = $region20
        $region19: #{tpu_custom_call.1} parent=11 // pred_region
          %s836 = ssub.s32 16, 16
          %837 = vsyncadd [#allocation3], %s836
          %s839 = sshll.u32 [#allocation2], 4
          %s840 = int_to_ptr.vmem [resolvable:$true] %s839
          %842 = dma.hbm_to_vmem [thread:$0]  %s9, 16, %s840, [#allocation3]
        $region20: #{tpu_custom_call.1} parent=11 // pred_fallthru
          _
        // Predicated region
        $region21: #{tpu_custom_call.1} parent=11 // pred_check
          %p843 = pneg %p221
        $region22: #{tpu_custom_call.1} parent=11 // pred_check_branch
          %845 = sbr.rel (%p843) target = $region24
        $region23: #{tpu_custom_call.1} parent=11 // pred_region
          _
        $region24: #{tpu_custom_call.1} parent=11 // pred_fallthru
          _
        // Predicated region
        $region25: #{tpu_custom_call.1} parent=11 // pred_check
          %p846 = pneg %p242
        $region26: #{tpu_custom_call.1} parent=11 // pred_check_branch
          %848 = sbr.rel (%p846) target = $region28
        $region27: #{tpu_custom_call.1} parent=11 // pred_region
          %s850 = ssub.s32 16, 16
          %851 = vsyncadd [#allocation6], %s850
          %s853 = sshll.u32 [#allocation5], 4
          %s854 = int_to_ptr.vmem [resolvable:$true] %s853
          %856 = dma.hbm_to_vmem [thread:$0]  %s13, 16, %s854, [#allocation6]
        $region28: #{tpu_custom_call.1} parent=11 // pred_fallthru
          _
        // Predicated region
        $region29: #{tpu_custom_call.1} parent=11 // pred_check
          %p857 = pneg %p263
        $region30: #{tpu_custom_call.1} parent=11 // pred_check_branch
          %859 = sbr.rel (%p857) target = $region32
        $region31: #{tpu_custom_call.1} parent=11 // pred_region
          _
        $region32: #{tpu_custom_call.1} parent=11 // pred_fallthru
          _
        // Predicated region
        $region33: #{tpu_custom_call.1} parent=11 // pred_check
          %p860 = pneg %p284
        $region34: #{tpu_custom_call.1} parent=11 // pred_check_branch
          %862 = sbr.rel (%p860) target = $region36
        $region35: #{tpu_custom_call.1} parent=11 // pred_region
          %s864 = ssub.s32 16, 16
          %865 = vsyncadd [#allocation6], %s864
          %s867 = sshll.u32 [#allocation7], 4
          %s868 = int_to_ptr.vmem [resolvable:$true] %s867
          %870 = dma.hbm_to_vmem [thread:$0]  %s17, 16, %s868, [#allocation6]
        $region36: #{tpu_custom_call.1} parent=11 // pred_fallthru
          _
        // Predicated region
        $region37: #{tpu_custom_call.1} parent=11 // pred_check
          %p871 = pneg %p305
        $region38: #{tpu_custom_call.1} parent=11 // pred_check_branch
          %873 = sbr.rel (%p871) target = $region40
        $region39: #{tpu_custom_call.1} parent=11 // pred_region
          _
        $region40: #{tpu_custom_call.1} parent=11 // pred_fallthru
          _
        // Predicated region
        $region41: #{tpu_custom_call.1} parent=11 // pred_check
          %p874 = pneg %p326
        $region42: #{tpu_custom_call.1} parent=11 // pred_check_branch
          %876 = sbr.rel (%p874) target = $region44
        $region43: #{tpu_custom_call.1} parent=11 // pred_region
          %s878 = ssub.s32 16, 16
          %879 = vsyncadd [#allocation9], %s878
          %s881 = sshll.u32 [#allocation8], 4
          %s882 = int_to_ptr.vmem [resolvable:$true] %s881
          %884 = dma.hbm_to_vmem [thread:$0]  %s21, 16, %s882, [#allocation9]
        $region44: #{tpu_custom_call.1} parent=11 // pred_fallthru
          _
        // Predicated region
        $region45: #{tpu_custom_call.1} parent=11 // pred_check
          %p885 = pneg %p347
        $region46: #{tpu_custom_call.1} parent=11 // pred_check_branch
          %887 = sbr.rel (%p885) target = $region48
        $region47: #{tpu_custom_call.1} parent=11 // pred_region
          _
        $region48: #{tpu_custom_call.1} parent=11 // pred_fallthru
          _
        // Predicated region
        $region49: #{tpu_custom_call.1} parent=11 // pred_check
          %p888 = pneg %p368
        $region50: #{tpu_custom_call.1} parent=11 // pred_check_branch
          %890 = sbr.rel (%p888) target = $region52
        $region51: #{tpu_custom_call.1} parent=11 // pred_region
          %s892 = ssub.s32 16, 16
          %893 = vsyncadd [#allocation9], %s892
          %s895 = sshll.u32 [#allocation10], 4
          %s896 = int_to_ptr.vmem [resolvable:$true] %s895
          %898 = dma.hbm_to_vmem [thread:$0]  %s25, 16, %s896, [#allocation9]
        $region52: #{tpu_custom_call.1} parent=11 // pred_fallthru
          _
        // Predicated region
        $region53: #{tpu_custom_call.1} parent=11 // pred_check
          %p899 = pneg %p389
        $region54: #{tpu_custom_call.1} parent=11 // pred_check_branch
          %901 = sbr.rel (%p899) target = $region56
        $region55: #{tpu_custom_call.1} parent=11 // pred_region
          _
        $region56: #{tpu_custom_call.1} parent=11 // pred_fallthru
          _
        // Predicated region
        $region57: #{tpu_custom_call.1} parent=11 // pred_check
          %p902 = pneg %p410
        $region58: #{tpu_custom_call.1} parent=11 // pred_check_branch
          %904 = sbr.rel (%p902) target = $region60
        $region59: #{tpu_custom_call.1} parent=11 // pred_region
          _
        $region60: #{tpu_custom_call.1} parent=11 // pred_fallthru
          _
        // Predicated region
        $region61: #{tpu_custom_call.1} parent=11 // pred_check
          %p905 = pneg %p431
        $region62: #{tpu_custom_call.1} parent=11 // pred_check_branch
          %907 = sbr.rel (%p905) target = $region64
        $region63: #{tpu_custom_call.1} parent=11 // pred_region
          %s909 = ssub.s32 128, 128
          %910 = vsyncadd [#allocation12], %s909
          %s911 = sshll.u32 [#allocation11], 4
          %s912 = int_to_ptr.vmem [resolvable:$true] %s911
          %917 = dma.hbm_to_vmem [thread:$0]  %s31, 128, %s912, [#allocation12], 64, 64, 4
        $region64: #{tpu_custom_call.1} parent=11 // pred_fallthru
          _
        // Predicated region
        $region65: #{tpu_custom_call.1} parent=11 // pred_check
          %p918 = pneg %p452
        $region66: #{tpu_custom_call.1} parent=11 // pred_check_branch
          %920 = sbr.rel (%p918) target = $region68
        $region67: #{tpu_custom_call.1} parent=11 // pred_region
          _
        $region68: #{tpu_custom_call.1} parent=11 // pred_fallthru
          _
        // Predicated region
        $region69: #{tpu_custom_call.1} parent=11 // pred_check
          %p921 = pneg %p473
        $region70: #{tpu_custom_call.1} parent=11 // pred_check_branch
          %923 = sbr.rel (%p921) target = $region72
        $region71: #{tpu_custom_call.1} parent=11 // pred_region
          _
        $region72: #{tpu_custom_call.1} parent=11 // pred_fallthru
          _
        // Predicated region
        $region73: #{tpu_custom_call.1} parent=11 // pred_check
          %p924 = pneg %p494
        $region74: #{tpu_custom_call.1} parent=11 // pred_check_branch
          %926 = sbr.rel (%p924) target = $region76
        $region75: #{tpu_custom_call.1} parent=11 // pred_region
          _
        $region76: #{tpu_custom_call.1} parent=11 // pred_fallthru
          _
        // Predicated region
        $region77: #{tpu_custom_call.1} parent=11 // pred_check
          %p927 = pneg %p515
        $region78: #{tpu_custom_call.1} parent=11 // pred_check_branch
          %929 = sbr.rel (%p927) target = $region80
        $region79: #{tpu_custom_call.1} parent=11 // pred_region
          _
        $region80: #{tpu_custom_call.1} parent=11 // pred_fallthru
          _
        // Predicated region
        $region81: #{tpu_custom_call.1} parent=11 // pred_check
          %p930 = pneg %p536
        $region82: #{tpu_custom_call.1} parent=11 // pred_check_branch
          %932 = sbr.rel (%p930) target = $region84
        $region83: #{tpu_custom_call.1} parent=11 // pred_region
          _
        $region84: #{tpu_custom_call.1} parent=11 // pred_fallthru
          _
        // Predicated region
        $region85: #{tpu_custom_call.1} parent=11 // pred_check
          %p933 = pneg %p557
        $region86: #{tpu_custom_call.1} parent=11 // pred_check_branch
          %935 = sbr.rel (%p933) target = $region88
        $region87: #{tpu_custom_call.1} parent=11 // pred_region
          _
        $region88: #{tpu_custom_call.1} parent=11 // pred_fallthru
          _
        // Predicated region
        $region89: #{tpu_custom_call.1} parent=11 // pred_check
          %p936 = pneg %p578
        $region90: #{tpu_custom_call.1} parent=11 // pred_check_branch
          %938 = sbr.rel (%p936) target = $region92
        $region91: #{tpu_custom_call.1} parent=11 // pred_region
          _
        $region92: #{tpu_custom_call.1} parent=11 // pred_fallthru
          _
        // Predicated region
        $region93: #{tpu_custom_call.1} parent=11 // pred_check
          %p939 = pneg %p599
        $region94: #{tpu_custom_call.1} parent=11 // pred_check_branch
          %941 = sbr.rel (%p939) target = $region96
        $region95: #{tpu_custom_call.1} parent=11 // pred_region
          _
        $region96: #{tpu_custom_call.1} parent=11 // pred_fallthru
          _
        // Predicated region
        $region97: #{tpu_custom_call.1} parent=11 // pred_check
          %p942 = pneg %p620
        $region98: #{tpu_custom_call.1} parent=11 // pred_check_branch
          %944 = sbr.rel (%p942) target = $region100
        $region99: #{tpu_custom_call.1} parent=11 // pred_region
          _
        $region100: #{tpu_custom_call.1} parent=11 // pred_fallthru
          _
        // Predicated region
        $region101: #{tpu_custom_call.1} parent=11 // pred_check
          %p945 = pneg %p641
        $region102: #{tpu_custom_call.1} parent=11 // pred_check_branch
          %947 = sbr.rel (%p945) target = $region104
        $region103: #{tpu_custom_call.1} parent=11 // pred_region
          _
        $region104: #{tpu_custom_call.1} parent=11 // pred_fallthru
          _
        // Predicated region
        $region105: #{tpu_custom_call.1} parent=11 // pred_check
          %p948 = pneg %p662
        $region106: #{tpu_custom_call.1} parent=11 // pred_check_branch
          %950 = sbr.rel (%p948) target = $region108
        $region107: #{tpu_custom_call.1} parent=11 // pred_region
          _
        $region108: #{tpu_custom_call.1} parent=11 // pred_fallthru
          _
        // Predicated region
        $region109: #{tpu_custom_call.1} parent=11 // pred_check
          %p951 = pneg %p683
        $region110: #{tpu_custom_call.1} parent=11 // pred_check_branch
          %953 = sbr.rel (%p951) target = $region112
        $region111: #{tpu_custom_call.1} parent=11 // pred_region
          _
        $region112: #{tpu_custom_call.1} parent=11 // pred_fallthru
          _
        // Predicated region
        $region113: #{tpu_custom_call.1} parent=11 // pred_check
          %p954 = pneg %p704
        $region114: #{tpu_custom_call.1} parent=11 // pred_check_branch
          %956 = sbr.rel (%p954) target = $region116
        $region115: #{tpu_custom_call.1} parent=11 // pred_region
          _
        $region116: #{tpu_custom_call.1} parent=11 // pred_fallthru
          _
        // Predicated region
        $region117: #{tpu_custom_call.1} parent=11 // pred_check
          %p957 = pneg %p725
        $region118: #{tpu_custom_call.1} parent=11 // pred_check_branch
          %959 = sbr.rel (%p957) target = $region120
        $region119: #{tpu_custom_call.1} parent=11 // pred_region
          _
        $region120: #{tpu_custom_call.1} parent=11 // pred_fallthru
          _
        // Predicated region
        $region121: #{tpu_custom_call.1} parent=11 // pred_check
          %p960 = pneg %p746
        $region122: #{tpu_custom_call.1} parent=11 // pred_check_branch
          %962 = sbr.rel (%p960) target = $region124
        $region123: #{tpu_custom_call.1} parent=11 // pred_region
          _
        $region124: #{tpu_custom_call.1} parent=11 // pred_fallthru
          _
        // Predicated region
        $region125: #{tpu_custom_call.1} parent=11 // pred_check
          %p963 = pneg %p767
        $region126: #{tpu_custom_call.1} parent=11 // pred_check_branch
          %965 = sbr.rel (%p963) target = $region128
        $region127: #{tpu_custom_call.1} parent=11 // pred_region
          _
        $region128: #{tpu_custom_call.1} parent=11 // pred_fallthru
          _
        // Predicated region
        $region129: #{tpu_custom_call.1} parent=11 // pred_check
          %p966 = pneg %p788
        $region130: #{tpu_custom_call.1} parent=11 // pred_check_branch
          %968 = sbr.rel (%p966) target = $region132
        $region131: #{tpu_custom_call.1} parent=11 // pred_region
          _
        $region132: #{tpu_custom_call.1} parent=11 // pred_fallthru
          _
      $region12: #{tpu_custom_call.1} parent=5 // pred_fallthru
        _
      %p969 = scmp.lt.s32.totalorder %s80, 2
      // Predicated region
      $region133: #{tpu_custom_call.1} parent=5 // pred_check
        %p970 = pneg %p969
      $region134: #{tpu_custom_call.1} parent=5 // pred_check_branch
        %972 = sbr.rel (%p970) target = $region136
      $region135: #{tpu_custom_call.1} parent=5 // pred_region
        // Predicated region
        $region137: #{tpu_custom_call.1} parent=135 // pred_check
          %p973 = pneg %p100
        $region138: #{tpu_custom_call.1} parent=135 // pred_check_branch
          %975 = sbr.rel (%p973) target = $region140
        $region139: #{tpu_custom_call.1} parent=135 // pred_region
          %p976 = scmp.lt.s32.totalorder %s80, 1
          %s977 = scalar_select %p976, %s80, 1
          %s978 = smul.addr %s977, 8
          %s979 = scalar_lea.vmem %s1, %s978
        $region140: #{tpu_custom_call.1} parent=135 // pred_fallthru
          _
        // Predicated region
        $region141: #{tpu_custom_call.1} parent=135 // pred_check
          %p980 = pneg %p126
        $region142: #{tpu_custom_call.1} parent=135 // pred_check_branch
          %982 = sbr.rel (%p980) target = $region144
        $region143: #{tpu_custom_call.1} parent=135 // pred_region
          %p983 = scmp.lt.s32.totalorder %s80, 1
          %s984 = scalar_select %p983, %s80, 1
          %s985 = smul.addr %s984, 2
          %s986 = smul.addr %s985, 8
          %s987 = scalar_lea.vmem %s3, %s986
        $region144: #{tpu_custom_call.1} parent=135 // pred_fallthru
          _
        // Predicated region
        $region145: #{tpu_custom_call.1} parent=135 // pred_check
          %p988 = pneg %p152
        $region146: #{tpu_custom_call.1} parent=135 // pred_check_branch
          %990 = sbr.rel (%p988) target = $region148
        $region147: #{tpu_custom_call.1} parent=135 // pred_region
          %p991 = scmp.lt.s32.totalorder %s80, 1
          %s992 = scalar_select %p991, %s80, 1
          %s993 = smul.addr %s992, 8
          %s994 = scalar_lea.vmem %s5, %s993
        $region148: #{tpu_custom_call.1} parent=135 // pred_fallthru
          _
      $region136: #{tpu_custom_call.1} parent=5 // pred_fallthru
        _
      %p995 = scmp.le.s32.totalorder 1, %s80
      %p996 = scmp.lt.s32.totalorder %s80, 3
      %p997 = pnand %p995, %p996
      %p998 = pneg %p997
      // Predicated region
      $region149: #{tpu_custom_call.1} parent=5 // pred_check
        _
      $region150: #{tpu_custom_call.1} parent=5 // pred_check_branch
        %1000 = sbr.rel (%p997) target = $region152
      $region151: #{tpu_custom_call.1} parent=5 // pred_region
        %s1001 = ssub.s32 %s80, 1
        // Predicated region
        $region153: #{tpu_custom_call.1} parent=151 // pred_check
          %p1002 = pneg %p200
        $region154: #{tpu_custom_call.1} parent=151 // pred_check_branch
          %1004 = sbr.rel (%p1002) target = $region156
        $region155: #{tpu_custom_call.1} parent=151 // pred_region
          %1005 = dma.done [#allocation3], 16
        $region156: #{tpu_custom_call.1} parent=151 // pred_fallthru
          _
        // Predicated region
        $region157: #{tpu_custom_call.1} parent=151 // pred_check
          %p1006 = pneg %p242
        $region158: #{tpu_custom_call.1} parent=151 // pred_check_branch
          %1008 = sbr.rel (%p1006) target = $region160
        $region159: #{tpu_custom_call.1} parent=151 // pred_region
          %1009 = dma.done [#allocation6], 16
        $region160: #{tpu_custom_call.1} parent=151 // pred_fallthru
          _
        // Predicated region
        $region161: #{tpu_custom_call.1} parent=151 // pred_check
          %p1010 = pneg %p284
        $region162: #{tpu_custom_call.1} parent=151 // pred_check_branch
          %1012 = sbr.rel (%p1010) target = $region164
        $region163: #{tpu_custom_call.1} parent=151 // pred_region
          %1013 = dma.done [#allocation6], 16
        $region164: #{tpu_custom_call.1} parent=151 // pred_fallthru
          _
        // Predicated region
        $region165: #{tpu_custom_call.1} parent=151 // pred_check
          %p1014 = pneg %p326
        $region166: #{tpu_custom_call.1} parent=151 // pred_check_branch
          %1016 = sbr.rel (%p1014) target = $region168
        $region167: #{tpu_custom_call.1} parent=151 // pred_region
          %1017 = dma.done [#allocation9], 16
        $region168: #{tpu_custom_call.1} parent=151 // pred_fallthru
          _
        // Predicated region
        $region169: #{tpu_custom_call.1} parent=151 // pred_check
          %p1018 = pneg %p368
        $region170: #{tpu_custom_call.1} parent=151 // pred_check_branch
          %1020 = sbr.rel (%p1018) target = $region172
        $region171: #{tpu_custom_call.1} parent=151 // pred_region
          %1021 = dma.done [#allocation9], 16
        $region172: #{tpu_custom_call.1} parent=151 // pred_fallthru
          _
        // Predicated region
        $region173: #{tpu_custom_call.1} parent=151 // pred_check
          %p1022 = pneg %p431
        $region174: #{tpu_custom_call.1} parent=151 // pred_check_branch
          %1024 = sbr.rel (%p1022) target = $region176
        $region175: #{tpu_custom_call.1} parent=151 // pred_region
          %1025 = dma.done [#allocation12], 128
        $region176: #{tpu_custom_call.1} parent=151 // pred_fallthru
          _
        %p1026 = scmp.lt.s32.totalorder %s85, 1
        %s1027 = scalar_select %p1026, %s85, 1
        %s1028 = smul.addr %s1027, 8
        %s1029 = scalar_lea.vmem %s1, %s1028
        %p1030 = pneg %p106
        %p1031 = pneg %p103
        %p1032 = scmp.lt.s32.totalorder %s85, 1
        %s1033 = scalar_select %p1032, %s85, 1
        %s1034 = smul.addr %s1033, 2
        %s1035 = smul.addr %s1034, 8
        %s1036 = scalar_lea.vmem %s3, %s1035
        %p1037 = pneg %p132
        %p1038 = pneg %p129
        %p1039 = scmp.lt.s32.totalorder %s85, 1
        %s1040 = scalar_select %p1039, %s85, 1
        %s1041 = smul.addr %s1040, 8
        %s1042 = scalar_lea.vmem %s5, %s1041
        %p1043 = pneg %p158
        %p1044 = pneg %p155
        %p1045 = pneg %p179
        %p1046 = pneg %p176
        %p1047 = pneg %p200
        %p1048 = pneg %p197
        %p1049 = pneg %p221
        %p1050 = pneg %p218
        %p1051 = pneg %p242
        %p1052 = pneg %p239
        %p1053 = pneg %p263
        %p1054 = pneg %p260
        %p1055 = pneg %p284
        %p1056 = pneg %p281
        %p1057 = pneg %p305
        %p1058 = pneg %p302
        %p1059 = pneg %p326
        %p1060 = pneg %p323
        %p1061 = pneg %p347
        %p1062 = pneg %p344
        %p1063 = pneg %p368
        %p1064 = pneg %p365
        %p1065 = pneg %p389
        %p1066 = pneg %p386
        %p1067 = pneg %p410
        %p1068 = pneg %p407
        %p1069 = pneg %p431
        %p1070 = pneg %p428
        %p1071 = pneg %p452
        %p1072 = pneg %p449
        %p1073 = pneg %p473
        %p1074 = pneg %p470
        %p1075 = pneg %p494
        %p1076 = pneg %p491
        %p1077 = pneg %p515
        %p1078 = pneg %p512
        %p1079 = pneg %p536
        %p1080 = pneg %p533
        %p1081 = pneg %p557
        %p1082 = pneg %p554
        %p1083 = pneg %p578
        %p1084 = pneg %p575
        %p1085 = pneg %p599
        %p1086 = pneg %p596
        %p1087 = pneg %p620
        %p1088 = pneg %p617
        %p1089 = pneg %p641
        %p1090 = pneg %p638
        %p1091 = pneg %p662
        %p1092 = pneg %p659
        %p1093 = pneg %p683
        %p1094 = pneg %p680
        %p1095 = pneg %p704
        %p1096 = pneg %p701
        %p1097 = pneg %p725
        %p1098 = pneg %p722
        %p1099 = pneg %p746
        %p1100 = pneg %p743
        %p1101 = pneg %p767
        %p1102 = pneg %p764
        %p1103 = pneg %p788
        %p1104 = pneg %p785
        %p1105 = pneg %p814
        %p1106 = pneg %p811
        %s1107 = sand.u32 %s801, 1
        %s1108 = scalar_lea.sflag [#allocation4], %s1107
        %s1109 = sand.u32 %s801, 1
        %s1110 = smul.addr %s1109, 8
        %s1111 = scalar_lea.vmem [#allocation13], %s1110
        %p1112 = scmp.lt.s32.totalorder %s85, 1
        %s1113 = scalar_select %p1112, %s85, 1
        %s1114 = smul.addr %s1113, 8
        %s1115 = scalar_lea.vmem %s1, %s1114
        %p1116 = scmp.lt.s32.totalorder %s85, 1
        %s1117 = scalar_select %p1116, %s85, 1
        %s1118 = smul.addr %s1117, 2
        %s1119 = smul.addr %s1118, 8
        %s1120 = scalar_lea.vmem %s3, %s1119
        %p1121 = scmp.lt.s32.totalorder %s85, 1
        %s1122 = scalar_select %p1121, %s85, 1
        %s1123 = smul.addr %s1122, 8
        %s1124 = scalar_lea.vmem %s5, %s1123
        %v1126 = vld [vmem:[%s1115] sm:$0xff]
        %v1127 = vld [vmem:[%s7] sm:$0xf]
        %v1128 = vld [vmem:[%s7 + $0x4] sm:$0xf]
        %v1129 = vld [vmem:[%s7 + $0x8] sm:$0xf]
        %v1130 = vld [vmem:[%s7 + $0xc] sm:$0xf]
        %v1131 = vld [vmem:[#allocation2] sm:$0x1]
        %v1132 = vld [vmem:[%s11] sm:$0xf]
        %v1133 = vld [vmem:[%s11 + $0x4] sm:$0xf]
        %v1134 = vld [vmem:[%s11 + $0x8] sm:$0xf]
        %v1135 = vld [vmem:[%s11 + $0xc] sm:$0xf]
        %v1136 = vld [vmem:[#allocation5] sm:$0x1]
        %v1137 = vld [vmem:[%s15] sm:$0xf]
        %v1138 = vld [vmem:[%s15 + $0x4] sm:$0xf]
        %v1139 = vld [vmem:[%s15 + $0x8] sm:$0xf]
        %v1140 = vld [vmem:[%s15 + $0xc] sm:$0xf]
        %v1141 = vld [vmem:[#allocation7] sm:$0x1]
        %v1142 = vld [vmem:[%s19] sm:$0x1]
        %v1143 = vld [vmem:[#allocation8] sm:$0x1]
        %v1144 = vpack.c.bf16 %v1126, %v1126
        %v1146 = vlaneseq
        %v1147 = vshrl.u32 %v1146, 7
        %v1148 = vsub.s32 0, %v1147
        %v1149 = vrot.slane %v1131, %v1148
        %v1155 = vunpack.c.l.b16 %v1127
        %v1156 = vunpack.c.l.b16 %v1128
        %v1157 = vunpack.c.l.b16 %v1129
        %v1158 = vunpack.c.l.b16 %v1130
        %v1159 = vpack.c.b16 %v1156, %v1155
        %v1160 = vpack.c.b16 %v1158, %v1157
        %vm1163 = vcmask 261120
        %v1165 = vsel %vm1163, %v1144, 0
        %1167 = vmatprep.subr.bf16.mxu0 0
        %1168 = vmatpush1.bf16.msra.mxu0 0
        %1169 = vmatprep.subr.bf16.mxu0 0
        %1170 = vmatpush1.bf16.msra.mxu0 0
        %1171 = vmatprep.subr.bf16.mxu0 0
        %1172 = vmatpush1.bf16.msra.mxu0 0
        %1173 = vmatprep.subr.bf16.mxu0 0
        %1174 = vmatpush1.bf16.msra.mxu0 0
        %1175 = vmatprep.subr.bf16.mxu0 0
        %1176 = vmatpush1.bf16.msra.mxu0 0
        %1177 = vmatprep.subr.bf16.mxu0 0
        %1178 = vmatpush1.bf16.msra.mxu0 0
        %1179 = vmatprep.subr.bf16.mxu0 0
        %1180 = vmatpush1.bf16.msra.mxu0 %v1160
        %1181 = vmatprep.subr.bf16.mxu0 0
        %1182 = vmatpush1.bf16.msra.mxu0 %v1159
        %1183 = vmatprep.subr.bf16.mxu0 0
        %1184 = vmatpush2.bf16.msra.mxu0 0
        %1185 = vmatprep.subr.bf16.mxu0 0
        %1186 = vmatpush2.bf16.msra.mxu0 0
        %1187 = vmatprep.subr.bf16.mxu0 0
        %1188 = vmatpush2.bf16.msra.mxu0 0
        %1189 = vmatprep.subr.bf16.mxu0 0
        %1190 = vmatpush2.bf16.msra.mxu0 0
        %1191 = vmatprep.subr.bf16.mxu0 0
        %1192 = vmatpush2.bf16.msra.mxu0 0
        %1193 = vmatprep.subr.bf16.mxu0 0
        %1194 = vmatpush2.bf16.msra.mxu0 0
        %1195 = vmatprep.subr.bf16.mxu0 0
        %1196 = vmatpush2.bf16.msra.mxu0 0
        %1197 = vmatprep.subr.bf16.mxu0 0
        %1198 = vmatpush2.bf16.msra.mxu0 0
        %1199 = vmatprep.mubr.bf16.mxu0 0
        %1200 = vmatmul.mubr.bf16.gmra.mxu0 %v1165
        %v1201 = vpop.f32.mrf.mxu0
        %v1202 = vadd.f32 %v1149, %v1201
        %v1203 = vpop.f32.mrf.mxu0
        %v1204 = vpop.f32.mrf.mxu0
        %v1205 = vpop.f32.mrf.mxu0
        %1206 = vdwg.mxu0
        %v1208 = vlaneseq
        %v1209 = vshrl.u32 %v1208, 7
        %v1210 = vsub.s32 0, %v1209
        %v1211 = vrot.slane %v1136, %v1210
        %v1217 = vunpack.c.l.b16 %v1132
        %v1218 = vunpack.c.l.b16 %v1133
        %v1219 = vunpack.c.l.b16 %v1134
        %v1220 = vunpack.c.l.b16 %v1135
        %v1221 = vpack.c.b16 %v1218, %v1217
        %v1222 = vpack.c.b16 %v1220, %v1219
        %1225 = vmatprep.subr.bf16.mxu0 0
        %1226 = vmatpush1.bf16.msra.mxu0 0
        %1227 = vmatprep.subr.bf16.mxu0 0
        %1228 = vmatpush1.bf16.msra.mxu0 0
        %1229 = vmatprep.subr.bf16.mxu0 0
        %1230 = vmatpush1.bf16.msra.mxu0 0
        %1231 = vmatprep.subr.bf16.mxu0 0
        %1232 = vmatpush1.bf16.msra.mxu0 0
        %1233 = vmatprep.subr.bf16.mxu0 0
        %1234 = vmatpush1.bf16.msra.mxu0 0
        %1235 = vmatprep.subr.bf16.mxu0 0
        %1236 = vmatpush1.bf16.msra.mxu0 0
        %1237 = vmatprep.subr.bf16.mxu0 0
        %1238 = vmatpush1.bf16.msra.mxu0 %v1222
        %1239 = vmatprep.subr.bf16.mxu0 0
        %1240 = vmatpush1.bf16.msra.mxu0 %v1221
        %1241 = vmatprep.subr.bf16.mxu0 0
        %1242 = vmatpush2.bf16.msra.mxu0 0
        %1243 = vmatprep.subr.bf16.mxu0 0
        %1244 = vmatpush2.bf16.msra.mxu0 0
        %1245 = vmatprep.subr.bf16.mxu0 0
        %1246 = vmatpush2.bf16.msra.mxu0 0
        %1247 = vmatprep.subr.bf16.mxu0 0
        %1248 = vmatpush2.bf16.msra.mxu0 0
        %1249 = vmatprep.subr.bf16.mxu0 0
        %1250 = vmatpush2.bf16.msra.mxu0 0
        %1251 = vmatprep.subr.bf16.mxu0 0
        %1252 = vmatpush2.bf16.msra.mxu0 0
        %1253 = vmatprep.subr.bf16.mxu0 0
        %1254 = vmatpush2.bf16.msra.mxu0 0
        %1255 = vmatprep.subr.bf16.mxu0 0
        %1256 = vmatpush2.bf16.msra.mxu0 0
        %1257 = vmatprep.mubr.bf16.mxu0 0
        %1258 = vmatmul.mubr.bf16.gmra.mxu0 %v1165
        %v1259 = vpop.f32.mrf.mxu0
        %v1260 = vadd.f32 %v1211, %v1259
        %v1261 = vpop.f32.mrf.mxu0
        %v1262 = vpop.f32.mrf.mxu0
        %v1263 = vpop.f32.mrf.mxu0
        %1264 = vdwg.mxu0
        %v1265 = vpack.c.bf16 %v1202, %v1202
        %v1266 = vpack.c.bf16 %v1260, %v1260
        %vm1267 = vcmask 64512
        %v1269 = vsel %vm1267, %v1265, 0
        %v1272 = vsel %vm1267, %v1266, 0
        %1274 = vmatprep.subr.bf16.mxu0 0
        %1275 = vmatpush1.bf16.xpose.msra.mxu0 0
        %1276 = vmatprep.subr.bf16.mxu0 0
        %1277 = vmatpush1.bf16.xpose.msra.mxu0 0
        %1278 = vmatprep.subr.bf16.mxu0 0
        %1279 = vmatpush1.bf16.xpose.msra.mxu0 0
        %1280 = vmatprep.subr.bf16.mxu0 0
        %1281 = vmatpush1.bf16.xpose.msra.mxu0 0
        %1282 = vmatprep.subr.bf16.mxu0 0
        %1283 = vmatpush1.bf16.xpose.msra.mxu0 0
        %1284 = vmatprep.subr.bf16.mxu0 0
        %1285 = vmatpush1.bf16.xpose.msra.mxu0 0
        %1286 = vmatprep.subr.bf16.mxu0 0
        %1287 = vmatpush1.bf16.xpose.msra.mxu0 0
        %1288 = vmatprep.subr.bf16.mxu0 0
        %1289 = vmatpush1.bf16.xpose.msra.mxu0 %v1272
        %1290 = vmatprep.subr.bf16.mxu0 0
        %1291 = vmatpush2.bf16.xpose.msra.mxu0 0
        %1292 = vmatprep.subr.bf16.mxu0 0
        %1293 = vmatpush2.bf16.xpose.msra.mxu0 0
        %1294 = vmatprep.subr.bf16.mxu0 0
        %1295 = vmatpush2.bf16.xpose.msra.mxu0 0
        %1296 = vmatprep.subr.bf16.mxu0 0
        %1297 = vmatpush2.bf16.xpose.msra.mxu0 0
        %1298 = vmatprep.subr.bf16.mxu0 0
        %1299 = vmatpush2.bf16.xpose.msra.mxu0 0
        %1300 = vmatprep.subr.bf16.mxu0 0
        %1301 = vmatpush2.bf16.xpose.msra.mxu0 0
        %1302 = vmatprep.subr.bf16.mxu0 0
        %1303 = vmatpush2.bf16.xpose.msra.mxu0 0
        %1304 = vmatprep.subr.bf16.mxu0 0
        %1305 = vmatpush2.bf16.xpose.msra.mxu0 0
        %1306 = vmatprep.mubr.bf16.mxu0 0
        %1307 = vmatmul.mubr.bf16.gmra.mxu0 %v1269
        %v1308 = vpop.f32.mrf.mxu0
        %v1309 = vadd.f32 0.0, %v1308
        %v1310 = vpop.f32.mrf.mxu0
        %v1311 = vpop.f32.mrf.mxu0
        %v1312 = vpop.f32.mrf.mxu0
        %1313 = vdwg.mxu0
        %v1314 = vmul.f32 %v1309, 0.35355338
        %v1315 = vsel %vm1267, %v1314, -inf
        %1316 = vmax.xlane.f32.xlu0 %v1315
        %v1317 = vpop.xlane.xlu0 %1316
        %v1318 = vsub.f32 %v1314, %v1317
        %v1319 = vmul.f32 %v1318, 1.442695
        %v1320 = vpow.pop %v1319
        %v1321 = vsel %vm1267, %v1320, 0.0
        %1322 = vadd.xlane.f32.xlu0 %v1321
        %v1323 = vpop.xlane.xlu0 %1322
        %v1324 = vrcp.pop %v1323
        %v1325 = vmul.f32 %v1320, %v1324
        %v1326 = vpack.c.bf16 %v1325, %v1325
        %1328 = vrot.lane.b32.xlu0 %v1266, 96
        %v1329 = vpop.permute.xlu0 %1328
        %v1331 = vsel %vm1267, %v1326, 0
        %vm1333 = vcmask 1043456
        %v1335 = vsel %vm1333, %v1329, 0
        %1337 = vmatprep.subr.bf16.mxu0 0
        %1338 = vmatpush1.bf16.msra.mxu0 0
        %1339 = vmatprep.subr.bf16.mxu0 0
        %1340 = vmatpush1.bf16.msra.mxu0 0
        %1341 = vmatprep.subr.bf16.mxu0 0
        %1342 = vmatpush1.bf16.msra.mxu0 0
        %1343 = vmatprep.subr.bf16.mxu0 0
        %1344 = vmatpush1.bf16.msra.mxu0 0
        %1345 = vmatprep.subr.bf16.mxu0 0
        %1346 = vmatpush1.bf16.msra.mxu0 0
        %1347 = vmatprep.subr.bf16.mxu0 0
        %1348 = vmatpush1.bf16.msra.mxu0 0
        %1349 = vmatprep.subr.bf16.mxu0 0
        %1350 = vmatpush1.bf16.msra.mxu0 0
        %1351 = vmatprep.subr.bf16.mxu0 0
        %1352 = vmatpush1.bf16.msra.mxu0 %v1335
        %1353 = vmatprep.subr.bf16.mxu0 0
        %1354 = vmatpush2.bf16.msra.mxu0 0
        %1355 = vmatprep.subr.bf16.mxu0 0
        %1356 = vmatpush2.bf16.msra.mxu0 0
        %1357 = vmatprep.subr.bf16.mxu0 0
        %1358 = vmatpush2.bf16.msra.mxu0 0
        %1359 = vmatprep.subr.bf16.mxu0 0
        %1360 = vmatpush2.bf16.msra.mxu0 0
        %1361 = vmatprep.subr.bf16.mxu0 0
        %1362 = vmatpush2.bf16.msra.mxu0 0
        %1363 = vmatprep.subr.bf16.mxu0 0
        %1364 = vmatpush2.bf16.msra.mxu0 0
        %1365 = vmatprep.subr.bf16.mxu0 0
        %1366 = vmatpush2.bf16.msra.mxu0 0
        %1367 = vmatprep.subr.bf16.mxu0 0
        %1368 = vmatpush2.bf16.msra.mxu0 0
        %1369 = vmatprep.mubr.bf16.mxu0 0
        %1370 = vmatmul.mubr.bf16.gmra.mxu0 %v1331
        %v1371 = vpop.f32.mrf.mxu0
        %v1372 = vadd.f32 0.0, %v1371
        %v1373 = vpop.f32.mrf.mxu0
        %v1374 = vpop.f32.mrf.mxu0
        %v1375 = vpop.f32.mrf.mxu0
        %1376 = vdwg.mxu0
        %1378 = vrot.lane.b32.xlu0 %v1265, 120
        %v1379 = vpop.permute.xlu0 %1378
        %1380 = vrot.lane.b32.xlu0 %v1266, 120
        %v1381 = vpop.permute.xlu0 %1380
        %v1383 = vsel %vm1267, %v1379, 0
        %v1386 = vsel %vm1267, %v1381, 0
        %1388 = vmatprep.subr.bf16.mxu0 0
        %1389 = vmatpush1.bf16.xpose.msra.mxu0 0
        %1390 = vmatprep.subr.bf16.mxu0 0
        %1391 = vmatpush1.bf16.xpose.msra.mxu0 0
        %1392 = vmatprep.subr.bf16.mxu0 0
        %1393 = vmatpush1.bf16.xpose.msra.mxu0 0
        %1394 = vmatprep.subr.bf16.mxu0 0
        %1395 = vmatpush1.bf16.xpose.msra.mxu0 0
        %1396 = vmatprep.subr.bf16.mxu0 0
        %1397 = vmatpush1.bf16.xpose.msra.mxu0 0
        %1398 = vmatprep.subr.bf16.mxu0 0
        %1399 = vmatpush1.bf16.xpose.msra.mxu0 0
        %1400 = vmatprep.subr.bf16.mxu0 0
        %1401 = vmatpush1.bf16.xpose.msra.mxu0 0
        %1402 = vmatprep.subr.bf16.mxu0 0
        %1403 = vmatpush1.bf16.xpose.msra.mxu0 %v1386
        %1404 = vmatprep.subr.bf16.mxu0 0
        %1405 = vmatpush2.bf16.xpose.msra.mxu0 0
        %1406 = vmatprep.subr.bf16.mxu0 0
        %1407 = vmatpush2.bf16.xpose.msra.mxu0 0
        %1408 = vmatprep.subr.bf16.mxu0 0
        %1409 = vmatpush2.bf16.xpose.msra.mxu0 0
        %1410 = vmatprep.subr.bf16.mxu0 0
        %1411 = vmatpush2.bf16.xpose.msra.mxu0 0
        %1412 = vmatprep.subr.bf16.mxu0 0
        %1413 = vmatpush2.bf16.xpose.msra.mxu0 0
        %1414 = vmatprep.subr.bf16.mxu0 0
        %1415 = vmatpush2.bf16.xpose.msra.mxu0 0
        %1416 = vmatprep.subr.bf16.mxu0 0
        %1417 = vmatpush2.bf16.xpose.msra.mxu0 0
        %1418 = vmatprep.subr.bf16.mxu0 0
        %1419 = vmatpush2.bf16.xpose.msra.mxu0 0
        %1420 = vmatprep.mubr.bf16.mxu0 0
        %1421 = vmatmul.mubr.bf16.gmra.mxu0 %v1383
        %v1422 = vpop.f32.mrf.mxu0
        %v1423 = vadd.f32 0.0, %v1422
        %v1424 = vpop.f32.mrf.mxu0
        %v1425 = vpop.f32.mrf.mxu0
        %v1426 = vpop.f32.mrf.mxu0
        %1427 = vdwg.mxu0
        %v1428 = vmul.f32 %v1423, 0.35355338
        %v1429 = vsel %vm1267, %v1428, -inf
        %1430 = vmax.xlane.f32.xlu0 %v1429
        %v1431 = vpop.xlane.xlu0 %1430
        %v1432 = vsub.f32 %v1428, %v1431
        %v1433 = vmul.f32 %v1432, 1.442695
        %v1434 = vpow.pop %v1433
        %v1435 = vsel %vm1267, %v1434, 0.0
        %1436 = vadd.xlane.f32.xlu0 %v1435
        %v1437 = vpop.xlane.xlu0 %1436
        %v1438 = vrcp.pop %v1437
        %v1439 = vmul.f32 %v1434, %v1438
        %v1440 = vpack.c.bf16 %v1439, %v1439
        %1441 = vrot.lane.b32.xlu0 %v1266, 88
        %v1442 = vpop.permute.xlu0 %1441
        %v1444 = vsel %vm1267, %v1440, 0
        %v1447 = vsel %vm1333, %v1442, 0
        %1449 = vmatprep.subr.bf16.mxu0 0
        %1450 = vmatpush1.bf16.msra.mxu0 0
        %1451 = vmatprep.subr.bf16.mxu0 0
        %1452 = vmatpush1.bf16.msra.mxu0 0
        %1453 = vmatprep.subr.bf16.mxu0 0
        %1454 = vmatpush1.bf16.msra.mxu0 0
        %1455 = vmatprep.subr.bf16.mxu0 0
        %1456 = vmatpush1.bf16.msra.mxu0 0
        %1457 = vmatprep.subr.bf16.mxu0 0
        %1458 = vmatpush1.bf16.msra.mxu0 0
        %1459 = vmatprep.subr.bf16.mxu0 0
        %1460 = vmatpush1.bf16.msra.mxu0 0
        %1461 = vmatprep.subr.bf16.mxu0 0
        %1462 = vmatpush1.bf16.msra.mxu0 0
        %1463 = vmatprep.subr.bf16.mxu0 0
        %1464 = vmatpush1.bf16.msra.mxu0 %v1447
        %1465 = vmatprep.subr.bf16.mxu0 0
        %1466 = vmatpush2.bf16.msra.mxu0 0
        %1467 = vmatprep.subr.bf16.mxu0 0
        %1468 = vmatpush2.bf16.msra.mxu0 0
        %1469 = vmatprep.subr.bf16.mxu0 0
        %1470 = vmatpush2.bf16.msra.mxu0 0
        %1471 = vmatprep.subr.bf16.mxu0 0
        %1472 = vmatpush2.bf16.msra.mxu0 0
        %1473 = vmatprep.subr.bf16.mxu0 0
        %1474 = vmatpush2.bf16.msra.mxu0 0
        %1475 = vmatprep.subr.bf16.mxu0 0
        %1476 = vmatpush2.bf16.msra.mxu0 0
        %1477 = vmatprep.subr.bf16.mxu0 0
        %1478 = vmatpush2.bf16.msra.mxu0 0
        %1479 = vmatprep.subr.bf16.mxu0 0
        %1480 = vmatpush2.bf16.msra.mxu0 0
        %1481 = vmatprep.mubr.bf16.mxu0 0
        %1482 = vmatmul.mubr.bf16.gmra.mxu0 %v1444
        %v1483 = vpop.f32.mrf.mxu0
        %v1484 = vadd.f32 0.0, %v1483
        %v1485 = vpop.f32.mrf.mxu0
        %v1486 = vpop.f32.mrf.mxu0
        %v1487 = vpop.f32.mrf.mxu0
        %1488 = vdwg.mxu0
        %1489 = vrot.lane.b32.xlu0 %v1265, 112
        %v1490 = vpop.permute.xlu0 %1489
        %1491 = vrot.lane.b32.xlu0 %v1266, 112
        %v1492 = vpop.permute.xlu0 %1491
        %v1494 = vsel %vm1267, %v1490, 0
        %v1497 = vsel %vm1267, %v1492, 0
        %1499 = vmatprep.subr.bf16.mxu0 0
        %1500 = vmatpush1.bf16.xpose.msra.mxu0 0
        %1501 = vmatprep.subr.bf16.mxu0 0
        %1502 = vmatpush1.bf16.xpose.msra.mxu0 0
        %1503 = vmatprep.subr.bf16.mxu0 0
        %1504 = vmatpush1.bf16.xpose.msra.mxu0 0
        %1505 = vmatprep.subr.bf16.mxu0 0
        %1506 = vmatpush1.bf16.xpose.msra.mxu0 0
        %1507 = vmatprep.subr.bf16.mxu0 0
        %1508 = vmatpush1.bf16.xpose.msra.mxu0 0
        %1509 = vmatprep.subr.bf16.mxu0 0
        %1510 = vmatpush1.bf16.xpose.msra.mxu0 0
        %1511 = vmatprep.subr.bf16.mxu0 0
        %1512 = vmatpush1.bf16.xpose.msra.mxu0 0
        %1513 = vmatprep.subr.bf16.mxu0 0
        %1514 = vmatpush1.bf16.xpose.msra.mxu0 %v1497
        %1515 = vmatprep.subr.bf16.mxu0 0
        %1516 = vmatpush2.bf16.xpose.msra.mxu0 0
        %1517 = vmatprep.subr.bf16.mxu0 0
        %1518 = vmatpush2.bf16.xpose.msra.mxu0 0
        %1519 = vmatprep.subr.bf16.mxu0 0
        %1520 = vmatpush2.bf16.xpose.msra.mxu0 0
        %1521 = vmatprep.subr.bf16.mxu0 0
        %1522 = vmatpush2.bf16.xpose.msra.mxu0 0
        %1523 = vmatprep.subr.bf16.mxu0 0
        %1524 = vmatpush2.bf16.xpose.msra.mxu0 0
        %1525 = vmatprep.subr.bf16.mxu0 0
        %1526 = vmatpush2.bf16.xpose.msra.mxu0 0
        %1527 = vmatprep.subr.bf16.mxu0 0
        %1528 = vmatpush2.bf16.xpose.msra.mxu0 0
        %1529 = vmatprep.subr.bf16.mxu0 0
        %1530 = vmatpush2.bf16.xpose.msra.mxu0 0
        %1531 = vmatprep.mubr.bf16.mxu0 0
        %1532 = vmatmul.mubr.bf16.gmra.mxu0 %v1494
        %v1533 = vpop.f32.mrf.mxu0
        %v1534 = vadd.f32 0.0, %v1533
        %v1535 = vpop.f32.mrf.mxu0
        %v1536 = vpop.f32.mrf.mxu0
        %v1537 = vpop.f32.mrf.mxu0
        %1538 = vdwg.mxu0
        %v1539 = vmul.f32 %v1534, 0.35355338
        %v1540 = vsel %vm1267, %v1539, -inf
        %1541 = vmax.xlane.f32.xlu0 %v1540
        %v1542 = vpop.xlane.xlu0 %1541
        %v1543 = vsub.f32 %v1539, %v1542
        %v1544 = vmul.f32 %v1543, 1.442695
        %v1545 = vpow.pop %v1544
        %v1546 = vsel %vm1267, %v1545, 0.0
        %1547 = vadd.xlane.f32.xlu0 %v1546
        %v1548 = vpop.xlane.xlu0 %1547
        %v1549 = vrcp.pop %v1548
        %v1550 = vmul.f32 %v1545, %v1549
        %v1551 = vpack.c.bf16 %v1550, %v1550
        %1552 = vrot.lane.b32.xlu0 %v1266, 80
        %v1553 = vpop.permute.xlu0 %1552
        %v1555 = vsel %vm1267, %v1551, 0
        %v1558 = vsel %vm1333, %v1553, 0
        %1560 = vmatprep.subr.bf16.mxu0 0
        %1561 = vmatpush1.bf16.msra.mxu0 0
        %1562 = vmatprep.subr.bf16.mxu0 0
        %1563 = vmatpush1.bf16.msra.mxu0 0
        %1564 = vmatprep.subr.bf16.mxu0 0
        %1565 = vmatpush1.bf16.msra.mxu0 0
        %1566 = vmatprep.subr.bf16.mxu0 0
        %1567 = vmatpush1.bf16.msra.mxu0 0
        %1568 = vmatprep.subr.bf16.mxu0 0
        %1569 = vmatpush1.bf16.msra.mxu0 0
        %1570 = vmatprep.subr.bf16.mxu0 0
        %1571 = vmatpush1.bf16.msra.mxu0 0
        %1572 = vmatprep.subr.bf16.mxu0 0
        %1573 = vmatpush1.bf16.msra.mxu0 0
        %1574 = vmatprep.subr.bf16.mxu0 0
        %1575 = vmatpush1.bf16.msra.mxu0 %v1558
        %1576 = vmatprep.subr.bf16.mxu0 0
        %1577 = vmatpush2.bf16.msra.mxu0 0
        %1578 = vmatprep.subr.bf16.mxu0 0
        %1579 = vmatpush2.bf16.msra.mxu0 0
        %1580 = vmatprep.subr.bf16.mxu0 0
        %1581 = vmatpush2.bf16.msra.mxu0 0
        %1582 = vmatprep.subr.bf16.mxu0 0
        %1583 = vmatpush2.bf16.msra.mxu0 0
        %1584 = vmatprep.subr.bf16.mxu0 0
        %1585 = vmatpush2.bf16.msra.mxu0 0
        %1586 = vmatprep.subr.bf16.mxu0 0
        %1587 = vmatpush2.bf16.msra.mxu0 0
        %1588 = vmatprep.subr.bf16.mxu0 0
        %1589 = vmatpush2.bf16.msra.mxu0 0
        %1590 = vmatprep.subr.bf16.mxu0 0
        %1591 = vmatpush2.bf16.msra.mxu0 0
        %1592 = vmatprep.mubr.bf16.mxu0 0
        %1593 = vmatmul.mubr.bf16.gmra.mxu0 %v1555
        %v1594 = vpop.f32.mrf.mxu0
        %v1595 = vadd.f32 0.0, %v1594
        %v1596 = vpop.f32.mrf.mxu0
        %v1597 = vpop.f32.mrf.mxu0
        %v1598 = vpop.f32.mrf.mxu0
        %1599 = vdwg.mxu0
        %1600 = vrot.lane.b32.xlu0 %v1265, 104
        %v1601 = vpop.permute.xlu0 %1600
        %1602 = vrot.lane.b32.xlu0 %v1266, 104
        %v1603 = vpop.permute.xlu0 %1602
        %v1605 = vsel %vm1267, %v1601, 0
        %v1608 = vsel %vm1267, %v1603, 0
        %1610 = vmatprep.subr.bf16.mxu0 0
        %1611 = vmatpush1.bf16.xpose.msra.mxu0 0
        %1612 = vmatprep.subr.bf16.mxu0 0
        %1613 = vmatpush1.bf16.xpose.msra.mxu0 0
        %1614 = vmatprep.subr.bf16.mxu0 0
        %1615 = vmatpush1.bf16.xpose.msra.mxu0 0
        %1616 = vmatprep.subr.bf16.mxu0 0
        %1617 = vmatpush1.bf16.xpose.msra.mxu0 0
        %1618 = vmatprep.subr.bf16.mxu0 0
        %1619 = vmatpush1.bf16.xpose.msra.mxu0 0
        %1620 = vmatprep.subr.bf16.mxu0 0
        %1621 = vmatpush1.bf16.xpose.msra.mxu0 0
        %1622 = vmatprep.subr.bf16.mxu0 0
        %1623 = vmatpush1.bf16.xpose.msra.mxu0 0
        %1624 = vmatprep.subr.bf16.mxu0 0
        %1625 = vmatpush1.bf16.xpose.msra.mxu0 %v1608
        %1626 = vmatprep.subr.bf16.mxu0 0
        %1627 = vmatpush2.bf16.xpose.msra.mxu0 0
        %1628 = vmatprep.subr.bf16.mxu0 0
        %1629 = vmatpush2.bf16.xpose.msra.mxu0 0
        %1630 = vmatprep.subr.bf16.mxu0 0
        %1631 = vmatpush2.bf16.xpose.msra.mxu0 0
        %1632 = vmatprep.subr.bf16.mxu0 0
        %1633 = vmatpush2.bf16.xpose.msra.mxu0 0
        %1634 = vmatprep.subr.bf16.mxu0 0
        %1635 = vmatpush2.bf16.xpose.msra.mxu0 0
        %1636 = vmatprep.subr.bf16.mxu0 0
        %1637 = vmatpush2.bf16.xpose.msra.mxu0 0
        %1638 = vmatprep.subr.bf16.mxu0 0
        %1639 = vmatpush2.bf16.xpose.msra.mxu0 0
        %1640 = vmatprep.subr.bf16.mxu0 0
        %1641 = vmatpush2.bf16.xpose.msra.mxu0 0
        %1642 = vmatprep.mubr.bf16.mxu0 0
        %1643 = vmatmul.mubr.bf16.gmra.mxu0 %v1605
        %v1644 = vpop.f32.mrf.mxu0
        %v1645 = vadd.f32 0.0, %v1644
        %v1646 = vpop.f32.mrf.mxu0
        %v1647 = vpop.f32.mrf.mxu0
        %v1648 = vpop.f32.mrf.mxu0
        %1649 = vdwg.mxu0
        %v1650 = vmul.f32 %v1645, 0.35355338
        %v1651 = vsel %vm1267, %v1650, -inf
        %1652 = vmax.xlane.f32.xlu0 %v1651
        %v1653 = vpop.xlane.xlu0 %1652
        %v1654 = vsub.f32 %v1650, %v1653
        %v1655 = vmul.f32 %v1654, 1.442695
        %v1656 = vpow.pop %v1655
        %v1657 = vsel %vm1267, %v1656, 0.0
        %1658 = vadd.xlane.f32.xlu0 %v1657
        %v1659 = vpop.xlane.xlu0 %1658
        %v1660 = vrcp.pop %v1659
        %v1661 = vmul.f32 %v1656, %v1660
        %v1662 = vpack.c.bf16 %v1661, %v1661
        %1663 = vrot.lane.b32.xlu0 %v1266, 72
        %v1664 = vpop.permute.xlu0 %1663
        %v1666 = vsel %vm1267, %v1662, 0
        %v1669 = vsel %vm1333, %v1664, 0
        %1671 = vmatprep.subr.bf16.mxu0 0
        %1672 = vmatpush1.bf16.msra.mxu0 0
        %1673 = vmatprep.subr.bf16.mxu0 0
        %1674 = vmatpush1.bf16.msra.mxu0 0
        %1675 = vmatprep.subr.bf16.mxu0 0
        %1676 = vmatpush1.bf16.msra.mxu0 0
        %1677 = vmatprep.subr.bf16.mxu0 0
        %1678 = vmatpush1.bf16.msra.mxu0 0
        %1679 = vmatprep.subr.bf16.mxu0 0
        %1680 = vmatpush1.bf16.msra.mxu0 0
        %1681 = vmatprep.subr.bf16.mxu0 0
        %1682 = vmatpush1.bf16.msra.mxu0 0
        %1683 = vmatprep.subr.bf16.mxu0 0
        %1684 = vmatpush1.bf16.msra.mxu0 0
        %1685 = vmatprep.subr.bf16.mxu0 0
        %1686 = vmatpush1.bf16.msra.mxu0 %v1669
        %1687 = vmatprep.subr.bf16.mxu0 0
        %1688 = vmatpush2.bf16.msra.mxu0 0
        %1689 = vmatprep.subr.bf16.mxu0 0
        %1690 = vmatpush2.bf16.msra.mxu0 0
        %1691 = vmatprep.subr.bf16.mxu0 0
        %1692 = vmatpush2.bf16.msra.mxu0 0
        %1693 = vmatprep.subr.bf16.mxu0 0
        %1694 = vmatpush2.bf16.msra.mxu0 0
        %1695 = vmatprep.subr.bf16.mxu0 0
        %1696 = vmatpush2.bf16.msra.mxu0 0
        %1697 = vmatprep.subr.bf16.mxu0 0
        %1698 = vmatpush2.bf16.msra.mxu0 0
        %1699 = vmatprep.subr.bf16.mxu0 0
        %1700 = vmatpush2.bf16.msra.mxu0 0
        %1701 = vmatprep.subr.bf16.mxu0 0
        %1702 = vmatpush2.bf16.msra.mxu0 0
        %1703 = vmatprep.mubr.bf16.mxu0 0
        %1704 = vmatmul.mubr.bf16.gmra.mxu0 %v1666
        %v1705 = vpop.f32.mrf.mxu0
        %v1706 = vadd.f32 0.0, %v1705
        %v1707 = vpop.f32.mrf.mxu0
        %v1708 = vpop.f32.mrf.mxu0
        %v1709 = vpop.f32.mrf.mxu0
        %1710 = vdwg.mxu0
        %1712 = vrot.lane.b32.xlu0 %v1484, 8
        %v1713 = vpop.permute.xlu0 %1712
        %1716 = vrot.lane.b32.xlu0 %v1595, 16
        %v1717 = vpop.permute.xlu0 %1716
        %1720 = vrot.lane.b32.xlu0 %v1706, 24
        %v1721 = vpop.permute.xlu0 %1720
        %v1723 = vsel %vm1267, %v1372, %v1713
        %vm1724 = vcmask 130048
        %v1725 = vsel %vm1724, %v1723, %v1717
        %vm1726 = vcmask 195584
        %v1727 = vsel %vm1726, %v1725, %v1721
        %v1728 = vpack.c.bf16 %v1727, %v1727
        %v1730 = vlaneseq
        %v1731 = vshrl.u32 %v1730, 7
        %v1732 = vsub.s32 0, %v1731
        %v1733 = vrot.slane %v1141, %v1732
        %v1739 = vunpack.c.l.b16 %v1137
        %v1740 = vunpack.c.l.b16 %v1138
        %v1741 = vunpack.c.l.b16 %v1139
        %v1742 = vunpack.c.l.b16 %v1140
        %v1743 = vpack.c.b16 %v1740, %v1739
        %v1744 = vpack.c.b16 %v1742, %v1741
        %v1748 = vsel %vm1163, %v1728, 0
        %1750 = vmatprep.subr.bf16.mxu0 0
        %1751 = vmatpush1.bf16.msra.mxu0 0
        %1752 = vmatprep.subr.bf16.mxu0 0
        %1753 = vmatpush1.bf16.msra.mxu0 0
        %1754 = vmatprep.subr.bf16.mxu0 0
        %1755 = vmatpush1.bf16.msra.mxu0 0
        %1756 = vmatprep.subr.bf16.mxu0 0
        %1757 = vmatpush1.bf16.msra.mxu0 0
        %1758 = vmatprep.subr.bf16.mxu0 0
        %1759 = vmatpush1.bf16.msra.mxu0 0
        %1760 = vmatprep.subr.bf16.mxu0 0
        %1761 = vmatpush1.bf16.msra.mxu0 0
        %1762 = vmatprep.subr.bf16.mxu0 0
        %1763 = vmatpush1.bf16.msra.mxu0 %v1744
        %1764 = vmatprep.subr.bf16.mxu0 0
        %1765 = vmatpush1.bf16.msra.mxu0 %v1743
        %1766 = vmatprep.subr.bf16.mxu0 0
        %1767 = vmatpush2.bf16.msra.mxu0 0
        %1768 = vmatprep.subr.bf16.mxu0 0
        %1769 = vmatpush2.bf16.msra.mxu0 0
        %1770 = vmatprep.subr.bf16.mxu0 0
        %1771 = vmatpush2.bf16.msra.mxu0 0
        %1772 = vmatprep.subr.bf16.mxu0 0
        %1773 = vmatpush2.bf16.msra.mxu0 0
        %1774 = vmatprep.subr.bf16.mxu0 0
        %1775 = vmatpush2.bf16.msra.mxu0 0
        %1776 = vmatprep.subr.bf16.mxu0 0
        %1777 = vmatpush2.bf16.msra.mxu0 0
        %1778 = vmatprep.subr.bf16.mxu0 0
        %1779 = vmatpush2.bf16.msra.mxu0 0
        %1780 = vmatprep.subr.bf16.mxu0 0
        %1781 = vmatpush2.bf16.msra.mxu0 0
        %1782 = vmatprep.mubr.bf16.mxu0 0
        %1783 = vmatmul.mubr.bf16.gmra.mxu0 %v1748
        %v1784 = vpop.f32.mrf.mxu0
        %v1785 = vadd.f32 %v1733, %v1784
        %v1786 = vpop.f32.mrf.mxu0
        %v1787 = vpop.f32.mrf.mxu0
        %v1788 = vpop.f32.mrf.mxu0
        %1789 = vdwg.mxu0
        %v1790 = vadd.f32 %v1126, %v1785
        %v1791 = vsel %vm1163, %v1790, 0.0
        %1792 = vadd.xlane.f32.xlu0 %v1791
        %v1793 = vpop.xlane.xlu0 %1792
        %v1794 = vrcp.pop 32.0
        %v1795 = vmul.f32 %v1793, %v1794
        %v1796 = vsub.f32 %v1790, %v1795
        %v1797 = vmul.f32 %v1796, %v1796
        %v1798 = vsel %vm1163, %v1797, 0.0
        %1799 = vadd.xlane.f32.xlu0 %v1798
        %v1800 = vpop.xlane.xlu0 %1799
        %v1801 = vmul.f32 %v1800, %v1794
        %v1802 = vadd.f32 %v1801, 1e-05
        %v1803 = vrsqrt.pop %v1802
        %v1804 = vmul.f32 %v1796, %v1803
        %v1806 = vlaneseq
        %v1807 = vshrl.u32 %v1806, 7
        %v1808 = vsub.s32 0, %v1807
        %v1809 = vrot.slane %v1142, %v1808
        %v1811 = vmul.f32 %v1804, %v1809
        %v1813 = vlaneseq
        %v1814 = vshrl.u32 %v1813, 7
        %v1815 = vsub.s32 0, %v1814
        %v1816 = vrot.slane %v1143, %v1815
        %v1818 = vadd.f32 %v1811, %v1816
        %v1819 = vld [vmem:[%s1124] sm:$0x1f]
        %v1820 = vld [vmem:[%s23] sm:$0xf]
        %v1821 = vld [vmem:[%s23 + $0x4] sm:$0xf]
        %v1822 = vld [vmem:[%s23 + $0x8] sm:$0xf]
        %v1823 = vld [vmem:[%s23 + $0xc] sm:$0xf]
        %v1824 = vld [vmem:[#allocation10] sm:$0x1]
        %v1825 = vld [vmem:[%s27] sm:$0xf]
        %v1826 = vld [vmem:[%s27 + $0x4] sm:$0xf]
        %v1827 = vld [vmem:[%s29] sm:$0x1]
        %v1828 = vld [vmem:[#allocation11] sm:$0xf]
        %v1829 = vld [vmem:[#allocation11 + $0x4] sm:$0xf]
        %v1830 = vld [vmem:[%s33] sm:$0x1]
        %v1831 = vld [vmem:[%s35] sm:$0x1]
        %v1832 = vld [vmem:[%s37] sm:$0x1]
        %v1833 = vpack.c.bf16 %v1818, %v1818
        %v1835 = vlaneseq
        %v1836 = vshrl.u32 %v1835, 7
        %v1837 = vsub.s32 0, %v1836
        %v1838 = vrot.slane %v1824, %v1837
        %v1844 = vunpack.c.l.b16 %v1820
        %v1845 = vunpack.c.l.b16 %v1821
        %v1846 = vunpack.c.l.b16 %v1822
        %v1847 = vunpack.c.l.b16 %v1823
        %v1848 = vpack.c.b16 %v1845, %v1844
        %v1849 = vpack.c.b16 %v1847, %v1846
        %v1853 = vsel %vm1163, %v1833, 0
        %1855 = vmatprep.subr.bf16.mxu0 0
        %1856 = vmatpush1.bf16.msra.mxu0 0
        %1857 = vmatprep.subr.bf16.mxu0 0
        %1858 = vmatpush1.bf16.msra.mxu0 0
        %1859 = vmatprep.subr.bf16.mxu0 0
        %1860 = vmatpush1.bf16.msra.mxu0 0
        %1861 = vmatprep.subr.bf16.mxu0 0
        %1862 = vmatpush1.bf16.msra.mxu0 0
        %1863 = vmatprep.subr.bf16.mxu0 0
        %1864 = vmatpush1.bf16.msra.mxu0 0
        %1865 = vmatprep.subr.bf16.mxu0 0
        %1866 = vmatpush1.bf16.msra.mxu0 0
        %1867 = vmatprep.subr.bf16.mxu0 0
        %1868 = vmatpush1.bf16.msra.mxu0 %v1849
        %1869 = vmatprep.subr.bf16.mxu0 0
        %1870 = vmatpush1.bf16.msra.mxu0 %v1848
        %1871 = vmatprep.subr.bf16.mxu0 0
        %1872 = vmatpush2.bf16.msra.mxu0 0
        %1873 = vmatprep.subr.bf16.mxu0 0
        %1874 = vmatpush2.bf16.msra.mxu0 0
        %1875 = vmatprep.subr.bf16.mxu0 0
        %1876 = vmatpush2.bf16.msra.mxu0 0
        %1877 = vmatprep.subr.bf16.mxu0 0
        %1878 = vmatpush2.bf16.msra.mxu0 0
        %1879 = vmatprep.subr.bf16.mxu0 0
        %1880 = vmatpush2.bf16.msra.mxu0 0
        %1881 = vmatprep.subr.bf16.mxu0 0
        %1882 = vmatpush2.bf16.msra.mxu0 0
        %1883 = vmatprep.subr.bf16.mxu0 0
        %1884 = vmatpush2.bf16.msra.mxu0 0
        %1885 = vmatprep.subr.bf16.mxu0 0
        %1886 = vmatpush2.bf16.msra.mxu0 0
        %1887 = vmatprep.mubr.bf16.mxu0 0
        %1888 = vmatmul.mubr.bf16.gmra.mxu0 %v1853
        %v1889 = vpop.f32.mrf.mxu0
        %v1890 = vadd.f32 %v1838, %v1889
        %v1891 = vpop.f32.mrf.mxu0
        %v1892 = vpop.f32.mrf.mxu0
        %v1893 = vpop.f32.mrf.mxu0
        %1894 = vdwg.mxu0
        %v1895 = vpack.c.bf16 %v1819, %v1819
        %v1897 = vlaneseq
        %v1898 = vshrl.u32 %v1897, 7
        %v1899 = vsub.s32 0, %v1898
        %v1900 = vrot.slane %v1827, %v1899
        %v1904 = vunpack.c.l.b16 %v1825
        %v1905 = vunpack.c.l.b16 %v1826
        %v1906 = vpack.c.b16 %v1905, %v1904
        %v1909 = vsel %vm1724, %v1895, 0
        %1911 = vmatprep.subr.bf16.mxu0 0
        %1912 = vmatpush1.bf16.msra.mxu0 0
        %1913 = vmatprep.subr.bf16.mxu0 0
        %1914 = vmatpush1.bf16.msra.mxu0 0
        %1915 = vmatprep.subr.bf16.mxu0 0
        %1916 = vmatpush1.bf16.msra.mxu0 0
        %1917 = vmatprep.subr.bf16.mxu0 0
        %1918 = vmatpush1.bf16.msra.mxu0 0
        %1919 = vmatprep.subr.bf16.mxu0 0
        %1920 = vmatpush1.bf16.msra.mxu0 0
        %1921 = vmatprep.subr.bf16.mxu0 0
        %1922 = vmatpush1.bf16.msra.mxu0 0
        %1923 = vmatprep.subr.bf16.mxu0 0
        %1924 = vmatpush1.bf16.msra.mxu0 0
        %1925 = vmatprep.subr.bf16.mxu0 0
        %1926 = vmatpush1.bf16.msra.mxu0 %v1906
        %1927 = vmatprep.subr.bf16.mxu0 0
        %1928 = vmatpush2.bf16.msra.mxu0 0
        %1929 = vmatprep.subr.bf16.mxu0 0
        %1930 = vmatpush2.bf16.msra.mxu0 0
        %1931 = vmatprep.subr.bf16.mxu0 0
        %1932 = vmatpush2.bf16.msra.mxu0 0
        %1933 = vmatprep.subr.bf16.mxu0 0
        %1934 = vmatpush2.bf16.msra.mxu0 0
        %1935 = vmatprep.subr.bf16.mxu0 0
        %1936 = vmatpush2.bf16.msra.mxu0 0
        %1937 = vmatprep.subr.bf16.mxu0 0
        %1938 = vmatpush2.bf16.msra.mxu0 0
        %1939 = vmatprep.subr.bf16.mxu0 0
        %1940 = vmatpush2.bf16.msra.mxu0 0
        %1941 = vmatprep.subr.bf16.mxu0 0
        %1942 = vmatpush2.bf16.msra.mxu0 0
        %1943 = vmatprep.mubr.bf16.mxu0 0
        %1944 = vmatmul.mubr.bf16.gmra.mxu0 %v1909
        %v1945 = vpop.f32.mrf.mxu0
        %v1946 = vadd.f32 %v1900, %v1945
        %v1947 = vpop.f32.mrf.mxu0
        %v1948 = vpop.f32.mrf.mxu0
        %v1949 = vpop.f32.mrf.mxu0
        %1950 = vdwg.mxu0
        %v1951 = vpack.c.bf16 %v1890, %v1890
        %v1952 = vpack.c.bf16 %v1946, %v1946
        %vm1953 = vcmask 31744
        %v1955 = vsel %vm1953, %v1951, 0
        %v1958 = vsel %vm1953, %v1952, 0
        %1960 = vmatprep.subr.bf16.mxu0 0
        %1961 = vmatpush1.bf16.xpose.msra.mxu0 0
        %1962 = vmatprep.subr.bf16.mxu0 0
        %1963 = vmatpush1.bf16.xpose.msra.mxu0 0
        %1964 = vmatprep.subr.bf16.mxu0 0
        %1965 = vmatpush1.bf16.xpose.msra.mxu0 0
        %1966 = vmatprep.subr.bf16.mxu0 0
        %1967 = vmatpush1.bf16.xpose.msra.mxu0 0
        %1968 = vmatprep.subr.bf16.mxu0 0
        %1969 = vmatpush1.bf16.xpose.msra.mxu0 0
        %1970 = vmatprep.subr.bf16.mxu0 0
        %1971 = vmatpush1.bf16.xpose.msra.mxu0 0
        %1972 = vmatprep.subr.bf16.mxu0 0
        %1973 = vmatpush1.bf16.xpose.msra.mxu0 0
        %1974 = vmatprep.subr.bf16.mxu0 0
        %1975 = vmatpush1.bf16.xpose.msra.mxu0 %v1958
        %1976 = vmatprep.subr.bf16.mxu0 0
        %1977 = vmatpush2.bf16.xpose.msra.mxu0 0
        %1978 = vmatprep.subr.bf16.mxu0 0
        %1979 = vmatpush2.bf16.xpose.msra.mxu0 0
        %1980 = vmatprep.subr.bf16.mxu0 0
        %1981 = vmatpush2.bf16.xpose.msra.mxu0 0
        %1982 = vmatprep.subr.bf16.mxu0 0
        %1983 = vmatpush2.bf16.xpose.msra.mxu0 0
        %1984 = vmatprep.subr.bf16.mxu0 0
        %1985 = vmatpush2.bf16.xpose.msra.mxu0 0
        %1986 = vmatprep.subr.bf16.mxu0 0
        %1987 = vmatpush2.bf16.xpose.msra.mxu0 0
        %1988 = vmatprep.subr.bf16.mxu0 0
        %1989 = vmatpush2.bf16.xpose.msra.mxu0 0
        %1990 = vmatprep.subr.bf16.mxu0 0
        %1991 = vmatpush2.bf16.xpose.msra.mxu0 0
        %1992 = vmatprep.mubr.bf16.mxu0 0
        %1993 = vmatmul.mubr.bf16.gmra.mxu0 %v1955
        %v1994 = vpop.f32.mrf.mxu0
        %v1995 = vadd.f32 0.0, %v1994
        %v1996 = vpop.f32.mrf.mxu0
        %v1997 = vpop.f32.mrf.mxu0
        %v1998 = vpop.f32.mrf.mxu0
        %1999 = vdwg.mxu0
        %v2000 = vmul.f32 %v1995, 0.5
        %vm2001 = vcmask 39936
        %v2002 = vsel %vm2001, %v2000, -inf
        %2003 = vmax.xlane.f32.xlu0 %v2002
        %v2004 = vpop.xlane.xlu0 %2003
        %v2005 = vsub.f32 %v2000, %v2004
        %v2006 = vmul.f32 %v2005, 1.442695
        %v2007 = vpow.pop %v2006
        %v2008 = vsel %vm2001, %v2007, 0.0
        %2009 = vadd.xlane.f32.xlu0 %v2008
        %v2010 = vpop.xlane.xlu0 %2009
        %v2011 = vrcp.pop %v2010
        %v2012 = vmul.f32 %v2007, %v2011
        %v2013 = vpack.c.bf16 %v2012, %v2012
        %2015 = vrot.lane.b32.xlu0 %v1952, 112
        %v2016 = vpop.permute.xlu0 %2015
        %v2018 = vsel %vm2001, %v2013, 0
        %vm2020 = vcmask 1041408
        %vm2021 = vcmask 1042432
        %v2022 = vsel %vm2020, 4294967295, 65535
        %v2023 = vsel %vm2021, %v2022, 0
        %v2025 = vand.u32 %v2016, %v2023
        %2027 = vmatprep.subr.bf16.mxu0 0
        %2028 = vmatpush1.bf16.msra.mxu0 0
        %2029 = vmatprep.subr.bf16.mxu0 0
        %2030 = vmatpush1.bf16.msra.mxu0 0
        %2031 = vmatprep.subr.bf16.mxu0 0
        %2032 = vmatpush1.bf16.msra.mxu0 0
        %2033 = vmatprep.subr.bf16.mxu0 0
        %2034 = vmatpush1.bf16.msra.mxu0 0
        %2035 = vmatprep.subr.bf16.mxu0 0
        %2036 = vmatpush1.bf16.msra.mxu0 0
        %2037 = vmatprep.subr.bf16.mxu0 0
        %2038 = vmatpush1.bf16.msra.mxu0 0
        %2039 = vmatprep.subr.bf16.mxu0 0
        %2040 = vmatpush1.bf16.msra.mxu0 0
        %2041 = vmatprep.subr.bf16.mxu0 0
        %2042 = vmatpush1.bf16.msra.mxu0 %v2025
        %2043 = vmatprep.subr.bf16.mxu0 0
        %2044 = vmatpush2.bf16.msra.mxu0 0
        %2045 = vmatprep.subr.bf16.mxu0 0
        %2046 = vmatpush2.bf16.msra.mxu0 0
        %2047 = vmatprep.subr.bf16.mxu0 0
        %2048 = vmatpush2.bf16.msra.mxu0 0
        %2049 = vmatprep.subr.bf16.mxu0 0
        %2050 = vmatpush2.bf16.msra.mxu0 0
        %2051 = vmatprep.subr.bf16.mxu0 0
        %2052 = vmatpush2.bf16.msra.mxu0 0
        %2053 = vmatprep.subr.bf16.mxu0 0
        %2054 = vmatpush2.bf16.msra.mxu0 0
        %2055 = vmatprep.subr.bf16.mxu0 0
        %2056 = vmatpush2.bf16.msra.mxu0 0
        %2057 = vmatprep.subr.bf16.mxu0 0
        %2058 = vmatpush2.bf16.msra.mxu0 0
        %2059 = vmatprep.mubr.bf16.mxu0 0
        %2060 = vmatmul.mubr.bf16.gmra.mxu0 %v2018
        %v2061 = vpop.f32.mrf.mxu0
        %v2062 = vadd.f32 0.0, %v2061
        %v2063 = vpop.f32.mrf.mxu0
        %v2064 = vpop.f32.mrf.mxu0
        %v2065 = vpop.f32.mrf.mxu0
        %2066 = vdwg.mxu0
        %2068 = vrot.lane.b32.xlu0 %v1951, 124
        %v2069 = vpop.permute.xlu0 %2068
        %2070 = vrot.lane.b32.xlu0 %v1952, 124
        %v2071 = vpop.permute.xlu0 %2070
        %v2073 = vsel %vm1953, %v2069, 0
        %v2076 = vsel %vm1953, %v2071, 0
        %2078 = vmatprep.subr.bf16.mxu0 0
        %2079 = vmatpush1.bf16.xpose.msra.mxu0 0
        %2080 = vmatprep.subr.bf16.mxu0 0
        %2081 = vmatpush1.bf16.xpose.msra.mxu0 0
        %2082 = vmatprep.subr.bf16.mxu0 0
        %2083 = vmatpush1.bf16.xpose.msra.mxu0 0
        %2084 = vmatprep.subr.bf16.mxu0 0
        %2085 = vmatpush1.bf16.xpose.msra.mxu0 0
        %2086 = vmatprep.subr.bf16.mxu0 0
        %2087 = vmatpush1.bf16.xpose.msra.mxu0 0
        %2088 = vmatprep.subr.bf16.mxu0 0
        %2089 = vmatpush1.bf16.xpose.msra.mxu0 0
        %2090 = vmatprep.subr.bf16.mxu0 0
        %2091 = vmatpush1.bf16.xpose.msra.mxu0 0
        %2092 = vmatprep.subr.bf16.mxu0 0
        %2093 = vmatpush1.bf16.xpose.msra.mxu0 %v2076
        %2094 = vmatprep.subr.bf16.mxu0 0
        %2095 = vmatpush2.bf16.xpose.msra.mxu0 0
        %2096 = vmatprep.subr.bf16.mxu0 0
        %2097 = vmatpush2.bf16.xpose.msra.mxu0 0
        %2098 = vmatprep.subr.bf16.mxu0 0
        %2099 = vmatpush2.bf16.xpose.msra.mxu0 0
        %2100 = vmatprep.subr.bf16.mxu0 0
        %2101 = vmatpush2.bf16.xpose.msra.mxu0 0
        %2102 = vmatprep.subr.bf16.mxu0 0
        %2103 = vmatpush2.bf16.xpose.msra.mxu0 0
        %2104 = vmatprep.subr.bf16.mxu0 0
        %2105 = vmatpush2.bf16.xpose.msra.mxu0 0
        %2106 = vmatprep.subr.bf16.mxu0 0
        %2107 = vmatpush2.bf16.xpose.msra.mxu0 0
        %2108 = vmatprep.subr.bf16.mxu0 0
        %2109 = vmatpush2.bf16.xpose.msra.mxu0 0
        %2110 = vmatprep.mubr.bf16.mxu0 0
        %2111 = vmatmul.mubr.bf16.gmra.mxu0 %v2073
        %v2112 = vpop.f32.mrf.mxu0
        %v2113 = vadd.f32 0.0, %v2112
        %v2114 = vpop.f32.mrf.mxu0
        %v2115 = vpop.f32.mrf.mxu0
        %v2116 = vpop.f32.mrf.mxu0
        %2117 = vdwg.mxu0
        %v2118 = vmul.f32 %v2113, 0.5
        %v2119 = vsel %vm2001, %v2118, -inf
        %2120 = vmax.xlane.f32.xlu0 %v2119
        %v2121 = vpop.xlane.xlu0 %2120
        %v2122 = vsub.f32 %v2118, %v2121
        %v2123 = vmul.f32 %v2122, 1.442695
        %v2124 = vpow.pop %v2123
        %v2125 = vsel %vm2001, %v2124, 0.0
        %2126 = vadd.xlane.f32.xlu0 %v2125
        %v2127 = vpop.xlane.xlu0 %2126
        %v2128 = vrcp.pop %v2127
        %v2129 = vmul.f32 %v2124, %v2128
        %v2130 = vpack.c.bf16 %v2129, %v2129
        %2131 = vrot.lane.b32.xlu0 %v1952, 108
        %v2132 = vpop.permute.xlu0 %2131
        %v2134 = vsel %vm2001, %v2130, 0
        %v2137 = vand.u32 %v2132, %v2023
        %2139 = vmatprep.subr.bf16.mxu0 0
        %2140 = vmatpush1.bf16.msra.mxu0 0
        %2141 = vmatprep.subr.bf16.mxu0 0
        %2142 = vmatpush1.bf16.msra.mxu0 0
        %2143 = vmatprep.subr.bf16.mxu0 0
        %2144 = vmatpush1.bf16.msra.mxu0 0
        %2145 = vmatprep.subr.bf16.mxu0 0
        %2146 = vmatpush1.bf16.msra.mxu0 0
        %2147 = vmatprep.subr.bf16.mxu0 0
        %2148 = vmatpush1.bf16.msra.mxu0 0
        %2149 = vmatprep.subr.bf16.mxu0 0
        %2150 = vmatpush1.bf16.msra.mxu0 0
        %2151 = vmatprep.subr.bf16.mxu0 0
        %2152 = vmatpush1.bf16.msra.mxu0 0
        %2153 = vmatprep.subr.bf16.mxu0 0
        %2154 = vmatpush1.bf16.msra.mxu0 %v2137
        %2155 = vmatprep.subr.bf16.mxu0 0
        %2156 = vmatpush2.bf16.msra.mxu0 0
        %2157 = vmatprep.subr.bf16.mxu0 0
        %2158 = vmatpush2.bf16.msra.mxu0 0
        %2159 = vmatprep.subr.bf16.mxu0 0
        %2160 = vmatpush2.bf16.msra.mxu0 0
        %2161 = vmatprep.subr.bf16.mxu0 0
        %2162 = vmatpush2.bf16.msra.mxu0 0
        %2163 = vmatprep.subr.bf16.mxu0 0
        %2164 = vmatpush2.bf16.msra.mxu0 0
        %2165 = vmatprep.subr.bf16.mxu0 0
        %2166 = vmatpush2.bf16.msra.mxu0 0
        %2167 = vmatprep.subr.bf16.mxu0 0
        %2168 = vmatpush2.bf16.msra.mxu0 0
        %2169 = vmatprep.subr.bf16.mxu0 0
        %2170 = vmatpush2.bf16.msra.mxu0 0
        %2171 = vmatprep.mubr.bf16.mxu0 0
        %2172 = vmatmul.mubr.bf16.gmra.mxu0 %v2134
        %v2173 = vpop.f32.mrf.mxu0
        %v2174 = vadd.f32 0.0, %v2173
        %v2175 = vpop.f32.mrf.mxu0
        %v2176 = vpop.f32.mrf.mxu0
        %v2177 = vpop.f32.mrf.mxu0
        %2178 = vdwg.mxu0
        %2179 = vrot.lane.b32.xlu0 %v1951, 120
        %v2180 = vpop.permute.xlu0 %2179
        %2181 = vrot.lane.b32.xlu0 %v1952, 120
        %v2182 = vpop.permute.xlu0 %2181
        %v2184 = vsel %vm1953, %v2180, 0
        %v2187 = vsel %vm1953, %v2182, 0
        %2189 = vmatprep.subr.bf16.mxu0 0
        %2190 = vmatpush1.bf16.xpose.msra.mxu0 0
        %2191 = vmatprep.subr.bf16.mxu0 0
        %2192 = vmatpush1.bf16.xpose.msra.mxu0 0
        %2193 = vmatprep.subr.bf16.mxu0 0
        %2194 = vmatpush1.bf16.xpose.msra.mxu0 0
        %2195 = vmatprep.subr.bf16.mxu0 0
        %2196 = vmatpush1.bf16.xpose.msra.mxu0 0
        %2197 = vmatprep.subr.bf16.mxu0 0
        %2198 = vmatpush1.bf16.xpose.msra.mxu0 0
        %2199 = vmatprep.subr.bf16.mxu0 0
        %2200 = vmatpush1.bf16.xpose.msra.mxu0 0
        %2201 = vmatprep.subr.bf16.mxu0 0
        %2202 = vmatpush1.bf16.xpose.msra.mxu0 0
        %2203 = vmatprep.subr.bf16.mxu0 0
        %2204 = vmatpush1.bf16.xpose.msra.mxu0 %v2187
        %2205 = vmatprep.subr.bf16.mxu0 0
        %2206 = vmatpush2.bf16.xpose.msra.mxu0 0
        %2207 = vmatprep.subr.bf16.mxu0 0
        %2208 = vmatpush2.bf16.xpose.msra.mxu0 0
        %2209 = vmatprep.subr.bf16.mxu0 0
        %2210 = vmatpush2.bf16.xpose.msra.mxu0 0
        %2211 = vmatprep.subr.bf16.mxu0 0
        %2212 = vmatpush2.bf16.xpose.msra.mxu0 0
        %2213 = vmatprep.subr.bf16.mxu0 0
        %2214 = vmatpush2.bf16.xpose.msra.mxu0 0
        %2215 = vmatprep.subr.bf16.mxu0 0
        %2216 = vmatpush2.bf16.xpose.msra.mxu0 0
        %2217 = vmatprep.subr.bf16.mxu0 0
        %2218 = vmatpush2.bf16.xpose.msra.mxu0 0
        %2219 = vmatprep.subr.bf16.mxu0 0
        %2220 = vmatpush2.bf16.xpose.msra.mxu0 0
        %2221 = vmatprep.mubr.bf16.mxu0 0
        %2222 = vmatmul.mubr.bf16.gmra.mxu0 %v2184
        %v2223 = vpop.f32.mrf.mxu0
        %v2224 = vadd.f32 0.0, %v2223
        %v2225 = vpop.f32.mrf.mxu0
        %v2226 = vpop.f32.mrf.mxu0
        %v2227 = vpop.f32.mrf.mxu0
        %2228 = vdwg.mxu0
        %v2229 = vmul.f32 %v2224, 0.5
        %v2230 = vsel %vm2001, %v2229, -inf
        %2231 = vmax.xlane.f32.xlu0 %v2230
        %v2232 = vpop.xlane.xlu0 %2231
        %v2233 = vsub.f32 %v2229, %v2232
        %v2234 = vmul.f32 %v2233, 1.442695
        %v2235 = vpow.pop %v2234
        %v2236 = vsel %vm2001, %v2235, 0.0
        %2237 = vadd.xlane.f32.xlu0 %v2236
        %v2238 = vpop.xlane.xlu0 %2237
        %v2239 = vrcp.pop %v2238
        %v2240 = vmul.f32 %v2235, %v2239
        %v2241 = vpack.c.bf16 %v2240, %v2240
        %2242 = vrot.lane.b32.xlu0 %v1952, 104
        %v2243 = vpop.permute.xlu0 %2242
        %v2245 = vsel %vm2001, %v2241, 0
        %v2248 = vand.u32 %v2243, %v2023
        %2250 = vmatprep.subr.bf16.mxu0 0
        %2251 = vmatpush1.bf16.msra.mxu0 0
        %2252 = vmatprep.subr.bf16.mxu0 0
        %2253 = vmatpush1.bf16.msra.mxu0 0
        %2254 = vmatprep.subr.bf16.mxu0 0
        %2255 = vmatpush1.bf16.msra.mxu0 0
        %2256 = vmatprep.subr.bf16.mxu0 0
        %2257 = vmatpush1.bf16.msra.mxu0 0
        %2258 = vmatprep.subr.bf16.mxu0 0
        %2259 = vmatpush1.bf16.msra.mxu0 0
        %2260 = vmatprep.subr.bf16.mxu0 0
        %2261 = vmatpush1.bf16.msra.mxu0 0
        %2262 = vmatprep.subr.bf16.mxu0 0
        %2263 = vmatpush1.bf16.msra.mxu0 0
        %2264 = vmatprep.subr.bf16.mxu0 0
        %2265 = vmatpush1.bf16.msra.mxu0 %v2248
        %2266 = vmatprep.subr.bf16.mxu0 0
        %2267 = vmatpush2.bf16.msra.mxu0 0
        %2268 = vmatprep.subr.bf16.mxu0 0
        %2269 = vmatpush2.bf16.msra.mxu0 0
        %2270 = vmatprep.subr.bf16.mxu0 0
        %2271 = vmatpush2.bf16.msra.mxu0 0
        %2272 = vmatprep.subr.bf16.mxu0 0
        %2273 = vmatpush2.bf16.msra.mxu0 0
        %2274 = vmatprep.subr.bf16.mxu0 0
        %2275 = vmatpush2.bf16.msra.mxu0 0
        %2276 = vmatprep.subr.bf16.mxu0 0
        %2277 = vmatpush2.bf16.msra.mxu0 0
        %2278 = vmatprep.subr.bf16.mxu0 0
        %2279 = vmatpush2.bf16.msra.mxu0 0
        %2280 = vmatprep.subr.bf16.mxu0 0
        %2281 = vmatpush2.bf16.msra.mxu0 0
        %2282 = vmatprep.mubr.bf16.mxu0 0
        %2283 = vmatmul.mubr.bf16.gmra.mxu0 %v2245
        %v2284 = vpop.f32.mrf.mxu0
        %v2285 = vadd.f32 0.0, %v2284
        %v2286 = vpop.f32.mrf.mxu0
        %v2287 = vpop.f32.mrf.mxu0
        %v2288 = vpop.f32.mrf.mxu0
        %2289 = vdwg.mxu0
        %2290 = vrot.lane.b32.xlu0 %v1951, 116
        %v2291 = vpop.permute.xlu0 %2290
        %2292 = vrot.lane.b32.xlu0 %v1952, 116
        %v2293 = vpop.permute.xlu0 %2292
        %v2295 = vsel %vm1953, %v2291, 0
        %v2298 = vsel %vm1953, %v2293, 0
        %2300 = vmatprep.subr.bf16.mxu0 0
        %2301 = vmatpush1.bf16.xpose.msra.mxu0 0
        %2302 = vmatprep.subr.bf16.mxu0 0
        %2303 = vmatpush1.bf16.xpose.msra.mxu0 0
        %2304 = vmatprep.subr.bf16.mxu0 0
        %2305 = vmatpush1.bf16.xpose.msra.mxu0 0
        %2306 = vmatprep.subr.bf16.mxu0 0
        %2307 = vmatpush1.bf16.xpose.msra.mxu0 0
        %2308 = vmatprep.subr.bf16.mxu0 0
        %2309 = vmatpush1.bf16.xpose.msra.mxu0 0
        %2310 = vmatprep.subr.bf16.mxu0 0
        %2311 = vmatpush1.bf16.xpose.msra.mxu0 0
        %2312 = vmatprep.subr.bf16.mxu0 0
        %2313 = vmatpush1.bf16.xpose.msra.mxu0 0
        %2314 = vmatprep.subr.bf16.mxu0 0
        %2315 = vmatpush1.bf16.xpose.msra.mxu0 %v2298
        %2316 = vmatprep.subr.bf16.mxu0 0
        %2317 = vmatpush2.bf16.xpose.msra.mxu0 0
        %2318 = vmatprep.subr.bf16.mxu0 0
        %2319 = vmatpush2.bf16.xpose.msra.mxu0 0
        %2320 = vmatprep.subr.bf16.mxu0 0
        %2321 = vmatpush2.bf16.xpose.msra.mxu0 0
        %2322 = vmatprep.subr.bf16.mxu0 0
        %2323 = vmatpush2.bf16.xpose.msra.mxu0 0
        %2324 = vmatprep.subr.bf16.mxu0 0
        %2325 = vmatpush2.bf16.xpose.msra.mxu0 0
        %2326 = vmatprep.subr.bf16.mxu0 0
        %2327 = vmatpush2.bf16.xpose.msra.mxu0 0
        %2328 = vmatprep.subr.bf16.mxu0 0
        %2329 = vmatpush2.bf16.xpose.msra.mxu0 0
        %2330 = vmatprep.subr.bf16.mxu0 0
        %2331 = vmatpush2.bf16.xpose.msra.mxu0 0
        %2332 = vmatprep.mubr.bf16.mxu0 0
        %2333 = vmatmul.mubr.bf16.gmra.mxu0 %v2295
        %v2334 = vpop.f32.mrf.mxu0
        %v2335 = vadd.f32 0.0, %v2334
        %v2336 = vpop.f32.mrf.mxu0
        %v2337 = vpop.f32.mrf.mxu0
        %v2338 = vpop.f32.mrf.mxu0
        %2339 = vdwg.mxu0
        %v2340 = vmul.f32 %v2335, 0.5
        %v2341 = vsel %vm2001, %v2340, -inf
        %2342 = vmax.xlane.f32.xlu0 %v2341
        %v2343 = vpop.xlane.xlu0 %2342
        %v2344 = vsub.f32 %v2340, %v2343
        %v2345 = vmul.f32 %v2344, 1.442695
        %v2346 = vpow.pop %v2345
        %v2347 = vsel %vm2001, %v2346, 0.0
        %2348 = vadd.xlane.f32.xlu0 %v2347
        %v2349 = vpop.xlane.xlu0 %2348
        %v2350 = vrcp.pop %v2349
        %v2351 = vmul.f32 %v2346, %v2350
        %v2352 = vpack.c.bf16 %v2351, %v2351
        %2353 = vrot.lane.b32.xlu0 %v1952, 100
        %v2354 = vpop.permute.xlu0 %2353
        %v2356 = vsel %vm2001, %v2352, 0
        %v2359 = vand.u32 %v2354, %v2023
        %2361 = vmatprep.subr.bf16.mxu0 0
        %2362 = vmatpush1.bf16.msra.mxu0 0
        %2363 = vmatprep.subr.bf16.mxu0 0
        %2364 = vmatpush1.bf16.msra.mxu0 0
        %2365 = vmatprep.subr.bf16.mxu0 0
        %2366 = vmatpush1.bf16.msra.mxu0 0
        %2367 = vmatprep.subr.bf16.mxu0 0
        %2368 = vmatpush1.bf16.msra.mxu0 0
        %2369 = vmatprep.subr.bf16.mxu0 0
        %2370 = vmatpush1.bf16.msra.mxu0 0
        %2371 = vmatprep.subr.bf16.mxu0 0
        %2372 = vmatpush1.bf16.msra.mxu0 0
        %2373 = vmatprep.subr.bf16.mxu0 0
        %2374 = vmatpush1.bf16.msra.mxu0 0
        %2375 = vmatprep.subr.bf16.mxu0 0
        %2376 = vmatpush1.bf16.msra.mxu0 %v2359
        %2377 = vmatprep.subr.bf16.mxu0 0
        %2378 = vmatpush2.bf16.msra.mxu0 0
        %2379 = vmatprep.subr.bf16.mxu0 0
        %2380 = vmatpush2.bf16.msra.mxu0 0
        %2381 = vmatprep.subr.bf16.mxu0 0
        %2382 = vmatpush2.bf16.msra.mxu0 0
        %2383 = vmatprep.subr.bf16.mxu0 0
        %2384 = vmatpush2.bf16.msra.mxu0 0
        %2385 = vmatprep.subr.bf16.mxu0 0
        %2386 = vmatpush2.bf16.msra.mxu0 0
        %2387 = vmatprep.subr.bf16.mxu0 0
        %2388 = vmatpush2.bf16.msra.mxu0 0
        %2389 = vmatprep.subr.bf16.mxu0 0
        %2390 = vmatpush2.bf16.msra.mxu0 0
        %2391 = vmatprep.subr.bf16.mxu0 0
        %2392 = vmatpush2.bf16.msra.mxu0 0
        %2393 = vmatprep.mubr.bf16.mxu0 0
        %2394 = vmatmul.mubr.bf16.gmra.mxu0 %v2356
        %v2395 = vpop.f32.mrf.mxu0
        %v2396 = vadd.f32 0.0, %v2395
        %v2397 = vpop.f32.mrf.mxu0
        %v2398 = vpop.f32.mrf.mxu0
        %v2399 = vpop.f32.mrf.mxu0
        %2400 = vdwg.mxu0
        %2402 = vrot.lane.b32.xlu0 %v2174, 4
        %v2403 = vpop.permute.xlu0 %2402
        %2406 = vrot.lane.b32.xlu0 %v2285, 8
        %v2407 = vpop.permute.xlu0 %2406
        %2410 = vrot.lane.b32.xlu0 %v2396, 12
        %v2411 = vpop.permute.xlu0 %2410
        %v2413 = vsel %vm1953, %v2062, %v2403
        %v2414 = vsel %vm1267, %v2413, %v2407
        %vm2415 = vcmask 97280
        %v2416 = vsel %vm2415, %v2414, %v2411
        %v2417 = vpack.c.bf16 %v2416, %v2416
        %v2419 = vlaneseq
        %v2420 = vshrl.u32 %v2419, 7
        %v2421 = vsub.s32 0, %v2420
        %v2422 = vrot.slane %v1830, %v2421
        %v2426 = vunpack.c.l.b16 %v1828
        %v2427 = vunpack.c.l.b16 %v1829
        %v2428 = vpack.c.b16 %v2427, %v2426
        %v2431 = vsel %vm1724, %v2417, 0
        %2433 = vmatprep.subr.bf16.mxu0 0
        %2434 = vmatpush1.bf16.msra.mxu0 0
        %2435 = vmatprep.subr.bf16.mxu0 0
        %2436 = vmatpush1.bf16.msra.mxu0 0
        %2437 = vmatprep.subr.bf16.mxu0 0
        %2438 = vmatpush1.bf16.msra.mxu0 0
        %2439 = vmatprep.subr.bf16.mxu0 0
        %2440 = vmatpush1.bf16.msra.mxu0 0
        %2441 = vmatprep.subr.bf16.mxu0 0
        %2442 = vmatpush1.bf16.msra.mxu0 0
        %2443 = vmatprep.subr.bf16.mxu0 0
        %2444 = vmatpush1.bf16.msra.mxu0 0
        %2445 = vmatprep.subr.bf16.mxu0 0
        %2446 = vmatpush1.bf16.msra.mxu0 0
        %2447 = vmatprep.subr.bf16.mxu0 0
        %2448 = vmatpush1.bf16.msra.mxu0 %v2428
        %2449 = vmatprep.subr.bf16.mxu0 0
        %2450 = vmatpush2.bf16.msra.mxu0 0
        %2451 = vmatprep.subr.bf16.mxu0 0
        %2452 = vmatpush2.bf16.msra.mxu0 0
        %2453 = vmatprep.subr.bf16.mxu0 0
        %2454 = vmatpush2.bf16.msra.mxu0 0
        %2455 = vmatprep.subr.bf16.mxu0 0
        %2456 = vmatpush2.bf16.msra.mxu0 0
        %2457 = vmatprep.subr.bf16.mxu0 0
        %2458 = vmatpush2.bf16.msra.mxu0 0
        %2459 = vmatprep.subr.bf16.mxu0 0
        %2460 = vmatpush2.bf16.msra.mxu0 0
        %2461 = vmatprep.subr.bf16.mxu0 0
        %2462 = vmatpush2.bf16.msra.mxu0 0
        %2463 = vmatprep.subr.bf16.mxu0 0
        %2464 = vmatpush2.bf16.msra.mxu0 0
        %2465 = vmatprep.mubr.bf16.mxu0 0
        %2466 = vmatmul.mubr.bf16.gmra.mxu0 %v2431
        %v2467 = vpop.f32.mrf.mxu0
        %v2468 = vadd.f32 %v2422, %v2467
        %v2469 = vpop.f32.mrf.mxu0
        %v2470 = vpop.f32.mrf.mxu0
        %v2471 = vpop.f32.mrf.mxu0
        %2472 = vdwg.mxu0
        %v2473 = vadd.f32 %v1818, %v2468
        %v2474 = vsel %vm1163, %v2473, 0.0
        %2475 = vadd.xlane.f32.xlu0 %v2474
        %v2476 = vpop.xlane.xlu0 %2475
        %v2477 = vmul.f32 %v2476, %v1794
        %v2478 = vsub.f32 %v2473, %v2477
        %v2479 = vmul.f32 %v2478, %v2478
        %v2480 = vsel %vm1163, %v2479, 0.0
        %2481 = vadd.xlane.f32.xlu0 %v2480
        %v2482 = vpop.xlane.xlu0 %2481
        %v2483 = vmul.f32 %v2482, %v1794
        %v2484 = vadd.f32 %v2483, 1e-05
        %v2485 = vrsqrt.pop %v2484
        %v2486 = vmul.f32 %v2478, %v2485
        %v2488 = vlaneseq
        %v2489 = vshrl.u32 %v2488, 7
        %v2490 = vsub.s32 0, %v2489
        %v2491 = vrot.slane %v1831, %v2490
        %v2493 = vmul.f32 %v2486, %v2491
        %v2495 = vlaneseq
        %v2496 = vshrl.u32 %v2495, 7
        %v2497 = vsub.s32 0, %v2496
        %v2498 = vrot.slane %v1832, %v2497
        %v2500 = vadd.f32 %v2493, %v2498
        %v2501 = vld [vmem:[%s1120] sm:$0xff]
        %v2502 = vld [vmem:[%s1120 + $0x8] sm:$0x3]
        %v2503 = vld [vmem:[%s39] sm:$0xf]
        %v2504 = vld [vmem:[%s39 + $0x4] sm:$0xf]
        %v2505 = vld [vmem:[%s39 + $0x8] sm:$0xf]
        %v2506 = vld [vmem:[%s39 + $0xc] sm:$0xf]
        %v2507 = vld [vmem:[%s41] sm:$0x1]
        %v2508 = vld [vmem:[%s43] sm:$0xf]
        %v2509 = vld [vmem:[%s43 + $0x4] sm:$0xf]
        %v2510 = vld [vmem:[%s43 + $0x8] sm:$0xf]
        %v2511 = vld [vmem:[%s43 + $0xc] sm:$0xf]
        %v2512 = vld [vmem:[%s45] sm:$0x1]
        %v2513 = vld [vmem:[%s47] sm:$0xf]
        %v2514 = vld [vmem:[%s47 + $0x4] sm:$0xf]
        %v2515 = vld [vmem:[%s47 + $0x8] sm:$0xf]
        %v2516 = vld [vmem:[%s47 + $0xc] sm:$0xf]
        %v2517 = vld [vmem:[%s49] sm:$0x1]
        %v2518 = vld [vmem:[%s51] sm:$0x1]
        %v2519 = vld [vmem:[%s53] sm:$0x1]
        %v2520 = vpack.c.bf16 %v2500, %v2500
        %v2522 = vlaneseq
        %v2523 = vshrl.u32 %v2522, 7
        %v2524 = vsub.s32 0, %v2523
        %v2525 = vrot.slane %v2507, %v2524
        %v2531 = vunpack.c.l.b16 %v2503
        %v2532 = vunpack.c.l.b16 %v2504
        %v2533 = vunpack.c.l.b16 %v2505
        %v2534 = vunpack.c.l.b16 %v2506
        %v2535 = vpack.c.b16 %v2532, %v2531
        %v2536 = vpack.c.b16 %v2534, %v2533
        %v2540 = vsel %vm1163, %v2520, 0
        %2542 = vmatprep.subr.bf16.mxu0 0
        %2543 = vmatpush1.bf16.msra.mxu0 0
        %2544 = vmatprep.subr.bf16.mxu0 0
        %2545 = vmatpush1.bf16.msra.mxu0 0
        %2546 = vmatprep.subr.bf16.mxu0 0
        %2547 = vmatpush1.bf16.msra.mxu0 0
        %2548 = vmatprep.subr.bf16.mxu0 0
        %2549 = vmatpush1.bf16.msra.mxu0 0
        %2550 = vmatprep.subr.bf16.mxu0 0
        %2551 = vmatpush1.bf16.msra.mxu0 0
        %2552 = vmatprep.subr.bf16.mxu0 0
        %2553 = vmatpush1.bf16.msra.mxu0 0
        %2554 = vmatprep.subr.bf16.mxu0 0
        %2555 = vmatpush1.bf16.msra.mxu0 %v2536
        %2556 = vmatprep.subr.bf16.mxu0 0
        %2557 = vmatpush1.bf16.msra.mxu0 %v2535
        %2558 = vmatprep.subr.bf16.mxu0 0
        %2559 = vmatpush2.bf16.msra.mxu0 0
        %2560 = vmatprep.subr.bf16.mxu0 0
        %2561 = vmatpush2.bf16.msra.mxu0 0
        %2562 = vmatprep.subr.bf16.mxu0 0
        %2563 = vmatpush2.bf16.msra.mxu0 0
        %2564 = vmatprep.subr.bf16.mxu0 0
        %2565 = vmatpush2.bf16.msra.mxu0 0
        %2566 = vmatprep.subr.bf16.mxu0 0
        %2567 = vmatpush2.bf16.msra.mxu0 0
        %2568 = vmatprep.subr.bf16.mxu0 0
        %2569 = vmatpush2.bf16.msra.mxu0 0
        %2570 = vmatprep.subr.bf16.mxu0 0
        %2571 = vmatpush2.bf16.msra.mxu0 0
        %2572 = vmatprep.subr.bf16.mxu0 0
        %2573 = vmatpush2.bf16.msra.mxu0 0
        %2574 = vmatprep.mubr.bf16.mxu0 0
        %2575 = vmatmul.mubr.bf16.gmra.mxu0 %v2540
        %v2576 = vpop.f32.mrf.mxu0
        %v2577 = vadd.f32 %v2525, %v2576
        %v2578 = vpop.f32.mrf.mxu0
        %v2579 = vpop.f32.mrf.mxu0
        %v2580 = vpop.f32.mrf.mxu0
        %2581 = vdwg.mxu0
        %v2582 = vpack.c.bf16 %v2502, %v2501
        %v2584 = vlaneseq
        %v2585 = vshrl.u32 %v2584, 7
        %v2586 = vsub.s32 0, %v2585
        %v2587 = vrot.slane %v2512, %v2586
        %v2593 = vunpack.c.l.b16 %v2508
        %v2594 = vunpack.c.l.b16 %v2509
        %v2595 = vunpack.c.l.b16 %v2510
        %v2596 = vunpack.c.l.b16 %v2511
        %v2597 = vpack.c.b16 %v2594, %v2593
        %v2598 = vpack.c.b16 %v2596, %v2595
        %v2602 = vsel %vm1163, %v2582, 0
        %2604 = vmatprep.subr.bf16.mxu0 0
        %2605 = vmatpush1.bf16.msra.mxu0 0
        %2606 = vmatprep.subr.bf16.mxu0 0
        %2607 = vmatpush1.bf16.msra.mxu0 0
        %2608 = vmatprep.subr.bf16.mxu0 0
        %2609 = vmatpush1.bf16.msra.mxu0 0
        %2610 = vmatprep.subr.bf16.mxu0 0
        %2611 = vmatpush1.bf16.msra.mxu0 0
        %2612 = vmatprep.subr.bf16.mxu0 0
        %2613 = vmatpush1.bf16.msra.mxu0 0
        %2614 = vmatprep.subr.bf16.mxu0 0
        %2615 = vmatpush1.bf16.msra.mxu0 0
        %2616 = vmatprep.subr.bf16.mxu0 0
        %2617 = vmatpush1.bf16.msra.mxu0 %v2598
        %2618 = vmatprep.subr.bf16.mxu0 0
        %2619 = vmatpush1.bf16.msra.mxu0 %v2597
        %2620 = vmatprep.subr.bf16.mxu0 0
        %2621 = vmatpush2.bf16.msra.mxu0 0
        %2622 = vmatprep.subr.bf16.mxu0 0
        %2623 = vmatpush2.bf16.msra.mxu0 0
        %2624 = vmatprep.subr.bf16.mxu0 0
        %2625 = vmatpush2.bf16.msra.mxu0 0
        %2626 = vmatprep.subr.bf16.mxu0 0
        %2627 = vmatpush2.bf16.msra.mxu0 0
        %2628 = vmatprep.subr.bf16.mxu0 0
        %2629 = vmatpush2.bf16.msra.mxu0 0
        %2630 = vmatprep.subr.bf16.mxu0 0
        %2631 = vmatpush2.bf16.msra.mxu0 0
        %2632 = vmatprep.subr.bf16.mxu0 0
        %2633 = vmatpush2.bf16.msra.mxu0 0
        %2634 = vmatprep.subr.bf16.mxu0 0
        %2635 = vmatpush2.bf16.msra.mxu0 0
        %2636 = vmatprep.mubr.bf16.mxu0 0
        %2637 = vmatmul.mubr.bf16.gmra.mxu0 %v2602
        %v2638 = vpop.f32.mrf.mxu0
        %v2639 = vadd.f32 %v2587, %v2638
        %v2640 = vpop.f32.mrf.mxu0
        %v2641 = vpop.f32.mrf.mxu0
        %v2642 = vadd.f32 %v2587, %v2641
        %v2643 = vpop.f32.mrf.mxu0
        %2644 = vdwg.mxu0
        %v2645 = vpack.c.bf16 %v2577, %v2577
        %v2646 = vpack.c.bf16 %v2642, %v2639
        %v2648 = vsel %vm1267, %v2645, 0
        %v2651 = vsel %vm1267, %v2646, 0
        %2653 = vmatprep.subr.bf16.mxu0 0
        %2654 = vmatpush1.bf16.xpose.msra.mxu0 0
        %2655 = vmatprep.subr.bf16.mxu0 0
        %2656 = vmatpush1.bf16.xpose.msra.mxu0 0
        %2657 = vmatprep.subr.bf16.mxu0 0
        %2658 = vmatpush1.bf16.xpose.msra.mxu0 0
        %2659 = vmatprep.subr.bf16.mxu0 0
        %2660 = vmatpush1.bf16.xpose.msra.mxu0 0
        %2661 = vmatprep.subr.bf16.mxu0 0
        %2662 = vmatpush1.bf16.xpose.msra.mxu0 0
        %2663 = vmatprep.subr.bf16.mxu0 0
        %2664 = vmatpush1.bf16.xpose.msra.mxu0 0
        %2665 = vmatprep.subr.bf16.mxu0 0
        %2666 = vmatpush1.bf16.xpose.msra.mxu0 0
        %2667 = vmatprep.subr.bf16.mxu0 0
        %2668 = vmatpush1.bf16.xpose.msra.mxu0 %v2651
        %2669 = vmatprep.subr.bf16.mxu0 0
        %2670 = vmatpush2.bf16.xpose.msra.mxu0 0
        %2671 = vmatprep.subr.bf16.mxu0 0
        %2672 = vmatpush2.bf16.xpose.msra.mxu0 0
        %2673 = vmatprep.subr.bf16.mxu0 0
        %2674 = vmatpush2.bf16.xpose.msra.mxu0 0
        %2675 = vmatprep.subr.bf16.mxu0 0
        %2676 = vmatpush2.bf16.xpose.msra.mxu0 0
        %2677 = vmatprep.subr.bf16.mxu0 0
        %2678 = vmatpush2.bf16.xpose.msra.mxu0 0
        %2679 = vmatprep.subr.bf16.mxu0 0
        %2680 = vmatpush2.bf16.xpose.msra.mxu0 0
        %2681 = vmatprep.subr.bf16.mxu0 0
        %2682 = vmatpush2.bf16.xpose.msra.mxu0 0
        %2683 = vmatprep.subr.bf16.mxu0 0
        %2684 = vmatpush2.bf16.xpose.msra.mxu0 0
        %2685 = vmatprep.mubr.bf16.mxu0 0
        %2686 = vmatmul.mubr.bf16.gmra.mxu0 %v2648
        %v2687 = vpop.f32.mrf.mxu0
        %v2688 = vadd.f32 0.0, %v2687
        %v2689 = vpop.f32.mrf.mxu0
        %v2690 = vpop.f32.mrf.mxu0
        %v2691 = vpop.f32.mrf.mxu0
        %2692 = vdwg.mxu0
        %v2693 = vmul.f32 %v2688, 0.35355338
        %vm2694 = vcmask 80896
        %v2695 = vsel %vm2694, %v2693, -inf
        %2696 = vmax.xlane.f32.xlu0 %v2695
        %v2697 = vpop.xlane.xlu0 %2696
        %v2698 = vsub.f32 %v2693, %v2697
        %v2699 = vmul.f32 %v2698, 1.442695
        %v2700 = vpow.pop %v2699
        %v2701 = vsel %vm2694, %v2700, 0.0
        %2702 = vadd.xlane.f32.xlu0 %v2701
        %v2703 = vpop.xlane.xlu0 %2702
        %v2704 = vrcp.pop %v2703
        %v2705 = vmul.f32 %v2700, %v2704
        %v2706 = vpack.c.bf16 %v2705, %v2705
        %2708 = vrot.lane.b32.xlu0 %v2646, 96
        %v2709 = vpop.permute.xlu0 %2708
        %v2711 = vsel %vm2694, %v2706, 0
        %vm2713 = vcmask 1044480
        %v2715 = vsel %vm2713, %v2709, 0
        %2717 = vmatprep.subr.bf16.mxu0 0
        %2718 = vmatpush1.bf16.msra.mxu0 0
        %2719 = vmatprep.subr.bf16.mxu0 0
        %2720 = vmatpush1.bf16.msra.mxu0 0
        %2721 = vmatprep.subr.bf16.mxu0 0
        %2722 = vmatpush1.bf16.msra.mxu0 0
        %2723 = vmatprep.subr.bf16.mxu0 0
        %2724 = vmatpush1.bf16.msra.mxu0 0
        %2725 = vmatprep.subr.bf16.mxu0 0
        %2726 = vmatpush1.bf16.msra.mxu0 0
        %2727 = vmatprep.subr.bf16.mxu0 0
        %2728 = vmatpush1.bf16.msra.mxu0 0
        %2729 = vmatprep.subr.bf16.mxu0 0
        %2730 = vmatpush1.bf16.msra.mxu0 0
        %2731 = vmatprep.subr.bf16.mxu0 0
        %2732 = vmatpush1.bf16.msra.mxu0 %v2715
        %2733 = vmatprep.subr.bf16.mxu0 0
        %2734 = vmatpush2.bf16.msra.mxu0 0
        %2735 = vmatprep.subr.bf16.mxu0 0
        %2736 = vmatpush2.bf16.msra.mxu0 0
        %2737 = vmatprep.subr.bf16.mxu0 0
        %2738 = vmatpush2.bf16.msra.mxu0 0
        %2739 = vmatprep.subr.bf16.mxu0 0
        %2740 = vmatpush2.bf16.msra.mxu0 0
        %2741 = vmatprep.subr.bf16.mxu0 0
        %2742 = vmatpush2.bf16.msra.mxu0 0
        %2743 = vmatprep.subr.bf16.mxu0 0
        %2744 = vmatpush2.bf16.msra.mxu0 0
        %2745 = vmatprep.subr.bf16.mxu0 0
        %2746 = vmatpush2.bf16.msra.mxu0 0
        %2747 = vmatprep.subr.bf16.mxu0 0
        %2748 = vmatpush2.bf16.msra.mxu0 0
        %2749 = vmatprep.mubr.bf16.mxu0 0
        %2750 = vmatmul.mubr.bf16.gmra.mxu0 %v2711
        %v2751 = vpop.f32.mrf.mxu0
        %v2752 = vadd.f32 0.0, %v2751
        %v2753 = vpop.f32.mrf.mxu0
        %v2754 = vpop.f32.mrf.mxu0
        %v2755 = vpop.f32.mrf.mxu0
        %2756 = vdwg.mxu0
        %2758 = vrot.lane.b32.xlu0 %v2645, 120
        %v2759 = vpop.permute.xlu0 %2758
        %2760 = vrot.lane.b32.xlu0 %v2646, 120
        %v2761 = vpop.permute.xlu0 %2760
        %v2763 = vsel %vm1267, %v2759, 0
        %v2766 = vsel %vm1267, %v2761, 0
        %2768 = vmatprep.subr.bf16.mxu0 0
        %2769 = vmatpush1.bf16.xpose.msra.mxu0 0
        %2770 = vmatprep.subr.bf16.mxu0 0
        %2771 = vmatpush1.bf16.xpose.msra.mxu0 0
        %2772 = vmatprep.subr.bf16.mxu0 0
        %2773 = vmatpush1.bf16.xpose.msra.mxu0 0
        %2774 = vmatprep.subr.bf16.mxu0 0
        %2775 = vmatpush1.bf16.xpose.msra.mxu0 0
        %2776 = vmatprep.subr.bf16.mxu0 0
        %2777 = vmatpush1.bf16.xpose.msra.mxu0 0
        %2778 = vmatprep.subr.bf16.mxu0 0
        %2779 = vmatpush1.bf16.xpose.msra.mxu0 0
        %2780 = vmatprep.subr.bf16.mxu0 0
        %2781 = vmatpush1.bf16.xpose.msra.mxu0 0
        %2782 = vmatprep.subr.bf16.mxu0 0
        %2783 = vmatpush1.bf16.xpose.msra.mxu0 %v2766
        %2784 = vmatprep.subr.bf16.mxu0 0
        %2785 = vmatpush2.bf16.xpose.msra.mxu0 0
        %2786 = vmatprep.subr.bf16.mxu0 0
        %2787 = vmatpush2.bf16.xpose.msra.mxu0 0
        %2788 = vmatprep.subr.bf16.mxu0 0
        %2789 = vmatpush2.bf16.xpose.msra.mxu0 0
        %2790 = vmatprep.subr.bf16.mxu0 0
        %2791 = vmatpush2.bf16.xpose.msra.mxu0 0
        %2792 = vmatprep.subr.bf16.mxu0 0
        %2793 = vmatpush2.bf16.xpose.msra.mxu0 0
        %2794 = vmatprep.subr.bf16.mxu0 0
        %2795 = vmatpush2.bf16.xpose.msra.mxu0 0
        %2796 = vmatprep.subr.bf16.mxu0 0
        %2797 = vmatpush2.bf16.xpose.msra.mxu0 0
        %2798 = vmatprep.subr.bf16.mxu0 0
        %2799 = vmatpush2.bf16.xpose.msra.mxu0 0
        %2800 = vmatprep.mubr.bf16.mxu0 0
        %2801 = vmatmul.mubr.bf16.gmra.mxu0 %v2763
        %v2802 = vpop.f32.mrf.mxu0
        %v2803 = vadd.f32 0.0, %v2802
        %v2804 = vpop.f32.mrf.mxu0
        %v2805 = vpop.f32.mrf.mxu0
        %v2806 = vpop.f32.mrf.mxu0
        %2807 = vdwg.mxu0
        %v2808 = vmul.f32 %v2803, 0.35355338
        %v2809 = vsel %vm2694, %v2808, -inf
        %2810 = vmax.xlane.f32.xlu0 %v2809
        %v2811 = vpop.xlane.xlu0 %2810
        %v2812 = vsub.f32 %v2808, %v2811
        %v2813 = vmul.f32 %v2812, 1.442695
        %v2814 = vpow.pop %v2813
        %v2815 = vsel %vm2694, %v2814, 0.0
        %2816 = vadd.xlane.f32.xlu0 %v2815
        %v2817 = vpop.xlane.xlu0 %2816
        %v2818 = vrcp.pop %v2817
        %v2819 = vmul.f32 %v2814, %v2818
        %v2820 = vpack.c.bf16 %v2819, %v2819
        %2821 = vrot.lane.b32.xlu0 %v2646, 88
        %v2822 = vpop.permute.xlu0 %2821
        %v2824 = vsel %vm2694, %v2820, 0
        %v2827 = vsel %vm2713, %v2822, 0
        %2829 = vmatprep.subr.bf16.mxu0 0
        %2830 = vmatpush1.bf16.msra.mxu0 0
        %2831 = vmatprep.subr.bf16.mxu0 0
        %2832 = vmatpush1.bf16.msra.mxu0 0
        %2833 = vmatprep.subr.bf16.mxu0 0
        %2834 = vmatpush1.bf16.msra.mxu0 0
        %2835 = vmatprep.subr.bf16.mxu0 0
        %2836 = vmatpush1.bf16.msra.mxu0 0
        %2837 = vmatprep.subr.bf16.mxu0 0
        %2838 = vmatpush1.bf16.msra.mxu0 0
        %2839 = vmatprep.subr.bf16.mxu0 0
        %2840 = vmatpush1.bf16.msra.mxu0 0
        %2841 = vmatprep.subr.bf16.mxu0 0
        %2842 = vmatpush1.bf16.msra.mxu0 0
        %2843 = vmatprep.subr.bf16.mxu0 0
        %2844 = vmatpush1.bf16.msra.mxu0 %v2827
        %2845 = vmatprep.subr.bf16.mxu0 0
        %2846 = vmatpush2.bf16.msra.mxu0 0
        %2847 = vmatprep.subr.bf16.mxu0 0
        %2848 = vmatpush2.bf16.msra.mxu0 0
        %2849 = vmatprep.subr.bf16.mxu0 0
        %2850 = vmatpush2.bf16.msra.mxu0 0
        %2851 = vmatprep.subr.bf16.mxu0 0
        %2852 = vmatpush2.bf16.msra.mxu0 0
        %2853 = vmatprep.subr.bf16.mxu0 0
        %2854 = vmatpush2.bf16.msra.mxu0 0
        %2855 = vmatprep.subr.bf16.mxu0 0
        %2856 = vmatpush2.bf16.msra.mxu0 0
        %2857 = vmatprep.subr.bf16.mxu0 0
        %2858 = vmatpush2.bf16.msra.mxu0 0
        %2859 = vmatprep.subr.bf16.mxu0 0
        %2860 = vmatpush2.bf16.msra.mxu0 0
        %2861 = vmatprep.mubr.bf16.mxu0 0
        %2862 = vmatmul.mubr.bf16.gmra.mxu0 %v2824
        %v2863 = vpop.f32.mrf.mxu0
        %v2864 = vadd.f32 0.0, %v2863
        %v2865 = vpop.f32.mrf.mxu0
        %v2866 = vpop.f32.mrf.mxu0
        %v2867 = vpop.f32.mrf.mxu0
        %2868 = vdwg.mxu0
        %2869 = vrot.lane.b32.xlu0 %v2645, 112
        %v2870 = vpop.permute.xlu0 %2869
        %2871 = vrot.lane.b32.xlu0 %v2646, 112
        %v2872 = vpop.permute.xlu0 %2871
        %v2874 = vsel %vm1267, %v2870, 0
        %v2877 = vsel %vm1267, %v2872, 0
        %2879 = vmatprep.subr.bf16.mxu0 0
        %2880 = vmatpush1.bf16.xpose.msra.mxu0 0
        %2881 = vmatprep.subr.bf16.mxu0 0
        %2882 = vmatpush1.bf16.xpose.msra.mxu0 0
        %2883 = vmatprep.subr.bf16.mxu0 0
        %2884 = vmatpush1.bf16.xpose.msra.mxu0 0
        %2885 = vmatprep.subr.bf16.mxu0 0
        %2886 = vmatpush1.bf16.xpose.msra.mxu0 0
        %2887 = vmatprep.subr.bf16.mxu0 0
        %2888 = vmatpush1.bf16.xpose.msra.mxu0 0
        %2889 = vmatprep.subr.bf16.mxu0 0
        %2890 = vmatpush1.bf16.xpose.msra.mxu0 0
        %2891 = vmatprep.subr.bf16.mxu0 0
        %2892 = vmatpush1.bf16.xpose.msra.mxu0 0
        %2893 = vmatprep.subr.bf16.mxu0 0
        %2894 = vmatpush1.bf16.xpose.msra.mxu0 %v2877
        %2895 = vmatprep.subr.bf16.mxu0 0
        %2896 = vmatpush2.bf16.xpose.msra.mxu0 0
        %2897 = vmatprep.subr.bf16.mxu0 0
        %2898 = vmatpush2.bf16.xpose.msra.mxu0 0
        %2899 = vmatprep.subr.bf16.mxu0 0
        %2900 = vmatpush2.bf16.xpose.msra.mxu0 0
        %2901 = vmatprep.subr.bf16.mxu0 0
        %2902 = vmatpush2.bf16.xpose.msra.mxu0 0
        %2903 = vmatprep.subr.bf16.mxu0 0
        %2904 = vmatpush2.bf16.xpose.msra.mxu0 0
        %2905 = vmatprep.subr.bf16.mxu0 0
        %2906 = vmatpush2.bf16.xpose.msra.mxu0 0
        %2907 = vmatprep.subr.bf16.mxu0 0
        %2908 = vmatpush2.bf16.xpose.msra.mxu0 0
        %2909 = vmatprep.subr.bf16.mxu0 0
        %2910 = vmatpush2.bf16.xpose.msra.mxu0 0
        %2911 = vmatprep.mubr.bf16.mxu0 0
        %2912 = vmatmul.mubr.bf16.gmra.mxu0 %v2874
        %v2913 = vpop.f32.mrf.mxu0
        %v2914 = vadd.f32 0.0, %v2913
        %v2915 = vpop.f32.mrf.mxu0
        %v2916 = vpop.f32.mrf.mxu0
        %v2917 = vpop.f32.mrf.mxu0
        %2918 = vdwg.mxu0
        %v2919 = vmul.f32 %v2914, 0.35355338
        %v2920 = vsel %vm2694, %v2919, -inf
        %2921 = vmax.xlane.f32.xlu0 %v2920
        %v2922 = vpop.xlane.xlu0 %2921
        %v2923 = vsub.f32 %v2919, %v2922
        %v2924 = vmul.f32 %v2923, 1.442695
        %v2925 = vpow.pop %v2924
        %v2926 = vsel %vm2694, %v2925, 0.0
        %2927 = vadd.xlane.f32.xlu0 %v2926
        %v2928 = vpop.xlane.xlu0 %2927
        %v2929 = vrcp.pop %v2928
        %v2930 = vmul.f32 %v2925, %v2929
        %v2931 = vpack.c.bf16 %v2930, %v2930
        %2932 = vrot.lane.b32.xlu0 %v2646, 80
        %v2933 = vpop.permute.xlu0 %2932
        %v2935 = vsel %vm2694, %v2931, 0
        %v2938 = vsel %vm2713, %v2933, 0
        %2940 = vmatprep.subr.bf16.mxu0 0
        %2941 = vmatpush1.bf16.msra.mxu0 0
        %2942 = vmatprep.subr.bf16.mxu0 0
        %2943 = vmatpush1.bf16.msra.mxu0 0
        %2944 = vmatprep.subr.bf16.mxu0 0
        %2945 = vmatpush1.bf16.msra.mxu0 0
        %2946 = vmatprep.subr.bf16.mxu0 0
        %2947 = vmatpush1.bf16.msra.mxu0 0
        %2948 = vmatprep.subr.bf16.mxu0 0
        %2949 = vmatpush1.bf16.msra.mxu0 0
        %2950 = vmatprep.subr.bf16.mxu0 0
        %2951 = vmatpush1.bf16.msra.mxu0 0
        %2952 = vmatprep.subr.bf16.mxu0 0
        %2953 = vmatpush1.bf16.msra.mxu0 0
        %2954 = vmatprep.subr.bf16.mxu0 0
        %2955 = vmatpush1.bf16.msra.mxu0 %v2938
        %2956 = vmatprep.subr.bf16.mxu0 0
        %2957 = vmatpush2.bf16.msra.mxu0 0
        %2958 = vmatprep.subr.bf16.mxu0 0
        %2959 = vmatpush2.bf16.msra.mxu0 0
        %2960 = vmatprep.subr.bf16.mxu0 0
        %2961 = vmatpush2.bf16.msra.mxu0 0
        %2962 = vmatprep.subr.bf16.mxu0 0
        %2963 = vmatpush2.bf16.msra.mxu0 0
        %2964 = vmatprep.subr.bf16.mxu0 0
        %2965 = vmatpush2.bf16.msra.mxu0 0
        %2966 = vmatprep.subr.bf16.mxu0 0
        %2967 = vmatpush2.bf16.msra.mxu0 0
        %2968 = vmatprep.subr.bf16.mxu0 0
        %2969 = vmatpush2.bf16.msra.mxu0 0
        %2970 = vmatprep.subr.bf16.mxu0 0
        %2971 = vmatpush2.bf16.msra.mxu0 0
        %2972 = vmatprep.mubr.bf16.mxu0 0
        %2973 = vmatmul.mubr.bf16.gmra.mxu0 %v2935
        %v2974 = vpop.f32.mrf.mxu0
        %v2975 = vadd.f32 0.0, %v2974
        %v2976 = vpop.f32.mrf.mxu0
        %v2977 = vpop.f32.mrf.mxu0
        %v2978 = vpop.f32.mrf.mxu0
        %2979 = vdwg.mxu0
        %2980 = vrot.lane.b32.xlu0 %v2645, 104
        %v2981 = vpop.permute.xlu0 %2980
        %2982 = vrot.lane.b32.xlu0 %v2646, 104
        %v2983 = vpop.permute.xlu0 %2982
        %v2985 = vsel %vm1267, %v2981, 0
        %v2988 = vsel %vm1267, %v2983, 0
        %2990 = vmatprep.subr.bf16.mxu0 0
        %2991 = vmatpush1.bf16.xpose.msra.mxu0 0
        %2992 = vmatprep.subr.bf16.mxu0 0
        %2993 = vmatpush1.bf16.xpose.msra.mxu0 0
        %2994 = vmatprep.subr.bf16.mxu0 0
        %2995 = vmatpush1.bf16.xpose.msra.mxu0 0
        %2996 = vmatprep.subr.bf16.mxu0 0
        %2997 = vmatpush1.bf16.xpose.msra.mxu0 0
        %2998 = vmatprep.subr.bf16.mxu0 0
        %2999 = vmatpush1.bf16.xpose.msra.mxu0 0
        %3000 = vmatprep.subr.bf16.mxu0 0
        %3001 = vmatpush1.bf16.xpose.msra.mxu0 0
        %3002 = vmatprep.subr.bf16.mxu0 0
        %3003 = vmatpush1.bf16.xpose.msra.mxu0 0
        %3004 = vmatprep.subr.bf16.mxu0 0
        %3005 = vmatpush1.bf16.xpose.msra.mxu0 %v2988
        %3006 = vmatprep.subr.bf16.mxu0 0
        %3007 = vmatpush2.bf16.xpose.msra.mxu0 0
        %3008 = vmatprep.subr.bf16.mxu0 0
        %3009 = vmatpush2.bf16.xpose.msra.mxu0 0
        %3010 = vmatprep.subr.bf16.mxu0 0
        %3011 = vmatpush2.bf16.xpose.msra.mxu0 0
        %3012 = vmatprep.subr.bf16.mxu0 0
        %3013 = vmatpush2.bf16.xpose.msra.mxu0 0
        %3014 = vmatprep.subr.bf16.mxu0 0
        %3015 = vmatpush2.bf16.xpose.msra.mxu0 0
        %3016 = vmatprep.subr.bf16.mxu0 0
        %3017 = vmatpush2.bf16.xpose.msra.mxu0 0
        %3018 = vmatprep.subr.bf16.mxu0 0
        %3019 = vmatpush2.bf16.xpose.msra.mxu0 0
        %3020 = vmatprep.subr.bf16.mxu0 0
        %3021 = vmatpush2.bf16.xpose.msra.mxu0 0
        %3022 = vmatprep.mubr.bf16.mxu0 0
        %3023 = vmatmul.mubr.bf16.gmra.mxu0 %v2985
        %v3024 = vpop.f32.mrf.mxu0
        %v3025 = vadd.f32 0.0, %v3024
        %v3026 = vpop.f32.mrf.mxu0
        %v3027 = vpop.f32.mrf.mxu0
        %v3028 = vpop.f32.mrf.mxu0
        %3029 = vdwg.mxu0
        %v3030 = vmul.f32 %v3025, 0.35355338
        %v3031 = vsel %vm2694, %v3030, -inf
        %3032 = vmax.xlane.f32.xlu0 %v3031
        %v3033 = vpop.xlane.xlu0 %3032
        %v3034 = vsub.f32 %v3030, %v3033
        %v3035 = vmul.f32 %v3034, 1.442695
        %v3036 = vpow.pop %v3035
        %v3037 = vsel %vm2694, %v3036, 0.0
        %3038 = vadd.xlane.f32.xlu0 %v3037
        %v3039 = vpop.xlane.xlu0 %3038
        %v3040 = vrcp.pop %v3039
        %v3041 = vmul.f32 %v3036, %v3040
        %v3042 = vpack.c.bf16 %v3041, %v3041
        %3043 = vrot.lane.b32.xlu0 %v2646, 72
        %v3044 = vpop.permute.xlu0 %3043
        %v3046 = vsel %vm2694, %v3042, 0
        %v3049 = vsel %vm2713, %v3044, 0
        %3051 = vmatprep.subr.bf16.mxu0 0
        %3052 = vmatpush1.bf16.msra.mxu0 0
        %3053 = vmatprep.subr.bf16.mxu0 0
        %3054 = vmatpush1.bf16.msra.mxu0 0
        %3055 = vmatprep.subr.bf16.mxu0 0
        %3056 = vmatpush1.bf16.msra.mxu0 0
        %3057 = vmatprep.subr.bf16.mxu0 0
        %3058 = vmatpush1.bf16.msra.mxu0 0
        %3059 = vmatprep.subr.bf16.mxu0 0
        %3060 = vmatpush1.bf16.msra.mxu0 0
        %3061 = vmatprep.subr.bf16.mxu0 0
        %3062 = vmatpush1.bf16.msra.mxu0 0
        %3063 = vmatprep.subr.bf16.mxu0 0
        %3064 = vmatpush1.bf16.msra.mxu0 0
        %3065 = vmatprep.subr.bf16.mxu0 0
        %3066 = vmatpush1.bf16.msra.mxu0 %v3049
        %3067 = vmatprep.subr.bf16.mxu0 0
        %3068 = vmatpush2.bf16.msra.mxu0 0
        %3069 = vmatprep.subr.bf16.mxu0 0
        %3070 = vmatpush2.bf16.msra.mxu0 0
        %3071 = vmatprep.subr.bf16.mxu0 0
        %3072 = vmatpush2.bf16.msra.mxu0 0
        %3073 = vmatprep.subr.bf16.mxu0 0
        %3074 = vmatpush2.bf16.msra.mxu0 0
        %3075 = vmatprep.subr.bf16.mxu0 0
        %3076 = vmatpush2.bf16.msra.mxu0 0
        %3077 = vmatprep.subr.bf16.mxu0 0
        %3078 = vmatpush2.bf16.msra.mxu0 0
        %3079 = vmatprep.subr.bf16.mxu0 0
        %3080 = vmatpush2.bf16.msra.mxu0 0
        %3081 = vmatprep.subr.bf16.mxu0 0
        %3082 = vmatpush2.bf16.msra.mxu0 0
        %3083 = vmatprep.mubr.bf16.mxu0 0
        %3084 = vmatmul.mubr.bf16.gmra.mxu0 %v3046
        %v3085 = vpop.f32.mrf.mxu0
        %v3086 = vadd.f32 0.0, %v3085
        %v3087 = vpop.f32.mrf.mxu0
        %v3088 = vpop.f32.mrf.mxu0
        %v3089 = vpop.f32.mrf.mxu0
        %3090 = vdwg.mxu0
        %3092 = vrot.lane.b32.xlu0 %v2864, 8
        %v3093 = vpop.permute.xlu0 %3092
        %3096 = vrot.lane.b32.xlu0 %v2975, 16
        %v3097 = vpop.permute.xlu0 %3096
        %3100 = vrot.lane.b32.xlu0 %v3086, 24
        %v3101 = vpop.permute.xlu0 %3100
        %v3103 = vsel %vm1267, %v2752, %v3093
        %v3104 = vsel %vm1724, %v3103, %v3097
        %v3105 = vsel %vm1726, %v3104, %v3101
        %v3106 = vpack.c.bf16 %v3105, %v3105
        %v3108 = vlaneseq
        %v3109 = vshrl.u32 %v3108, 7
        %v3110 = vsub.s32 0, %v3109
        %v3111 = vrot.slane %v2517, %v3110
        %v3117 = vunpack.c.l.b16 %v2513
        %v3118 = vunpack.c.l.b16 %v2514
        %v3119 = vunpack.c.l.b16 %v2515
        %v3120 = vunpack.c.l.b16 %v2516
        %v3121 = vpack.c.b16 %v3118, %v3117
        %v3122 = vpack.c.b16 %v3120, %v3119
        %v3126 = vsel %vm1163, %v3106, 0
        %3128 = vmatprep.subr.bf16.mxu0 0
        %3129 = vmatpush1.bf16.msra.mxu0 0
        %3130 = vmatprep.subr.bf16.mxu0 0
        %3131 = vmatpush1.bf16.msra.mxu0 0
        %3132 = vmatprep.subr.bf16.mxu0 0
        %3133 = vmatpush1.bf16.msra.mxu0 0
        %3134 = vmatprep.subr.bf16.mxu0 0
        %3135 = vmatpush1.bf16.msra.mxu0 0
        %3136 = vmatprep.subr.bf16.mxu0 0
        %3137 = vmatpush1.bf16.msra.mxu0 0
        %3138 = vmatprep.subr.bf16.mxu0 0
        %3139 = vmatpush1.bf16.msra.mxu0 0
        %3140 = vmatprep.subr.bf16.mxu0 0
        %3141 = vmatpush1.bf16.msra.mxu0 %v3122
        %3142 = vmatprep.subr.bf16.mxu0 0
        %3143 = vmatpush1.bf16.msra.mxu0 %v3121
        %3144 = vmatprep.subr.bf16.mxu0 0
        %3145 = vmatpush2.bf16.msra.mxu0 0
        %3146 = vmatprep.subr.bf16.mxu0 0
        %3147 = vmatpush2.bf16.msra.mxu0 0
        %3148 = vmatprep.subr.bf16.mxu0 0
        %3149 = vmatpush2.bf16.msra.mxu0 0
        %3150 = vmatprep.subr.bf16.mxu0 0
        %3151 = vmatpush2.bf16.msra.mxu0 0
        %3152 = vmatprep.subr.bf16.mxu0 0
        %3153 = vmatpush2.bf16.msra.mxu0 0
        %3154 = vmatprep.subr.bf16.mxu0 0
        %3155 = vmatpush2.bf16.msra.mxu0 0
        %3156 = vmatprep.subr.bf16.mxu0 0
        %3157 = vmatpush2.bf16.msra.mxu0 0
        %3158 = vmatprep.subr.bf16.mxu0 0
        %3159 = vmatpush2.bf16.msra.mxu0 0
        %3160 = vmatprep.mubr.bf16.mxu0 0
        %3161 = vmatmul.mubr.bf16.gmra.mxu0 %v3126
        %v3162 = vpop.f32.mrf.mxu0
        %v3163 = vadd.f32 %v3111, %v3162
        %v3164 = vpop.f32.mrf.mxu0
        %v3165 = vpop.f32.mrf.mxu0
        %v3166 = vpop.f32.mrf.mxu0
        %3167 = vdwg.mxu0
        %v3168 = vadd.f32 %v2500, %v3163
        %v3169 = vsel %vm1163, %v3168, 0.0
        %3170 = vadd.xlane.f32.xlu0 %v3169
        %v3171 = vpop.xlane.xlu0 %3170
        %v3172 = vmul.f32 %v3171, %v1794
        %v3173 = vsub.f32 %v3168, %v3172
        %v3174 = vmul.f32 %v3173, %v3173
        %v3175 = vsel %vm1163, %v3174, 0.0
        %3176 = vadd.xlane.f32.xlu0 %v3175
        %v3177 = vpop.xlane.xlu0 %3176
        %v3178 = vmul.f32 %v3177, %v1794
        %v3179 = vadd.f32 %v3178, 1e-05
        %v3180 = vrsqrt.pop %v3179
        %v3181 = vmul.f32 %v3173, %v3180
        %v3183 = vlaneseq
        %v3184 = vshrl.u32 %v3183, 7
        %v3185 = vsub.s32 0, %v3184
        %v3186 = vrot.slane %v2518, %v3185
        %v3188 = vmul.f32 %v3181, %v3186
        %v3190 = vlaneseq
        %v3191 = vshrl.u32 %v3190, 7
        %v3192 = vsub.s32 0, %v3191
        %v3193 = vrot.slane %v2519, %v3192
        %v3195 = vadd.f32 %v3188, %v3193
        %v3196 = vld [vmem:[%s55] sm:$0xf]
        %v3197 = vld [vmem:[%s55 + $0x4] sm:$0xf]
        %v3198 = vld [vmem:[%s55 + $0x8] sm:$0xf]
        %v3199 = vld [vmem:[%s55 + $0xc] sm:$0xf]
        %v3200 = vld [vmem:[%s57] sm:$0x1]
        %v3201 = vld [vmem:[%s59] sm:$0xf]
        %v3202 = vld [vmem:[%s59 + $0x4] sm:$0xf]
        %v3203 = vld [vmem:[%s59 + $0x8] sm:$0xf]
        %v3204 = vld [vmem:[%s59 + $0xc] sm:$0xf]
        %v3205 = vld [vmem:[%s59 + $0x10] sm:$0xf]
        %v3206 = vld [vmem:[%s59 + $0x14] sm:$0xf]
        %v3207 = vld [vmem:[%s59 + $0x18] sm:$0xf]
        %v3208 = vld [vmem:[%s59 + $0x1c] sm:$0xf]
        %v3209 = vld [vmem:[%s61] sm:$0x1]
        %v3210 = vld [vmem:[%s63] sm:$0x1]
        %v3211 = vld [vmem:[%s65] sm:$0x1]
        %v3212 = vpack.c.bf16 %v3195, %v3195
        %v3214 = vlaneseq
        %v3215 = vshrl.u32 %v3214, 7
        %v3216 = vsub.s32 0, %v3215
        %v3217 = vrot.slane %v3200, %v3216
        %v3223 = vunpack.c.l.b16 %v3196
        %v3224 = vunpack.c.l.b16 %v3197
        %v3225 = vunpack.c.l.b16 %v3198
        %v3226 = vunpack.c.l.b16 %v3199
        %v3227 = vpack.c.b16 %v3224, %v3223
        %v3228 = vpack.c.b16 %v3226, %v3225
        %v3232 = vsel %vm1163, %v3212, 0
        %3234 = vmatprep.subr.bf16.mxu0 0
        %3235 = vmatpush1.bf16.msra.mxu0 0
        %3236 = vmatprep.subr.bf16.mxu0 0
        %3237 = vmatpush1.bf16.msra.mxu0 0
        %3238 = vmatprep.subr.bf16.mxu0 0
        %3239 = vmatpush1.bf16.msra.mxu0 0
        %3240 = vmatprep.subr.bf16.mxu0 0
        %3241 = vmatpush1.bf16.msra.mxu0 0
        %3242 = vmatprep.subr.bf16.mxu0 0
        %3243 = vmatpush1.bf16.msra.mxu0 0
        %3244 = vmatprep.subr.bf16.mxu0 0
        %3245 = vmatpush1.bf16.msra.mxu0 0
        %3246 = vmatprep.subr.bf16.mxu0 0
        %3247 = vmatpush1.bf16.msra.mxu0 %v3228
        %3248 = vmatprep.subr.bf16.mxu0 0
        %3249 = vmatpush1.bf16.msra.mxu0 %v3227
        %3250 = vmatprep.subr.bf16.mxu0 0
        %3251 = vmatpush2.bf16.msra.mxu0 0
        %3252 = vmatprep.subr.bf16.mxu0 0
        %3253 = vmatpush2.bf16.msra.mxu0 0
        %3254 = vmatprep.subr.bf16.mxu0 0
        %3255 = vmatpush2.bf16.msra.mxu0 0
        %3256 = vmatprep.subr.bf16.mxu0 0
        %3257 = vmatpush2.bf16.msra.mxu0 0
        %3258 = vmatprep.subr.bf16.mxu0 0
        %3259 = vmatpush2.bf16.msra.mxu0 0
        %3260 = vmatprep.subr.bf16.mxu0 0
        %3261 = vmatpush2.bf16.msra.mxu0 0
        %3262 = vmatprep.subr.bf16.mxu0 0
        %3263 = vmatpush2.bf16.msra.mxu0 0
        %3264 = vmatprep.subr.bf16.mxu0 0
        %3265 = vmatpush2.bf16.msra.mxu0 0
        %3266 = vmatprep.mubr.bf16.mxu0 0
        %3267 = vmatmul.mubr.bf16.gmra.mxu0 %v3232
        %v3268 = vpop.f32.mrf.mxu0
        %v3269 = vadd.f32 %v3217, %v3268
        %v3270 = vpop.f32.mrf.mxu0
        %v3271 = vpop.f32.mrf.mxu0
        %v3272 = vpop.f32.mrf.mxu0
        %3273 = vdwg.mxu0
        %v3274 = vmax.f32 %v3269, 0.0
        %v3275 = vpack.c.bf16 %v3274, %v3274
        %v3277 = vlaneseq
        %v3278 = vshrl.u32 %v3277, 7
        %v3279 = vsub.s32 0, %v3278
        %v3280 = vrot.slane %v3209, %v3279
        %v3290 = vunpack.c.l.b16 %v3201
        %v3291 = vunpack.c.l.b16 %v3202
        %v3292 = vunpack.c.l.b16 %v3203
        %v3293 = vunpack.c.l.b16 %v3204
        %v3294 = vunpack.c.l.b16 %v3205
        %v3295 = vunpack.c.l.b16 %v3206
        %v3296 = vunpack.c.l.b16 %v3207
        %v3297 = vunpack.c.l.b16 %v3208
        %v3298 = vpack.c.b16 %v3291, %v3290
        %v3299 = vpack.c.b16 %v3293, %v3292
        %v3300 = vpack.c.b16 %v3295, %v3294
        %v3301 = vpack.c.b16 %v3297, %v3296
        %vm3306 = vcmask 523264
        %v3308 = vsel %vm3306, %v3275, 0
        %3310 = vmatprep.subr.bf16.mxu0 0
        %3311 = vmatpush1.bf16.msra.mxu0 0
        %3312 = vmatprep.subr.bf16.mxu0 0
        %3313 = vmatpush1.bf16.msra.mxu0 0
        %3314 = vmatprep.subr.bf16.mxu0 0
        %3315 = vmatpush1.bf16.msra.mxu0 0
        %3316 = vmatprep.subr.bf16.mxu0 0
        %3317 = vmatpush1.bf16.msra.mxu0 0
        %3318 = vmatprep.subr.bf16.mxu0 0
        %3319 = vmatpush1.bf16.msra.mxu0 %v3301
        %3320 = vmatprep.subr.bf16.mxu0 0
        %3321 = vmatpush1.bf16.msra.mxu0 %v3300
        %3322 = vmatprep.subr.bf16.mxu0 0
        %3323 = vmatpush1.bf16.msra.mxu0 %v3299
        %3324 = vmatprep.subr.bf16.mxu0 0
        %3325 = vmatpush1.bf16.msra.mxu0 %v3298
        %3326 = vmatprep.subr.bf16.mxu0 0
        %3327 = vmatpush2.bf16.msra.mxu0 0
        %3328 = vmatprep.subr.bf16.mxu0 0
        %3329 = vmatpush2.bf16.msra.mxu0 0
        %3330 = vmatprep.subr.bf16.mxu0 0
        %3331 = vmatpush2.bf16.msra.mxu0 0
        %3332 = vmatprep.subr.bf16.mxu0 0
        %3333 = vmatpush2.bf16.msra.mxu0 0
        %3334 = vmatprep.subr.bf16.mxu0 0
        %3335 = vmatpush2.bf16.msra.mxu0 0
        %3336 = vmatprep.subr.bf16.mxu0 0
        %3337 = vmatpush2.bf16.msra.mxu0 0
        %3338 = vmatprep.subr.bf16.mxu0 0
        %3339 = vmatpush2.bf16.msra.mxu0 0
        %3340 = vmatprep.subr.bf16.mxu0 0
        %3341 = vmatpush2.bf16.msra.mxu0 0
        %3342 = vmatprep.mubr.bf16.mxu0 0
        %3343 = vmatmul.mubr.bf16.gmra.mxu0 %v3308
        %v3344 = vpop.f32.mrf.mxu0
        %v3345 = vadd.f32 %v3280, %v3344
        %v3346 = vpop.f32.mrf.mxu0
        %v3347 = vpop.f32.mrf.mxu0
        %v3348 = vpop.f32.mrf.mxu0
        %3349 = vdwg.mxu0
        %v3350 = vadd.f32 %v3195, %v3345
        %v3351 = vsel %vm1163, %v3350, 0.0
        %3352 = vadd.xlane.f32.xlu0 %v3351
        %v3353 = vpop.xlane.xlu0 %3352
        %v3354 = vmul.f32 %v3353, %v1794
        %v3355 = vsub.f32 %v3350, %v3354
        %v3356 = vmul.f32 %v3355, %v3355
        %v3357 = vsel %vm1163, %v3356, 0.0
        %3358 = vadd.xlane.f32.xlu0 %v3357
        %v3359 = vpop.xlane.xlu0 %3358
        %v3360 = vmul.f32 %v3359, %v1794
        %v3361 = vadd.f32 %v3360, 1e-05
        %v3362 = vrsqrt.pop %v3361
        %v3363 = vmul.f32 %v3355, %v3362
        %v3365 = vlaneseq
        %v3366 = vshrl.u32 %v3365, 7
        %v3367 = vsub.s32 0, %v3366
        %v3368 = vrot.slane %v3210, %v3367
        %v3370 = vmul.f32 %v3363, %v3368
        %v3372 = vlaneseq
        %v3373 = vshrl.u32 %v3372, 7
        %v3374 = vsub.s32 0, %v3373
        %v3375 = vrot.slane %v3211, %v3374
        %v3377 = vadd.f32 %v3370, %v3375
        %3378 = vst.msk [vmem:[%s1111] sm:$0xff] %vm1163, %v3377
        %s3379 = sand.u32 %s801, 1
        %s3380 = scalar_lea.sflag [#allocation4], %s3379
        %s3381 = sand.u32 %s801, 1
        %s3382 = smul.addr %s3381, 8
        %s3383 = scalar_lea.vmem [#allocation13], %s3382
        // Predicated region
        $region177: #{tpu_custom_call.1} parent=151 // pred_check
          %p3384 = pneg %p811
        $region178: #{tpu_custom_call.1} parent=151 // pred_check_branch
          %3386 = sbr.rel (%p3384) target = $region180
        $region179: #{tpu_custom_call.1} parent=151 // pred_region
          %s3388 = ssub.s32 128, 128
          %3389 = vsyncadd %s3380, %s3388
          %s3390 = smul.addr %s85, 128
          %s3391 = scalar_lea.hbm %s67, %s3390
          %s3393 = sshll.u32 %s3383, 4
          %s3394 = int_to_ptr.vmem [resolvable:$true] %s3393
          %3396 = dma.vmem_to_hbm [thread:$0]  %s3394, 128, %s3391, %s3380
        $region180: #{tpu_custom_call.1} parent=151 // pred_fallthru
          _
      $region152: #{tpu_custom_call.1} parent=5 // pred_fallthru
        _
      %p3397 = scmp.le.s32.totalorder 2, %s80
      // Predicated region
      $region181: #{tpu_custom_call.1} parent=5 // pred_check
        %p3398 = pneg %p3397
      $region182: #{tpu_custom_call.1} parent=5 // pred_check_branch
        %3400 = sbr.rel (%p3398) target = $region184
      $region183: #{tpu_custom_call.1} parent=5 // pred_region
        %s3401 = ssub.s32 %s80, 2
        // Predicated region
        $region185: #{tpu_custom_call.1} parent=183 // pred_check
          %p3402 = pneg %p817
        $region186: #{tpu_custom_call.1} parent=183 // pred_check_branch
          %3404 = sbr.rel (%p3402) target = $region188
        $region187: #{tpu_custom_call.1} parent=183 // pred_region
          %s3405 = sand.u32 %s802, 1
          %s3406 = scalar_lea.sflag [#allocation4], %s3405
          %s3407 = sand.u32 %s802, 1
          %s3408 = smul.addr %s3407, 8
          %s3409 = scalar_lea.vmem [#allocation13], %s3408
          %3410 = dma.done %s3406, 128
        $region188: #{tpu_custom_call.1} parent=183 // pred_fallthru
          _
      $region184: #{tpu_custom_call.1} parent=5 // pred_fallthru
        _
    $region6: #{tpu_custom_call.1} parent=1 // loop_footer
      %s84 = sadd.s32 1, %s80
    $region7: #{tpu_custom_call.1} parent=1 // loop_footer_branch
      %79 = sbr.rel target = $region3
    $region8: #{tpu_custom_call.1} parent=1 // loop_exit
      _
    %3411 = vsyncpa [#allocation3], 1
    %s3412 = scalar_lea.sflag [#allocation3], 1
    %3413 = vsyncpa %s3412, 1
    %3414 = vsyncpa [#allocation6], 1
    %3415 = vsyncpa [#allocation9], 1
    %3416 = vsyncpa [#allocation12], 1
    %3417 = vsyncpa [#allocation4], 1
    %s3418 = scalar_lea.sflag [#allocation4], 1
    %3419 = vsyncpa %s3418, 1

</llo_original>
